<compile_context>
chip_gen: v7x
topology: tpu7x:2x2x1
jax: 0.10.0
libtpu: 0.0.40
codegen_flags: <defaults>
</compile_context>

<pallas_src>
import math

import jax
import jax.numpy as jnp
from jax import lax
from jax.experimental import pallas as pl
from jax.experimental.pallas import tpu as pltpu

# ----------------------------- config (small) -------------------------------
B = 2                      # batch
T = 8                      # seq_len
C = 32                     # emb_dim
N = B * T                  # flattened rows
HID = C * 10               # ff hidden (320)
HID_PAD = 384              # padded to a multiple of 128 (exact: padded cols are 0)
LN_EPS = 1e-5

# packed-weights column offsets: [wqkv | wf | w1(pad) | w2^T(pad)]
W_QKV_OFF = 0
W_F_OFF = 3 * C            # 96
W_1_OFF = 4 * C            # 128  (lane-aligned)
W_2_OFF = W_1_OFF + HID_PAD  # 512 (lane-aligned)
W_COLS = W_2_OFF + HID_PAD   # 896

# packed-smalls layout (rows x HID_PAD):
#   row 0, cols 0:96    -> fused qkv bias (bq | bk | bv)
#   row 1, cols 0:192   -> [bf | b2 | g0 | be0 | g1 | be1]
#   row 2, cols 0:384   -> b1 (zero-padded 320:384)
#   rows 8:24, cols 0:16 -> additive attention mask bias (0 allowed / -1e30 masked)
MASK_ROW = 8
SM_ROWS = MASK_ROW + N     # 24


# ------------------------------- kernel -------------------------------------
def block_kernel(x_ref, w_ref, s_ref, o_ref):
    x = x_ref[...]                                       # (N, C) f32
    s = s_ref[...]                                       # (SM_ROWS, HID_PAD)

    bqkv = s[0:1, 0:3 * C]                               # (1, 96)
    bf = s[1:2, 0:C]
    b2 = s[1:2, C:2 * C]
    g0 = s[1:2, 2 * C:3 * C]
    be0 = s[1:2, 3 * C:4 * C]
    g1 = s[1:2, 4 * C:5 * C]
    be1 = s[1:2, 5 * C:6 * C]
    b1 = s[2:3, :]                                       # (1, HID_PAD)
    mask_bias = s[MASK_ROW:MASK_ROW + N, 0:N]            # (N, N)  0 / -1e30

    # ---- fused QKV projection (one MXU op) ----
    qkv = jnp.dot(x, w_ref[:, W_QKV_OFF:W_QKV_OFF + 3 * C],
                  preferred_element_type=jnp.float32) + bqkv
    q = qkv[:, 0:C]
    k = qkv[:, C:2 * C]
    v = qkv[:, 2 * C:3 * C]

    # ---- block-diagonal causal attention over the flattened (B*T) rows ----
    scale = 1.0 / math.sqrt(C)                           # head_dim == C (1 head)
    scores = lax.dot_general(q, k, (((1,), (1,)), ((), ())),
                             preferred_element_type=jnp.float32) * scale   # (N, N)
    scores = scores + mask_bias                          # precomputed additive mask
    scores = scores - jnp.max(scores, axis=-1, keepdims=True)
    p = jnp.exp(scores)
    p = p / jnp.sum(p, axis=-1, keepdims=True)           # exact divide on (N,1): ~free

    attn = jnp.dot(p, v, preferred_element_type=jnp.float32)               # (N, C)
    attn = jnp.dot(attn, w_ref[:, W_F_OFF:W_F_OFF + C],
                   preferred_element_type=jnp.float32) + bf

    # ---- residual + LayerNorm0 (centered two-pass variance) ----
    h = attn + x
    mu = jnp.mean(h, axis=-1, keepdims=True)
    hc = h - mu
    var = jnp.mean(hc * hc, axis=-1, keepdims=True)
    h = hc * lax.rsqrt(var + LN_EPS) * g0 + be0          # (N, C)

    # ---- feed-forward: Linear -> exact GELU -> Linear ----
    f = jnp.dot(h, w_ref[:, W_1_OFF:W_1_OFF + HID_PAD],
                preferred_element_type=jnp.float32) + b1                   # (N, HID_PAD)

    # exact-GELU erf via Abramowitz–Stegun 7.1.26 (exp-based, EUP slot);
    # max |erf error| ~1.5e-7, matching PyTorch's non-approximate GELU to f32 noise.
    a = jnp.abs(f) * (1.0 / math.sqrt(2.0))
    t = 1.0 / (1.0 + 0.3275911 * a)
    poly = t * (0.254829592 + t * (-0.284496736 + t * (1.421413741
              + t * (-1.453152027 + t * 1.061405429))))
    erf_abs = 1.0 - poly * jnp.exp(-(a * a))
    erf = jnp.where(f >= 0.0, erf_abs, -erf_abs)
    f = 0.5 * f * (1.0 + erf)

    # w2 stored transposed (C, HID_PAD): contract last dims (q·k^T trick).
    f = lax.dot_general(f, w_ref[:, W_2_OFF:W_2_OFF + HID_PAD],
                        (((1,), (1,)), ((), ())),
                        preferred_element_type=jnp.float32) + b2           # (N, C)

    # ---- residual + LayerNorm1 ----
    y = f + h
    mu = jnp.mean(y, axis=-1, keepdims=True)
    yc = y - mu
    var = jnp.mean(yc * yc, axis=-1, keepdims=True)
    o_ref[...] = yc * lax.rsqrt(var + LN_EPS) * g1 + be1


# --------------------------- one-time param packing --------------------------
def prepare_params(p):
    """Runs ONCE at init; returns the two packed device buffers the kernel needs."""
    wqkv = jnp.concatenate([p["wq"], p["wk"], p["wv"]], axis=1)            # (C, 3C)
    w1p = jnp.pad(p["w1"], ((0, 0), (0, HID_PAD - HID)))                   # (C, HID_PAD)
    w2tp = jnp.pad(p["w2"].T, ((0, 0), (0, HID_PAD - HID)))                # (C, HID_PAD)
    w_packed = jnp.concatenate([wqkv, p["wf"], w1p, w2tp], axis=1)         # (C, W_COLS)

    s_packed = jnp.zeros((SM_ROWS, HID_PAD), jnp.float32)
    s_packed = s_packed.at[0, 0:3 * C].set(
        jnp.concatenate([p["bq"], p["bk"], p["bv"]], axis=1)[0])
    vec = jnp.concatenate([p["bf"], p["b2"], p["g0"], p["be0"], p["g1"], p["be1"]],
                          axis=1)[0]
    s_packed = s_packed.at[1, 0:6 * C].set(vec)
    s_packed = s_packed.at[2, 0:HID].set(p["b1"][0])

    # block-diagonal causal additive mask over the flattened (B*T) rows
    row = jnp.arange(N)[:, None]
    col = jnp.arange(N)[None, :]
    allowed = (row >= col) & ((row // T) == (col // T))
    s_packed = s_packed.at[MASK_ROW:MASK_ROW + N, 0:N].set(
        jnp.where(allowed, 0.0, -1e30).astype(jnp.float32))

    return jax.device_put(w_packed), jax.device_put(s_packed)


# ------------------------------- wrapper -------------------------------------
@jax.jit
def block_forward(x, w_packed, s_packed):
    """x: (B, T, C) f32; w_packed/s_packed from prepare_params (done once)."""
    xf = x.reshape(N, C)
    vmem = pl.BlockSpec(memory_space=pltpu.MemorySpace.VMEM)
    out = pl.pallas_call(
        block_kernel,
        out_shape=jax.ShapeDtypeStruct((N, C), jnp.float32),
        in_specs=[vmem, vmem, vmem],
        out_specs=vmem,
    )(xf, w_packed, s_packed)
    return out.reshape(B, T, C)


# --------------------------- pure-JAX reference ------------------------------
def block_reference(x, p):
    q = x @ p["wq"] + p["bq"]
    k = x @ p["wk"] + p["bk"]
    v = x @ p["wv"] + p["bv"]
    scores = (q @ jnp.swapaxes(k, -1, -2)) / math.sqrt(C)
    mask = jnp.tril(jnp.ones((T, T), dtype=bool))
    scores = jnp.where(mask[None], scores, -jnp.inf)
    p_attn = jax.nn.softmax(scores, axis=-1)
    attn = p_attn @ v
    attn = attn @ p["wf"] + p["bf"]

    h = attn + x
    h = (h - h.mean(-1, keepdims=True)) / jnp.sqrt(h.var(-1, keepdims=True) + LN_EPS)
    h = h * p["g0"] + p["be0"]

    f = h @ p["w1"] + p["b1"]
    f = jax.nn.gelu(f, approximate=False)
    f = f @ p["w2"] + p["b2"]

    y = f + h
    y = (y - y.mean(-1, keepdims=True)) / jnp.sqrt(y.var(-1, keepdims=True) + LN_EPS)
    return y * p["g1"] + p["be1"]


# --------------------------------- main ---------------------------------------
if __name__ == "__main__":
    # Keep the pure-JAX reference matmuls at full f32 precision so the
    # comparison reflects the kernel, not the reference's default bf16 passes.
    jax.config.update("jax_default_matmul_precision", "highest")

    key = jax.random.PRNGKey(0)
    keys = jax.random.split(key, 20)

    def linear(kw, kb, fan_in, fan_out):
        bound = 1.0 / math.sqrt(fan_in)
        # weight stored already transposed: (fan_in, fan_out) so y = x @ W + b
        w = jax.random.uniform(kw, (fan_in, fan_out), jnp.float32, -bound, bound)
        b = jax.random.uniform(kb, (1, fan_out), jnp.float32, -bound, bound)
        return w, b

    wq, bq = linear(keys[0], keys[1], C, C)
    wk, bk = linear(keys[2], keys[3], C, C)
    wv, bv = linear(keys[4], keys[5], C, C)
    wf, bf = linear(keys[6], keys[7], C, C)
    w1, b1 = linear(keys[8], keys[9], C, HID)
    w2, b2 = linear(keys[10], keys[11], HID, C)
    g0 = 1.0 + 0.1 * jax.random.normal(keys[12], (1, C), jnp.float32)
    be0 = 0.1 * jax.random.normal(keys[13], (1, C), jnp.float32)
    g1 = 1.0 + 0.1 * jax.random.normal(keys[14], (1, C), jnp.float32)
    be1 = 0.1 * jax.random.normal(keys[15], (1, C), jnp.float32)

    params = dict(wq=wq, bq=bq, wk=wk, bk=bk, wv=wv, bv=bv, wf=wf, bf=bf,
                  g0=g0, be0=be0, w1=w1, b1=b1, w2=w2, b2=b2, g1=g1, be1=be1)

    # One-time packing (outside the per-call path).
    w_packed, s_packed = prepare_params(params)

    x = jax.random.normal(keys[16], (B, T, C), jnp.float32)

    out = jax.block_until_ready(block_forward(x, w_packed, s_packed))

    ref = block_reference(x, params)
    err = jnp.max(jnp.abs(out - ref))
    assert err < 1e-3, f"mismatch vs pure-JAX reference: {err}"

    print("KERNEL_OK")
</pallas_src>

<mosaic_0001>
module attributes {stable_mosaic.version = 11 : i64} {
  func.func @block_kernel(%arg0: memref<16x32xf32, #tpu.memory_space<vmem>>, %arg1: memref<32x896xf32, #tpu.memory_space<vmem>>, %arg2: memref<24x384xf32, #tpu.memory_space<vmem>>, %arg3: memref<16x32xf32, #tpu.memory_space<vmem>>) attributes {dimension_semantics = [], scalar_prefetch = 0 : i64, scratch_operands = 0 : i64, tpu.core_type = #tpu.core_type<tc>} {
    %c0 = arith.constant 0 : index
    %c0_0 = arith.constant 0 : index
    %0 = vector.load %arg0[%c0, %c0_0] : memref<16x32xf32, #tpu.memory_space<vmem>>, vector<16x32xf32>
    %c0_1 = arith.constant 0 : index
    %c0_2 = arith.constant 0 : index
    %1 = vector.load %arg2[%c0_1, %c0_2] : memref<24x384xf32, #tpu.memory_space<vmem>>, vector<24x384xf32>
    %2 = vector.extract_strided_slice %1 {offsets = [0, 0], sizes = [1, 96], strides = [1, 1]} : vector<24x384xf32> to vector<1x96xf32>
    %3 = vector.extract_strided_slice %1 {offsets = [1, 0], sizes = [1, 32], strides = [1, 1]} : vector<24x384xf32> to vector<1x32xf32>
    %4 = vector.extract_strided_slice %1 {offsets = [1, 32], sizes = [1, 32], strides = [1, 1]} : vector<24x384xf32> to vector<1x32xf32>
    %5 = vector.extract_strided_slice %1 {offsets = [1, 64], sizes = [1, 32], strides = [1, 1]} : vector<24x384xf32> to vector<1x32xf32>
    %6 = vector.extract_strided_slice %1 {offsets = [1, 96], sizes = [1, 32], strides = [1, 1]} : vector<24x384xf32> to vector<1x32xf32>
    %7 = vector.extract_strided_slice %1 {offsets = [1, 128], sizes = [1, 32], strides = [1, 1]} : vector<24x384xf32> to vector<1x32xf32>
    %8 = vector.extract_strided_slice %1 {offsets = [1, 160], sizes = [1, 32], strides = [1, 1]} : vector<24x384xf32> to vector<1x32xf32>
    %9 = vector.extract_strided_slice %1 {offsets = [2, 0], sizes = [1, 384], strides = [1, 1]} : vector<24x384xf32> to vector<1x384xf32>
    %10 = vector.extract_strided_slice %1 {offsets = [8, 0], sizes = [16, 16], strides = [1, 1]} : vector<24x384xf32> to vector<16x16xf32>
    %c0_3 = arith.constant 0 : index
    %c0_4 = arith.constant 0 : index
    %11 = vector.load %arg1[%c0_3, %c0_4] : memref<32x896xf32, #tpu.memory_space<vmem>>, vector<32x96xf32>
    %cst = arith.constant dense<0.000000e+00> : vector<16x96xf32>
    %12 = tpu.matmul %0, %11, %cst {dimension_numbers = #tpu.dot_dimension_numbers<[1], [0], [0], [1], [0, 0, 1, 1], [], []>, precision = #tpu.contract_precision<fp32>} : vector<16x32xf32>, vector<32x96xf32>, vector<16x96xf32> -> vector<16x96xf32>
    %13 = vector.broadcast %2 : vector<1x96xf32> to vector<16x96xf32>
    %14 = arith.addf %12, %13 : vector<16x96xf32>
    %15 = vector.extract_strided_slice %14 {offsets = [0, 0], sizes = [16, 32], strides = [1, 1]} : vector<16x96xf32> to vector<16x32xf32>
    %16 = vector.extract_strided_slice %14 {offsets = [0, 32], sizes = [16, 32], strides = [1, 1]} : vector<16x96xf32> to vector<16x32xf32>
    %17 = vector.extract_strided_slice %14 {offsets = [0, 64], sizes = [16, 32], strides = [1, 1]} : vector<16x96xf32> to vector<16x32xf32>
    %cst_5 = arith.constant dense<0.000000e+00> : vector<16x16xf32>
    %18 = tpu.matmul %15, %16, %cst_5 {dimension_numbers = #tpu.dot_dimension_numbers<[1], [1], [0], [0], [0, 0, 1, 0], [], []>, precision = #tpu.contract_precision<fp32>} : vector<16x32xf32>, vector<16x32xf32>, vector<16x16xf32> -> vector<16x16xf32>
    %cst_6 = arith.constant 0.176776692 : f32
    %19 = vector.broadcast %cst_6 : f32 to vector<16x16xf32>
    %20 = arith.mulf %18, %19 : vector<16x16xf32>
    %21 = arith.addf %20, %10 : vector<16x16xf32>
    %cst_7 = arith.constant dense<0xFF800000> : vector<16xf32>
    %22 = vector.multi_reduction <maximumf>, %21, %cst_7 [1] : vector<16x16xf32> to vector<16xf32>
    %23 = vector.shape_cast %22 : vector<16xf32> to vector<16x1xf32>
    %24 = vector.broadcast %23 : vector<16x1xf32> to vector<16x16xf32>
    %25 = arith.subf %21, %24 : vector<16x16xf32>
    %26 = math.exp %25 : vector<16x16xf32>
    %cst_8 = arith.constant dense<0.000000e+00> : vector<16xf32>
    %27 = vector.multi_reduction <add>, %26, %cst_8 [1] : vector<16x16xf32> to vector<16xf32>
    %28 = vector.shape_cast %27 : vector<16xf32> to vector<16x1xf32>
    %29 = vector.broadcast %28 : vector<16x1xf32> to vector<16x16xf32>
    %30 = arith.divf %26, %29 : vector<16x16xf32>
    %cst_9 = arith.constant dense<0.000000e+00> : vector<16x32xf32>
    %31 = tpu.matmul %30, %17, %cst_9 {dimension_numbers = #tpu.dot_dimension_numbers<[1], [0], [0], [1], [0, 0, 1, 1], [], []>, precision = #tpu.contract_precision<fp32>} : vector<16x16xf32>, vector<16x32xf32>, vector<16x32xf32> -> vector<16x32xf32>
    %c0_10 = arith.constant 0 : index
    %c96 = arith.constant 96 : index
    %32 = vector.load %arg1[%c0_10, %c96] : memref<32x896xf32, #tpu.memory_space<vmem>>, vector<32x32xf32>
    %cst_11 = arith.constant dense<0.000000e+00> : vector<16x32xf32>
    %33 = tpu.matmul %31, %32, %cst_11 {dimension_numbers = #tpu.dot_dimension_numbers<[1], [0], [0], [1], [0, 0, 1, 1], [], []>, precision = #tpu.contract_precision<fp32>} : vector<16x32xf32>, vector<32x32xf32>, vector<16x32xf32> -> vector<16x32xf32>
    %34 = vector.broadcast %3 : vector<1x32xf32> to vector<16x32xf32>
    %35 = arith.addf %33, %34 : vector<16x32xf32>
    %36 = arith.addf %35, %0 : vector<16x32xf32>
    %cst_12 = arith.constant dense<0.000000e+00> : vector<16xf32>
    %37 = vector.multi_reduction <add>, %36, %cst_12 [1] : vector<16x32xf32> to vector<16xf32>
    %38 = vector.shape_cast %37 : vector<16xf32> to vector<16x1xf32>
    %cst_13 = arith.constant 3.200000e+01 : f32
    %39 = vector.broadcast %cst_13 : f32 to vector<16x1xf32>
    %40 = arith.divf %38, %39 : vector<16x1xf32>
    %41 = vector.broadcast %40 : vector<16x1xf32> to vector<16x32xf32>
    %42 = arith.subf %36, %41 : vector<16x32xf32>
    %43 = arith.mulf %42, %42 : vector<16x32xf32>
    %cst_14 = arith.constant dense<0.000000e+00> : vector<16xf32>
    %44 = vector.multi_reduction <add>, %43, %cst_14 [1] : vector<16x32xf32> to vector<16xf32>
    %45 = vector.shape_cast %44 : vector<16xf32> to vector<16x1xf32>
    %cst_15 = arith.constant 3.200000e+01 : f32
    %46 = vector.broadcast %cst_15 : f32 to vector<16x1xf32>
    %47 = arith.divf %45, %46 : vector<16x1xf32>
    %cst_16 = arith.constant 9.99999974E-6 : f32
    %48 = vector.broadcast %cst_16 : f32 to vector<16x1xf32>
    %49 = arith.addf %47, %48 : vector<16x1xf32>
    %50 = math.rsqrt %49 : vector<16x1xf32>
    %51 = vector.broadcast %50 : vector<16x1xf32> to vector<16x32xf32>
    %52 = arith.mulf %42, %51 : vector<16x32xf32>
    %53 = vector.broadcast %5 : vector<1x32xf32> to vector<16x32xf32>
    %54 = arith.mulf %52, %53 : vector<16x32xf32>
    %55 = vector.broadcast %6 : vector<1x32xf32> to vector<16x32xf32>
    %56 = arith.addf %54, %55 : vector<16x32xf32>
    %c0_17 = arith.constant 0 : index
    %c128 = arith.constant 128 : index
    %57 = vector.load %arg1[%c0_17, %c128] : memref<32x896xf32, #tpu.memory_space<vmem>>, vector<32x384xf32>
    %cst_18 = arith.constant dense<0.000000e+00> : vector<16x384xf32>
    %58 = tpu.matmul %56, %57, %cst_18 {dimension_numbers = #tpu.dot_dimension_numbers<[1], [0], [0], [1], [0, 0, 1, 1], [], []>, precision = #tpu.contract_precision<fp32>} : vector<16x32xf32>, vector<32x384xf32>, vector<16x384xf32> -> vector<16x384xf32>
    %59 = vector.broadcast %9 : vector<1x384xf32> to vector<16x384xf32>
    %60 = arith.addf %58, %59 : vector<16x384xf32>
    %61 = math.absf %60 : vector<16x384xf32>
    %cst_19 = arith.constant 0.707106769 : f32
    %62 = vector.broadcast %cst_19 : f32 to vector<16x384xf32>
    %63 = arith.mulf %61, %62 : vector<16x384xf32>
    %cst_20 = arith.constant 0.327591091 : f32
    %64 = vector.broadcast %cst_20 : f32 to vector<16x384xf32>
    %65 = arith.mulf %64, %63 : vector<16x384xf32>
    %cst_21 = arith.constant 1.000000e+00 : f32
    %66 = vector.broadcast %cst_21 : f32 to vector<16x384xf32>
    %67 = arith.addf %66, %65 : vector<16x384xf32>
    %cst_22 = arith.constant 1.000000e+00 : f32
    %68 = vector.broadcast %cst_22 : f32 to vector<16x384xf32>
    %69 = arith.divf %68, %67 : vector<16x384xf32>
    %cst_23 = arith.constant 1.06140542 : f32
    %70 = vector.broadcast %cst_23 : f32 to vector<16x384xf32>
    %71 = arith.mulf %69, %70 : vector<16x384xf32>
    %cst_24 = arith.constant -1.45315206 : f32
    %72 = vector.broadcast %cst_24 : f32 to vector<16x384xf32>
    %73 = arith.addf %72, %71 : vector<16x384xf32>
    %74 = arith.mulf %69, %73 : vector<16x384xf32>
    %cst_25 = arith.constant 1.42141378 : f32
    %75 = vector.broadcast %cst_25 : f32 to vector<16x384xf32>
    %76 = arith.addf %75, %74 : vector<16x384xf32>
    %77 = arith.mulf %69, %76 : vector<16x384xf32>
    %cst_26 = arith.constant -0.284496725 : f32
    %78 = vector.broadcast %cst_26 : f32 to vector<16x384xf32>
    %79 = arith.addf %78, %77 : vector<16x384xf32>
    %80 = arith.mulf %69, %79 : vector<16x384xf32>
    %cst_27 = arith.constant 0.254829586 : f32
    %81 = vector.broadcast %cst_27 : f32 to vector<16x384xf32>
    %82 = arith.addf %81, %80 : vector<16x384xf32>
    %83 = arith.mulf %69, %82 : vector<16x384xf32>
    %84 = arith.mulf %63, %63 : vector<16x384xf32>
    %cst_28 = arith.constant 0.000000e+00 : f32
    %85 = vector.broadcast %cst_28 : f32 to vector<16x384xf32>
    %86 = arith.subf %85, %84 : vector<16x384xf32>
    %87 = math.exp %86 : vector<16x384xf32>
    %88 = arith.mulf %83, %87 : vector<16x384xf32>
    %cst_29 = arith.constant 1.000000e+00 : f32
    %89 = vector.broadcast %cst_29 : f32 to vector<16x384xf32>
    %90 = arith.subf %89, %88 : vector<16x384xf32>
    %cst_30 = arith.constant 0.000000e+00 : f32
    %91 = vector.broadcast %cst_30 : f32 to vector<16x384xf32>
    %92 = arith.cmpf oge, %60, %91 : vector<16x384xf32>
    %cst_31 = arith.constant 0.000000e+00 : f32
    %93 = vector.broadcast %cst_31 : f32 to vector<16x384xf32>
    %94 = arith.subf %93, %90 : vector<16x384xf32>
    %95 = arith.select %92, %90, %94 : vector<16x384xi1>, vector<16x384xf32>
    %cst_32 = arith.constant 5.000000e-01 : f32
    %96 = vector.broadcast %cst_32 : f32 to vector<16x384xf32>
    %97 = arith.mulf %96, %60 : vector<16x384xf32>
    %cst_33 = arith.constant 1.000000e+00 : f32
    %98 = vector.broadcast %cst_33 : f32 to vector<16x384xf32>
    %99 = arith.addf %98, %95 : vector<16x384xf32>
    %100 = arith.mulf %97, %99 : vector<16x384xf32>
    %c0_34 = arith.constant 0 : index
    %c512 = arith.constant 512 : index
    %101 = vector.load %arg1[%c0_34, %c512] : memref<32x896xf32, #tpu.memory_space<vmem>>, vector<32x384xf32>
    %cst_35 = arith.constant dense<0.000000e+00> : vector<16x32xf32>
    %102 = tpu.matmul %100, %101, %cst_35 {dimension_numbers = #tpu.dot_dimension_numbers<[1], [1], [0], [0], [0, 0, 1, 0], [], []>, precision = #tpu.contract_precision<fp32>} : vector<16x384xf32>, vector<32x384xf32>, vector<16x32xf32> -> vector<16x32xf32>
    %103 = vector.broadcast %4 : vector<1x32xf32> to vector<16x32xf32>
    %104 = arith.addf %102, %103 : vector<16x32xf32>
    %105 = arith.addf %104, %56 : vector<16x32xf32>
    %cst_36 = arith.constant dense<0.000000e+00> : vector<16xf32>
    %106 = vector.multi_reduction <add>, %105, %cst_36 [1] : vector<16x32xf32> to vector<16xf32>
    %107 = vector.shape_cast %106 : vector<16xf32> to vector<16x1xf32>
    %cst_37 = arith.constant 3.200000e+01 : f32
    %108 = vector.broadcast %cst_37 : f32 to vector<16x1xf32>
    %109 = arith.divf %107, %108 : vector<16x1xf32>
    %110 = vector.broadcast %109 : vector<16x1xf32> to vector<16x32xf32>
    %111 = arith.subf %105, %110 : vector<16x32xf32>
    %112 = arith.mulf %111, %111 : vector<16x32xf32>
    %cst_38 = arith.constant dense<0.000000e+00> : vector<16xf32>
    %113 = vector.multi_reduction <add>, %112, %cst_38 [1] : vector<16x32xf32> to vector<16xf32>
    %114 = vector.shape_cast %113 : vector<16xf32> to vector<16x1xf32>
    %cst_39 = arith.constant 3.200000e+01 : f32
    %115 = vector.broadcast %cst_39 : f32 to vector<16x1xf32>
    %116 = arith.divf %114, %115 : vector<16x1xf32>
    %cst_40 = arith.constant 9.99999974E-6 : f32
    %117 = vector.broadcast %cst_40 : f32 to vector<16x1xf32>
    %118 = arith.addf %116, %117 : vector<16x1xf32>
    %119 = math.rsqrt %118 : vector<16x1xf32>
    %120 = vector.broadcast %119 : vector<16x1xf32> to vector<16x32xf32>
    %121 = arith.mulf %111, %120 : vector<16x32xf32>
    %122 = vector.broadcast %7 : vector<1x32xf32> to vector<16x32xf32>
    %123 = arith.mulf %121, %122 : vector<16x32xf32>
    %124 = vector.broadcast %8 : vector<1x32xf32> to vector<16x32xf32>
    %125 = arith.addf %123, %124 : vector<16x32xf32>
    %c0_41 = arith.constant 0 : index
    %c0_42 = arith.constant 0 : index
    %126 = vector.load %arg3[%c0_41, %c0_42] : memref<16x32xf32, #tpu.memory_space<vmem>>, vector<16x32xf32>
    tpu.vector_store %arg3[%c0_41, %c0_42], %125 {strides = array<i32>} : memref<16x32xf32, #tpu.memory_space<vmem>>, vector<16x32xf32>,
    return
  }
}

</mosaic_0001>

<llo_original>
// kernel: block_forward.1
$region0: #{block_forward.1}
  #allocation0 [shape = 'u32[]', space=smem, size = 0x4, offset = 0x4, fixed_abs, tag = 'smem constant byte address 0x4 - core index']
  #allocation1 [shape = 'u32[144,128]{1,0:T(1,128)}', space=vmem, size = 0x12000, scoped, tag = 'internal scratch']
  %s0 = inlined_call_operand.hbm [shape: f32[16,32], index: 0, kind: input, shape index: {}]
  %s1 = inlined_call_operand.hbm [shape: f32[32,896], index: 1, kind: input, shape index: {}]
  %s2 = inlined_call_operand.hbm [shape: f32[24,384], index: 2, kind: input, shape index: {}]
  %s3 = inlined_call_operand.hbm [shape: f32[16,32], index: 3, kind: output, shape index: {}]
  %s4 = sld [smem:[#allocation0]]
  $region34: #{block_forward.1} parent=0
    _
  %s6 = ssub.s32 1, %s4
  %s7 = scalar_select 0, %s6, %s4
  $region1: #{block_forward.1} parent=0
    #allocation2 [shape = 'u8[8192]{0}', space=vmem, size = 0x2000, scoped, tag = 'input window, operand 0, single buffered']
    #allocation3 [shape = 's32[1]{0}', space=sflag, size = 0x4, scoped, tag = 'scoped memory for block_forward.1']
    #allocation4 [shape = 's32[1]{0}', space=sflag, size = 0x4, scoped, tag = 'scoped memory for block_forward.1']
    #allocation5 [shape = 'u8[114688]{0}', space=vmem, size = 0x1c000, scoped, tag = 'input window, operand 1, single buffered']
    #allocation6 [shape = 's32[1]{0}', space=sflag, size = 0x4, scoped, tag = 'scoped memory for block_forward.1']
    #allocation7 [shape = 'u8[36864]{0}', space=vmem, size = 0x9000, scoped, tag = 'input window, operand 2, single buffered']
    #allocation8 [shape = 'u8[8192]{0}', space=vmem, size = 0x2000, scoped, tag = 'output window, operand 0, single buffered']
    %8 = vsyncpa [#allocation3], 0
    %9 = vsyncpa [#allocation6], 0
    %10 = vsyncpa [#allocation4], 0
    // Predicated region
    $region2: #{block_forward.1} parent=1 // pred_check
      _
    $region3: #{block_forward.1} parent=1 // pred_check_branch
      %12 = sbr.rel (0) target = $region5
    $region4: #{block_forward.1} parent=1 // pred_region
      %s14 = ssub.s32 256, 256
      %15 = vsyncadd [#allocation3], %s14
      %s16 = sshll.u32 [#allocation2], 4
      %s17 = int_to_ptr.vmem [resolvable:$true] %s16
      %22 = dma.hbm_to_vmem [thread:$0]  %s0, 256, %s17, [#allocation3], 128, 128, 8
    $region5: #{block_forward.1} parent=1 // pred_fallthru
      _
    // Predicated region
    $region6: #{block_forward.1} parent=1 // pred_check
      _
    $region7: #{block_forward.1} parent=1 // pred_check_branch
      %24 = sbr.rel (0) target = $region9
    $region8: #{block_forward.1} parent=1 // pred_region
      %s26 = ssub.s32 3584, 3584
      %27 = vsyncadd [#allocation6], %s26
      %s28 = sshll.u32 [#allocation5], 4
      %s29 = int_to_ptr.vmem [resolvable:$true] %s28
      %34 = dma.hbm_to_vmem [thread:$0]  %s1, 3584, %s29, [#allocation6], 896, 896, 56
    $region9: #{block_forward.1} parent=1 // pred_fallthru
      _
    // Predicated region
    $region10: #{block_forward.1} parent=1 // pred_check
      _
    $region11: #{block_forward.1} parent=1 // pred_check_branch
      %36 = sbr.rel (0) target = $region13
    $region12: #{block_forward.1} parent=1 // pred_region
      %s38 = ssub.s32 1152, 1152
      %39 = vsyncadd [#allocation6], %s38
      %s40 = sshll.u32 [#allocation7], 4
      %s41 = int_to_ptr.vmem [resolvable:$true] %s40
      %46 = dma.hbm_to_vmem [thread:$0]  %s2, 1152, %s41, [#allocation6], 384, 384, 24
    $region13: #{block_forward.1} parent=1 // pred_fallthru
      _
    // Predicated region
    $region14: #{block_forward.1} parent=1 // pred_check
      _
    $region15: #{block_forward.1} parent=1 // pred_check_branch
      %48 = sbr.rel (0) target = $region17
    $region16: #{block_forward.1} parent=1 // pred_region
      %49 = dma.done [#allocation3], 256
    $region17: #{block_forward.1} parent=1 // pred_fallthru
      _
    // Predicated region
    $region18: #{block_forward.1} parent=1 // pred_check
      _
    $region19: #{block_forward.1} parent=1 // pred_check_branch
      %51 = sbr.rel (0) target = $region21
    $region20: #{block_forward.1} parent=1 // pred_region
      %52 = dma.done [#allocation6], 3584
    $region21: #{block_forward.1} parent=1 // pred_fallthru
      _
    // Predicated region
    $region22: #{block_forward.1} parent=1 // pred_check
      _
    $region23: #{block_forward.1} parent=1 // pred_check_branch
      %54 = sbr.rel (0) target = $region25
    $region24: #{block_forward.1} parent=1 // pred_region
      %55 = dma.done [#allocation6], 1152
    $region25: #{block_forward.1} parent=1 // pred_fallthru
      _
    %v56 = vld [vmem:[#allocation2] sm:$0xff]
    %v57 = vld [vmem:[#allocation2 + $0x8] sm:$0xff]
    %v58 = vld [vmem:[#allocation7] sm:$0xff]
    %v59 = vld [vmem:[#allocation7 + $0x8] sm:$0xff]
    %v60 = vld [vmem:[#allocation7 + $0x10] sm:$0xff]
    %v61 = vld [vmem:[#allocation7 + $0x18] sm:$0xff]
    %v62 = vld [vmem:[#allocation7 + $0x30] sm:$0xff]
    %v63 = vld [vmem:[#allocation5] sm:$0xff]
    %v64 = vld [vmem:[#allocation5 + $0x38] sm:$0xff]
    %v65 = vld [vmem:[#allocation5 + $0x70] sm:$0xff]
    %v66 = vld [vmem:[#allocation5 + $0xa8] sm:$0xff]
    %v67 = vlaneseq
    %v68 = vshrl.u32 %v67, 7
    %v69 = vsub.s32 0, %v68
    %v70 = vrot.slane %v58, %v69
    %vm71 = vcmask 261120
    %v73 = vsel %vm71, %v56, 0
    %v76 = vsel %vm71, %v57, 0
    %78 = vmatprep.subr.mxu0 0.0
    %v79 = vand.u32 %v63, 4294901760
    %80 = vmatpush1.msra.mxu0 %v79
    %81 = vmatprep.subr.mxu0 0.0
    %v82 = vand.u32 %v64, 4294901760
    %83 = vmatpush1.msra.mxu0 %v82
    %84 = vmatprep.subr.mxu0 0.0
    %v85 = vand.u32 %v65, 4294901760
    %86 = vmatpush1.msra.mxu0 %v85
    %87 = vmatprep.subr.mxu0 0.0
    %v88 = vand.u32 %v66, 4294901760
    %89 = vmatpush1.msra.mxu0 %v88
    %90 = vmatprep.subr.mxu0 0.0
    %91 = vmatpush1.msra.mxu0 0.0
    %92 = vmatprep.subr.mxu0 0.0
    %93 = vmatpush1.msra.mxu0 0.0
    %94 = vmatprep.subr.mxu0 0.0
    %95 = vmatpush1.msra.mxu0 0.0
    %96 = vmatprep.subr.mxu0 0.0
    %97 = vmatpush1.msra.mxu0 0.0
    %98 = vmatprep.subr.mxu0 0.0
    %99 = vmatpush1.msra.mxu0 0.0
    %100 = vmatprep.subr.mxu0 0.0
    %101 = vmatpush1.msra.mxu0 0.0
    %102 = vmatprep.subr.mxu0 0.0
    %103 = vmatpush1.msra.mxu0 0.0
    %104 = vmatprep.subr.mxu0 0.0
    %105 = vmatpush1.msra.mxu0 0.0
    %106 = vmatprep.subr.mxu0 0.0
    %107 = vmatpush1.msra.mxu0 0.0
    %108 = vmatprep.subr.mxu0 0.0
    %109 = vmatpush1.msra.mxu0 0.0
    %110 = vmatprep.subr.mxu0 0.0
    %111 = vmatpush1.msra.mxu0 0.0
    %112 = vmatprep.subr.mxu0 0.0
    %113 = vmatpush1.msra.mxu0 0.0
    %114 = vmatprep.subr.mxu0 0.0
    %115 = vmatpush1.msra.mxu0 0.0
    %116 = vmatprep.subr.mxu0 0.0
    %117 = vmatpush1.msra.mxu0 0.0
    %118 = vmatprep.subr.mxu0 0.0
    %119 = vmatpush1.msra.mxu0 0.0
    %120 = vmatprep.subr.mxu0 0.0
    %121 = vmatpush1.msra.mxu0 0.0
    %122 = vmatprep.subr.mxu0 0.0
    %123 = vmatpush1.msra.mxu0 0.0
    %124 = vmatprep.subr.mxu0 0.0
    %125 = vmatpush1.msra.mxu0 0.0
    %126 = vmatprep.subr.mxu0 0.0
    %127 = vmatpush1.msra.mxu0 0.0
    %128 = vmatprep.subr.mxu0 0.0
    %129 = vmatpush1.msra.mxu0 0.0
    %130 = vmatprep.subr.mxu0 0.0
    %131 = vmatpush1.msra.mxu0 0.0
    %132 = vmatprep.subr.mxu0 0.0
    %133 = vmatpush1.msra.mxu0 0.0
    %134 = vmatprep.subr.mxu0 0.0
    %135 = vmatpush1.msra.mxu0 0.0
    %136 = vmatprep.subr.mxu0 0.0
    %137 = vmatpush1.msra.mxu0 0.0
    %138 = vmatprep.subr.mxu0 0.0
    %139 = vmatpush1.msra.mxu0 0.0
    %140 = vmatprep.subr.mxu0 0.0
    %141 = vmatpush1.msra.mxu0 0.0
    %142 = vmatprep.subr.mxu0 0.0
    %143 = vmatpush1.msra.mxu0 0.0
    %144 = vmatprep.subr.mxu0 0.0
    %145 = vmatpush1.msra.mxu0 0.0
    %146 = vmatprep.mubr.f32.mxu0 0.0
    %v147 = vand.u32 %v73, 4294901760
    %v148 = vsub.f32 %v73, %v147
    %v149 = vand.u32 %v148, 4294901760
    %v150 = vsub.f32 %v148, %v149
    %v151 = vand.u32 %v150, 4294901760
    %152 = vmatmul.mubr.f32.gmra.mrb[0].mxu0 %v151
    %v153 = vpop.f32.mrb[0].mxu0
    %v154 = vadd.f32 %v70, %v153
    %v155 = vpop.f32.mrb[0].mxu0
    %156 = vmatprep.mubr.f32.mxu0 0.0
    %v157 = vand.u32 %v76, 4294901760
    %v158 = vsub.f32 %v76, %v157
    %v159 = vand.u32 %v158, 4294901760
    %v160 = vsub.f32 %v158, %v159
    %v161 = vand.u32 %v160, 4294901760
    %162 = vmatmul.mubr.f32.gmra.mrb[0].mxu0 %v161
    %v163 = vpop.f32.mrb[0].mxu0
    %v164 = vadd.f32 %v70, %v163
    %v165 = vpop.f32.mrb[0].mxu0
    %166 = vdwg.mxu0
    %167 = vmatprep.subr.mxu0 0.0
    %v168 = vand.u32 %v63, 4294901760
    %v169 = vsub.f32 %v63, %v168
    %v170 = vand.u32 %v169, 4294901760
    %v171 = vsub.f32 %v169, %v170
    %v172 = vand.u32 %v171, 4294901760
    %173 = vmatpush1.msra.mxu0 %v172
    %174 = vmatprep.subr.mxu0 0.0
    %v175 = vand.u32 %v64, 4294901760
    %v176 = vsub.f32 %v64, %v175
    %v177 = vand.u32 %v176, 4294901760
    %v178 = vsub.f32 %v176, %v177
    %v179 = vand.u32 %v178, 4294901760
    %180 = vmatpush1.msra.mxu0 %v179
    %181 = vmatprep.subr.mxu0 0.0
    %v182 = vand.u32 %v65, 4294901760
    %v183 = vsub.f32 %v65, %v182
    %v184 = vand.u32 %v183, 4294901760
    %v185 = vsub.f32 %v183, %v184
    %v186 = vand.u32 %v185, 4294901760
    %187 = vmatpush1.msra.mxu0 %v186
    %188 = vmatprep.subr.mxu0 0.0
    %v189 = vand.u32 %v66, 4294901760
    %v190 = vsub.f32 %v66, %v189
    %v191 = vand.u32 %v190, 4294901760
    %v192 = vsub.f32 %v190, %v191
    %v193 = vand.u32 %v192, 4294901760
    %194 = vmatpush1.msra.mxu0 %v193
    %195 = vmatprep.subr.mxu0 0.0
    %196 = vmatpush1.msra.mxu0 0.0
    %197 = vmatprep.subr.mxu0 0.0
    %198 = vmatpush1.msra.mxu0 0.0
    %199 = vmatprep.subr.mxu0 0.0
    %200 = vmatpush1.msra.mxu0 0.0
    %201 = vmatprep.subr.mxu0 0.0
    %202 = vmatpush1.msra.mxu0 0.0
    %203 = vmatprep.subr.mxu0 0.0
    %204 = vmatpush1.msra.mxu0 0.0
    %205 = vmatprep.subr.mxu0 0.0
    %206 = vmatpush1.msra.mxu0 0.0
    %207 = vmatprep.subr.mxu0 0.0
    %208 = vmatpush1.msra.mxu0 0.0
    %209 = vmatprep.subr.mxu0 0.0
    %210 = vmatpush1.msra.mxu0 0.0
    %211 = vmatprep.subr.mxu0 0.0
    %212 = vmatpush1.msra.mxu0 0.0
    %213 = vmatprep.subr.mxu0 0.0
    %214 = vmatpush1.msra.mxu0 0.0
    %215 = vmatprep.subr.mxu0 0.0
    %216 = vmatpush1.msra.mxu0 0.0
    %217 = vmatprep.subr.mxu0 0.0
    %218 = vmatpush1.msra.mxu0 0.0
    %219 = vmatprep.subr.mxu0 0.0
    %220 = vmatpush1.msra.mxu0 0.0
    %221 = vmatprep.subr.mxu0 0.0
    %222 = vmatpush1.msra.mxu0 0.0
    %223 = vmatprep.subr.mxu0 0.0
    %224 = vmatpush1.msra.mxu0 0.0
    %225 = vmatprep.subr.mxu0 0.0
    %226 = vmatpush1.msra.mxu0 0.0
    %227 = vmatprep.subr.mxu0 0.0
    %228 = vmatpush1.msra.mxu0 0.0
    %229 = vmatprep.subr.mxu0 0.0
    %230 = vmatpush1.msra.mxu0 0.0
    %231 = vmatprep.subr.mxu0 0.0
    %232 = vmatpush1.msra.mxu0 0.0
    %233 = vmatprep.subr.mxu0 0.0
    %234 = vmatpush1.msra.mxu0 0.0
    %235 = vmatprep.subr.mxu0 0.0
    %236 = vmatpush1.msra.mxu0 0.0
    %237 = vmatprep.subr.mxu0 0.0
    %238 = vmatpush1.msra.mxu0 0.0
    %239 = vmatprep.subr.mxu0 0.0
    %240 = vmatpush1.msra.mxu0 0.0
    %241 = vmatprep.subr.mxu0 0.0
    %242 = vmatpush1.msra.mxu0 0.0
    %243 = vmatprep.subr.mxu0 0.0
    %244 = vmatpush1.msra.mxu0 0.0
    %245 = vmatprep.subr.mxu0 0.0
    %246 = vmatpush1.msra.mxu0 0.0
    %247 = vmatprep.subr.mxu0 0.0
    %248 = vmatpush1.msra.mxu0 0.0
    %249 = vmatprep.subr.mxu0 0.0
    %250 = vmatpush1.msra.mxu0 0.0
    %251 = vmatprep.mubr.f32.mxu0 0.0
    %v252 = vand.u32 %v73, 4294901760
    %253 = vmatmul.mubr.f32.gmra.mrb[0].mxu0 %v252
    %v254 = vpop.f32.mrb[0].mxu0
    %v255 = vadd.f32 %v154, %v254
    %v256 = vpop.f32.mrb[0].mxu0
    %257 = vmatprep.mubr.f32.mxu0 0.0
    %v258 = vand.u32 %v76, 4294901760
    %259 = vmatmul.mubr.f32.gmra.mrb[0].mxu0 %v258
    %v260 = vpop.f32.mrb[0].mxu0
    %v261 = vadd.f32 %v164, %v260
    %v262 = vpop.f32.mrb[0].mxu0
    %263 = vdwg.mxu0
    %264 = vmatprep.subr.mxu0 0.0
    %v265 = vand.u32 %v63, 4294901760
    %v266 = vsub.f32 %v63, %v265
    %267 = vmatpush1.msra.mxu0 %v266
    %268 = vmatprep.subr.mxu0 0.0
    %v269 = vand.u32 %v64, 4294901760
    %v270 = vsub.f32 %v64, %v269
    %271 = vmatpush1.msra.mxu0 %v270
    %272 = vmatprep.subr.mxu0 0.0
    %v273 = vand.u32 %v65, 4294901760
    %v274 = vsub.f32 %v65, %v273
    %275 = vmatpush1.msra.mxu0 %v274
    %276 = vmatprep.subr.mxu0 0.0
    %v277 = vand.u32 %v66, 4294901760
    %v278 = vsub.f32 %v66, %v277
    %279 = vmatpush1.msra.mxu0 %v278
    %280 = vmatprep.subr.mxu0 0.0
    %281 = vmatpush1.msra.mxu0 0.0
    %282 = vmatprep.subr.mxu0 0.0
    %283 = vmatpush1.msra.mxu0 0.0
    %284 = vmatprep.subr.mxu0 0.0
    %285 = vmatpush1.msra.mxu0 0.0
    %286 = vmatprep.subr.mxu0 0.0
    %287 = vmatpush1.msra.mxu0 0.0
    %288 = vmatprep.subr.mxu0 0.0
    %289 = vmatpush1.msra.mxu0 0.0
    %290 = vmatprep.subr.mxu0 0.0
    %291 = vmatpush1.msra.mxu0 0.0
    %292 = vmatprep.subr.mxu0 0.0
    %293 = vmatpush1.msra.mxu0 0.0
    %294 = vmatprep.subr.mxu0 0.0
    %295 = vmatpush1.msra.mxu0 0.0
    %296 = vmatprep.subr.mxu0 0.0
    %297 = vmatpush1.msra.mxu0 0.0
    %298 = vmatprep.subr.mxu0 0.0
    %299 = vmatpush1.msra.mxu0 0.0
    %300 = vmatprep.subr.mxu0 0.0
    %301 = vmatpush1.msra.mxu0 0.0
    %302 = vmatprep.subr.mxu0 0.0
    %303 = vmatpush1.msra.mxu0 0.0
    %304 = vmatprep.subr.mxu0 0.0
    %305 = vmatpush1.msra.mxu0 0.0
    %306 = vmatprep.subr.mxu0 0.0
    %307 = vmatpush1.msra.mxu0 0.0
    %308 = vmatprep.subr.mxu0 0.0
    %309 = vmatpush1.msra.mxu0 0.0
    %310 = vmatprep.subr.mxu0 0.0
    %311 = vmatpush1.msra.mxu0 0.0
    %312 = vmatprep.subr.mxu0 0.0
    %313 = vmatpush1.msra.mxu0 0.0
    %314 = vmatprep.subr.mxu0 0.0
    %315 = vmatpush1.msra.mxu0 0.0
    %316 = vmatprep.subr.mxu0 0.0
    %317 = vmatpush1.msra.mxu0 0.0
    %318 = vmatprep.subr.mxu0 0.0
    %319 = vmatpush1.msra.mxu0 0.0
    %320 = vmatprep.subr.mxu0 0.0
    %321 = vmatpush1.msra.mxu0 0.0
    %322 = vmatprep.subr.mxu0 0.0
    %323 = vmatpush1.msra.mxu0 0.0
    %324 = vmatprep.subr.mxu0 0.0
    %325 = vmatpush1.msra.mxu0 0.0
    %326 = vmatprep.subr.mxu0 0.0
    %327 = vmatpush1.msra.mxu0 0.0
    %328 = vmatprep.subr.mxu0 0.0
    %329 = vmatpush1.msra.mxu0 0.0
    %330 = vmatprep.subr.mxu0 0.0
    %331 = vmatpush1.msra.mxu0 0.0
    %332 = vmatprep.subr.mxu0 0.0
    %333 = vmatpush1.msra.mxu0 0.0
    %334 = vmatprep.subr.mxu0 0.0
    %335 = vmatpush1.msra.mxu0 0.0
    %336 = vmatprep.mubr.f32.mxu0 0.0
    %v337 = vand.u32 %v73, 4294901760
    %v338 = vsub.f32 %v73, %v337
    %339 = vmatmul.mubr.f32.gmra.mrb[0].mxu0 %v338
    %v340 = vpop.f32.mrb[0].mxu0
    %v341 = vadd.f32 %v255, %v340
    %v342 = vpop.f32.mrb[0].mxu0
    %343 = vmatprep.mubr.f32.mxu0 0.0
    %v344 = vand.u32 %v76, 4294901760
    %v345 = vsub.f32 %v76, %v344
    %346 = vmatmul.mubr.f32.gmra.mrb[0].mxu0 %v345
    %v347 = vpop.f32.mrb[0].mxu0
    %v348 = vadd.f32 %v261, %v347
    %v349 = vpop.f32.mrb[0].mxu0
    %350 = vdwg.mxu0
    %351 = vmatprep.subr.mxu0 0.0
    %v352 = vand.u32 %v63, 4294901760
    %353 = vmatpush1.msra.mxu0 %v352
    %354 = vmatprep.subr.mxu0 0.0
    %v355 = vand.u32 %v64, 4294901760
    %356 = vmatpush1.msra.mxu0 %v355
    %357 = vmatprep.subr.mxu0 0.0
    %v358 = vand.u32 %v65, 4294901760
    %359 = vmatpush1.msra.mxu0 %v358
    %360 = vmatprep.subr.mxu0 0.0
    %v361 = vand.u32 %v66, 4294901760
    %362 = vmatpush1.msra.mxu0 %v361
    %363 = vmatprep.subr.mxu0 0.0
    %364 = vmatpush1.msra.mxu0 0.0
    %365 = vmatprep.subr.mxu0 0.0
    %366 = vmatpush1.msra.mxu0 0.0
    %367 = vmatprep.subr.mxu0 0.0
    %368 = vmatpush1.msra.mxu0 0.0
    %369 = vmatprep.subr.mxu0 0.0
    %370 = vmatpush1.msra.mxu0 0.0
    %371 = vmatprep.subr.mxu0 0.0
    %372 = vmatpush1.msra.mxu0 0.0
    %373 = vmatprep.subr.mxu0 0.0
    %374 = vmatpush1.msra.mxu0 0.0
    %375 = vmatprep.subr.mxu0 0.0
    %376 = vmatpush1.msra.mxu0 0.0
    %377 = vmatprep.subr.mxu0 0.0
    %378 = vmatpush1.msra.mxu0 0.0
    %379 = vmatprep.subr.mxu0 0.0
    %380 = vmatpush1.msra.mxu0 0.0
    %381 = vmatprep.subr.mxu0 0.0
    %382 = vmatpush1.msra.mxu0 0.0
    %383 = vmatprep.subr.mxu0 0.0
    %384 = vmatpush1.msra.mxu0 0.0
    %385 = vmatprep.subr.mxu0 0.0
    %386 = vmatpush1.msra.mxu0 0.0
    %387 = vmatprep.subr.mxu0 0.0
    %388 = vmatpush1.msra.mxu0 0.0
    %389 = vmatprep.subr.mxu0 0.0
    %390 = vmatpush1.msra.mxu0 0.0
    %391 = vmatprep.subr.mxu0 0.0
    %392 = vmatpush1.msra.mxu0 0.0
    %393 = vmatprep.subr.mxu0 0.0
    %394 = vmatpush1.msra.mxu0 0.0
    %395 = vmatprep.subr.mxu0 0.0
    %396 = vmatpush1.msra.mxu0 0.0
    %397 = vmatprep.subr.mxu0 0.0
    %398 = vmatpush1.msra.mxu0 0.0
    %399 = vmatprep.subr.mxu0 0.0
    %400 = vmatpush1.msra.mxu0 0.0
    %401 = vmatprep.subr.mxu0 0.0
    %402 = vmatpush1.msra.mxu0 0.0
    %403 = vmatprep.subr.mxu0 0.0
    %404 = vmatpush1.msra.mxu0 0.0
    %405 = vmatprep.subr.mxu0 0.0
    %406 = vmatpush1.msra.mxu0 0.0
    %407 = vmatprep.subr.mxu0 0.0
    %408 = vmatpush1.msra.mxu0 0.0
    %409 = vmatprep.subr.mxu0 0.0
    %410 = vmatpush1.msra.mxu0 0.0
    %411 = vmatprep.subr.mxu0 0.0
    %412 = vmatpush1.msra.mxu0 0.0
    %413 = vmatprep.subr.mxu0 0.0
    %414 = vmatpush1.msra.mxu0 0.0
    %415 = vmatprep.subr.mxu0 0.0
    %416 = vmatpush1.msra.mxu0 0.0
    %417 = vmatprep.subr.mxu0 0.0
    %418 = vmatpush1.msra.mxu0 0.0
    %419 = vmatprep.mubr.f32.mxu0 0.0
    %v420 = vand.u32 %v73, 4294901760
    %v421 = vsub.f32 %v73, %v420
    %v422 = vand.u32 %v421, 4294901760
    %423 = vmatmul.mubr.f32.gmra.mrb[0].mxu0 %v422
    %v424 = vpop.f32.mrb[0].mxu0
    %v425 = vadd.f32 %v341, %v424
    %v426 = vpop.f32.mrb[0].mxu0
    %427 = vmatprep.mubr.f32.mxu0 0.0
    %v428 = vand.u32 %v76, 4294901760
    %v429 = vsub.f32 %v76, %v428
    %v430 = vand.u32 %v429, 4294901760
    %431 = vmatmul.mubr.f32.gmra.mrb[0].mxu0 %v430
    %v432 = vpop.f32.mrb[0].mxu0
    %v433 = vadd.f32 %v348, %v432
    %v434 = vpop.f32.mrb[0].mxu0
    %435 = vdwg.mxu0
    %436 = vmatprep.subr.mxu0 0.0
    %v437 = vand.u32 %v63, 4294901760
    %v438 = vsub.f32 %v63, %v437
    %v439 = vand.u32 %v438, 4294901760
    %440 = vmatpush1.msra.mxu0 %v439
    %441 = vmatprep.subr.mxu0 0.0
    %v442 = vand.u32 %v64, 4294901760
    %v443 = vsub.f32 %v64, %v442
    %v444 = vand.u32 %v443, 4294901760
    %445 = vmatpush1.msra.mxu0 %v444
    %446 = vmatprep.subr.mxu0 0.0
    %v447 = vand.u32 %v65, 4294901760
    %v448 = vsub.f32 %v65, %v447
    %v449 = vand.u32 %v448, 4294901760
    %450 = vmatpush1.msra.mxu0 %v449
    %451 = vmatprep.subr.mxu0 0.0
    %v452 = vand.u32 %v66, 4294901760
    %v453 = vsub.f32 %v66, %v452
    %v454 = vand.u32 %v453, 4294901760
    %455 = vmatpush1.msra.mxu0 %v454
    %456 = vmatprep.subr.mxu0 0.0
    %457 = vmatpush1.msra.mxu0 0.0
    %458 = vmatprep.subr.mxu0 0.0
    %459 = vmatpush1.msra.mxu0 0.0
    %460 = vmatprep.subr.mxu0 0.0
    %461 = vmatpush1.msra.mxu0 0.0
    %462 = vmatprep.subr.mxu0 0.0
    %463 = vmatpush1.msra.mxu0 0.0
    %464 = vmatprep.subr.mxu0 0.0
    %465 = vmatpush1.msra.mxu0 0.0
    %466 = vmatprep.subr.mxu0 0.0
    %467 = vmatpush1.msra.mxu0 0.0
    %468 = vmatprep.subr.mxu0 0.0
    %469 = vmatpush1.msra.mxu0 0.0
    %470 = vmatprep.subr.mxu0 0.0
    %471 = vmatpush1.msra.mxu0 0.0
    %472 = vmatprep.subr.mxu0 0.0
    %473 = vmatpush1.msra.mxu0 0.0
    %474 = vmatprep.subr.mxu0 0.0
    %475 = vmatpush1.msra.mxu0 0.0
    %476 = vmatprep.subr.mxu0 0.0
    %477 = vmatpush1.msra.mxu0 0.0
    %478 = vmatprep.subr.mxu0 0.0
    %479 = vmatpush1.msra.mxu0 0.0
    %480 = vmatprep.subr.mxu0 0.0
    %481 = vmatpush1.msra.mxu0 0.0
    %482 = vmatprep.subr.mxu0 0.0
    %483 = vmatpush1.msra.mxu0 0.0
    %484 = vmatprep.subr.mxu0 0.0
    %485 = vmatpush1.msra.mxu0 0.0
    %486 = vmatprep.subr.mxu0 0.0
    %487 = vmatpush1.msra.mxu0 0.0
    %488 = vmatprep.subr.mxu0 0.0
    %489 = vmatpush1.msra.mxu0 0.0
    %490 = vmatprep.subr.mxu0 0.0
    %491 = vmatpush1.msra.mxu0 0.0
    %492 = vmatprep.subr.mxu0 0.0
    %493 = vmatpush1.msra.mxu0 0.0
    %494 = vmatprep.subr.mxu0 0.0
    %495 = vmatpush1.msra.mxu0 0.0
    %496 = vmatprep.subr.mxu0 0.0
    %497 = vmatpush1.msra.mxu0 0.0
    %498 = vmatprep.subr.mxu0 0.0
    %499 = vmatpush1.msra.mxu0 0.0
    %500 = vmatprep.subr.mxu0 0.0
    %501 = vmatpush1.msra.mxu0 0.0
    %502 = vmatprep.subr.mxu0 0.0
    %503 = vmatpush1.msra.mxu0 0.0
    %504 = vmatprep.subr.mxu0 0.0
    %505 = vmatpush1.msra.mxu0 0.0
    %506 = vmatprep.subr.mxu0 0.0
    %507 = vmatpush1.msra.mxu0 0.0
    %508 = vmatprep.subr.mxu0 0.0
    %509 = vmatpush1.msra.mxu0 0.0
    %510 = vmatprep.subr.mxu0 0.0
    %511 = vmatpush1.msra.mxu0 0.0
    %512 = vmatprep.mubr.f32.mxu0 0.0
    %v513 = vand.u32 %v73, 4294901760
    %514 = vmatmul.mubr.f32.gmra.mrb[0].mxu0 %v513
    %v515 = vpop.f32.mrb[0].mxu0
    %v516 = vadd.f32 %v425, %v515
    %v517 = vpop.f32.mrb[0].mxu0
    %518 = vmatprep.mubr.f32.mxu0 0.0
    %v519 = vand.u32 %v76, 4294901760
    %520 = vmatmul.mubr.f32.gmra.mrb[0].mxu0 %v519
    %v521 = vpop.f32.mrb[0].mxu0
    %v522 = vadd.f32 %v433, %v521
    %v523 = vpop.f32.mrb[0].mxu0
    %524 = vdwg.mxu0
    %525 = vmatprep.subr.mxu0 0.0
    %v526 = vand.u32 %v63, 4294901760
    %527 = vmatpush1.msra.mxu0 %v526
    %528 = vmatprep.subr.mxu0 0.0
    %v529 = vand.u32 %v64, 4294901760
    %530 = vmatpush1.msra.mxu0 %v529
    %531 = vmatprep.subr.mxu0 0.0
    %v532 = vand.u32 %v65, 4294901760
    %533 = vmatpush1.msra.mxu0 %v532
    %534 = vmatprep.subr.mxu0 0.0
    %v535 = vand.u32 %v66, 4294901760
    %536 = vmatpush1.msra.mxu0 %v535
    %537 = vmatprep.subr.mxu0 0.0
    %538 = vmatpush1.msra.mxu0 0.0
    %539 = vmatprep.subr.mxu0 0.0
    %540 = vmatpush1.msra.mxu0 0.0
    %541 = vmatprep.subr.mxu0 0.0
    %542 = vmatpush1.msra.mxu0 0.0
    %543 = vmatprep.subr.mxu0 0.0
    %544 = vmatpush1.msra.mxu0 0.0
    %545 = vmatprep.subr.mxu0 0.0
    %546 = vmatpush1.msra.mxu0 0.0
    %547 = vmatprep.subr.mxu0 0.0
    %548 = vmatpush1.msra.mxu0 0.0
    %549 = vmatprep.subr.mxu0 0.0
    %550 = vmatpush1.msra.mxu0 0.0
    %551 = vmatprep.subr.mxu0 0.0
    %552 = vmatpush1.msra.mxu0 0.0
    %553 = vmatprep.subr.mxu0 0.0
    %554 = vmatpush1.msra.mxu0 0.0
    %555 = vmatprep.subr.mxu0 0.0
    %556 = vmatpush1.msra.mxu0 0.0
    %557 = vmatprep.subr.mxu0 0.0
    %558 = vmatpush1.msra.mxu0 0.0
    %559 = vmatprep.subr.mxu0 0.0
    %560 = vmatpush1.msra.mxu0 0.0
    %561 = vmatprep.subr.mxu0 0.0
    %562 = vmatpush1.msra.mxu0 0.0
    %563 = vmatprep.subr.mxu0 0.0
    %564 = vmatpush1.msra.mxu0 0.0
    %565 = vmatprep.subr.mxu0 0.0
    %566 = vmatpush1.msra.mxu0 0.0
    %567 = vmatprep.subr.mxu0 0.0
    %568 = vmatpush1.msra.mxu0 0.0
    %569 = vmatprep.subr.mxu0 0.0
    %570 = vmatpush1.msra.mxu0 0.0
    %571 = vmatprep.subr.mxu0 0.0
    %572 = vmatpush1.msra.mxu0 0.0
    %573 = vmatprep.subr.mxu0 0.0
    %574 = vmatpush1.msra.mxu0 0.0
    %575 = vmatprep.subr.mxu0 0.0
    %576 = vmatpush1.msra.mxu0 0.0
    %577 = vmatprep.subr.mxu0 0.0
    %578 = vmatpush1.msra.mxu0 0.0
    %579 = vmatprep.subr.mxu0 0.0
    %580 = vmatpush1.msra.mxu0 0.0
    %581 = vmatprep.subr.mxu0 0.0
    %582 = vmatpush1.msra.mxu0 0.0
    %583 = vmatprep.subr.mxu0 0.0
    %584 = vmatpush1.msra.mxu0 0.0
    %585 = vmatprep.subr.mxu0 0.0
    %586 = vmatpush1.msra.mxu0 0.0
    %587 = vmatprep.subr.mxu0 0.0
    %588 = vmatpush1.msra.mxu0 0.0
    %589 = vmatprep.subr.mxu0 0.0
    %590 = vmatpush1.msra.mxu0 0.0
    %591 = vmatprep.subr.mxu0 0.0
    %592 = vmatpush1.msra.mxu0 0.0
    %593 = vmatprep.mubr.f32.mxu0 0.0
    %v594 = vand.u32 %v73, 4294901760
    %595 = vmatmul.mubr.f32.gmra.mrb[0].mxu0 %v594
    %v596 = vpop.f32.mrb[0].mxu0
    %v597 = vadd.f32 %v516, %v596
    %v598 = vpop.f32.mrb[0].mxu0
    %599 = vmatprep.mubr.f32.mxu0 0.0
    %v600 = vand.u32 %v76, 4294901760
    %601 = vmatmul.mubr.f32.gmra.mrb[0].mxu0 %v600
    %v602 = vpop.f32.mrb[0].mxu0
    %v603 = vadd.f32 %v522, %v602
    %v604 = vpop.f32.mrb[0].mxu0
    %605 = vdwg.mxu0
    %608 = vrot.lane.b32.xlu0 %v597, 96
    %v609 = vpop.permute.xlu0 %608
    %610 = vrot.lane.b32.xlu0 %v603, 96
    %v611 = vpop.permute.xlu0 %610
    %v612 = vsel %vm71, %v597, 0
    %v614 = vsel %vm71, %v603, 0
    %v616 = vsel %vm71, %v609, 0
    %v618 = vsel %vm71, %v611, 0
    %620 = vmatprep.subr.mxu0 0.0
    %v621 = vand.u32 %v616, 4294901760
    %622 = vmatpush1.xpose.msra.mxu0 %v621
    %623 = vmatprep.subr.mxu0 0.0
    %v624 = vand.u32 %v618, 4294901760
    %625 = vmatpush1.xpose.msra.mxu0 %v624
    %626 = vmatprep.subr.mxu0 0.0
    %627 = vmatpush1.xpose.msra.mxu0 0.0
    %628 = vmatprep.subr.mxu0 0.0
    %629 = vmatpush1.xpose.msra.mxu0 0.0
    %630 = vmatprep.subr.mxu0 0.0
    %631 = vmatpush1.xpose.msra.mxu0 0.0
    %632 = vmatprep.subr.mxu0 0.0
    %633 = vmatpush1.xpose.msra.mxu0 0.0
    %634 = vmatprep.subr.mxu0 0.0
    %635 = vmatpush1.xpose.msra.mxu0 0.0
    %636 = vmatprep.subr.mxu0 0.0
    %637 = vmatpush1.xpose.msra.mxu0 0.0
    %638 = vmatprep.subr.mxu0 0.0
    %639 = vmatpush1.xpose.msra.mxu0 0.0
    %640 = vmatprep.subr.mxu0 0.0
    %641 = vmatpush1.xpose.msra.mxu0 0.0
    %642 = vmatprep.subr.mxu0 0.0
    %643 = vmatpush1.xpose.msra.mxu0 0.0
    %644 = vmatprep.subr.mxu0 0.0
    %645 = vmatpush1.xpose.msra.mxu0 0.0
    %646 = vmatprep.subr.mxu0 0.0
    %647 = vmatpush1.xpose.msra.mxu0 0.0
    %648 = vmatprep.subr.mxu0 0.0
    %649 = vmatpush1.xpose.msra.mxu0 0.0
    %650 = vmatprep.subr.mxu0 0.0
    %651 = vmatpush1.xpose.msra.mxu0 0.0
    %652 = vmatprep.subr.mxu0 0.0
    %653 = vmatpush1.xpose.msra.mxu0 0.0
    %654 = vmatprep.subr.mxu0 0.0
    %655 = vmatpush1.xpose.msra.mxu0 0.0
    %656 = vmatprep.subr.mxu0 0.0
    %657 = vmatpush1.xpose.msra.mxu0 0.0
    %658 = vmatprep.subr.mxu0 0.0
    %659 = vmatpush1.xpose.msra.mxu0 0.0
    %660 = vmatprep.subr.mxu0 0.0
    %661 = vmatpush1.xpose.msra.mxu0 0.0
    %662 = vmatprep.subr.mxu0 0.0
    %663 = vmatpush1.xpose.msra.mxu0 0.0
    %664 = vmatprep.subr.mxu0 0.0
    %665 = vmatpush1.xpose.msra.mxu0 0.0
    %666 = vmatprep.subr.mxu0 0.0
    %667 = vmatpush1.xpose.msra.mxu0 0.0
    %668 = vmatprep.subr.mxu0 0.0
    %669 = vmatpush1.xpose.msra.mxu0 0.0
    %670 = vmatprep.subr.mxu0 0.0
    %671 = vmatpush1.xpose.msra.mxu0 0.0
    %672 = vmatprep.subr.mxu0 0.0
    %673 = vmatpush1.xpose.msra.mxu0 0.0
    %674 = vmatprep.subr.mxu0 0.0
    %675 = vmatpush1.xpose.msra.mxu0 0.0
    %676 = vmatprep.subr.mxu0 0.0
    %677 = vmatpush1.xpose.msra.mxu0 0.0
    %678 = vmatprep.subr.mxu0 0.0
    %679 = vmatpush1.xpose.msra.mxu0 0.0
    %680 = vmatprep.subr.mxu0 0.0
    %681 = vmatpush1.xpose.msra.mxu0 0.0
    %682 = vmatprep.subr.mxu0 0.0
    %683 = vmatpush1.xpose.msra.mxu0 0.0
    %684 = vmatprep.subr.mxu0 0.0
    %685 = vmatpush1.xpose.msra.mxu0 0.0
    %686 = vmatprep.mubr.f32.mxu0 0.0
    %v687 = vand.u32 %v612, 4294901760
    %v688 = vsub.f32 %v612, %v687
    %v689 = vand.u32 %v688, 4294901760
    %v690 = vsub.f32 %v688, %v689
    %v691 = vand.u32 %v690, 4294901760
    %692 = vmatmul.mubr.f32.gmra.mrb[0].mxu0 %v691
    %v693 = vpop.f32.mrb[0].mxu0
    %v694 = vadd.f32 0.0, %v693
    %v695 = vpop.f32.mrb[0].mxu0
    %696 = vmatprep.mubr.f32.mxu0 0.0
    %v697 = vand.u32 %v614, 4294901760
    %v698 = vsub.f32 %v614, %v697
    %v699 = vand.u32 %v698, 4294901760
    %v700 = vsub.f32 %v698, %v699
    %v701 = vand.u32 %v700, 4294901760
    %702 = vmatmul.mubr.f32.gmra.mrb[0].mxu0 %v701
    %v703 = vpop.f32.mrb[0].mxu0
    %v704 = vadd.f32 0.0, %v703
    %v705 = vpop.f32.mrb[0].mxu0
    %706 = vdwg.mxu0
    %707 = vmatprep.subr.mxu0 0.0
    %v708 = vand.u32 %v616, 4294901760
    %v709 = vsub.f32 %v616, %v708
    %v710 = vand.u32 %v709, 4294901760
    %v711 = vsub.f32 %v709, %v710
    %v712 = vand.u32 %v711, 4294901760
    %713 = vmatpush1.xpose.msra.mxu0 %v712
    %714 = vmatprep.subr.mxu0 0.0
    %v715 = vand.u32 %v618, 4294901760
    %v716 = vsub.f32 %v618, %v715
    %v717 = vand.u32 %v716, 4294901760
    %v718 = vsub.f32 %v716, %v717
    %v719 = vand.u32 %v718, 4294901760
    %720 = vmatpush1.xpose.msra.mxu0 %v719
    %721 = vmatprep.subr.mxu0 0.0
    %722 = vmatpush1.xpose.msra.mxu0 0.0
    %723 = vmatprep.subr.mxu0 0.0
    %724 = vmatpush1.xpose.msra.mxu0 0.0
    %725 = vmatprep.subr.mxu0 0.0
    %726 = vmatpush1.xpose.msra.mxu0 0.0
    %727 = vmatprep.subr.mxu0 0.0
    %728 = vmatpush1.xpose.msra.mxu0 0.0
    %729 = vmatprep.subr.mxu0 0.0
    %730 = vmatpush1.xpose.msra.mxu0 0.0
    %731 = vmatprep.subr.mxu0 0.0
    %732 = vmatpush1.xpose.msra.mxu0 0.0
    %733 = vmatprep.subr.mxu0 0.0
    %734 = vmatpush1.xpose.msra.mxu0 0.0
    %735 = vmatprep.subr.mxu0 0.0
    %736 = vmatpush1.xpose.msra.mxu0 0.0
    %737 = vmatprep.subr.mxu0 0.0
    %738 = vmatpush1.xpose.msra.mxu0 0.0
    %739 = vmatprep.subr.mxu0 0.0
    %740 = vmatpush1.xpose.msra.mxu0 0.0
    %741 = vmatprep.subr.mxu0 0.0
    %742 = vmatpush1.xpose.msra.mxu0 0.0
    %743 = vmatprep.subr.mxu0 0.0
    %744 = vmatpush1.xpose.msra.mxu0 0.0
    %745 = vmatprep.subr.mxu0 0.0
    %746 = vmatpush1.xpose.msra.mxu0 0.0
    %747 = vmatprep.subr.mxu0 0.0
    %748 = vmatpush1.xpose.msra.mxu0 0.0
    %749 = vmatprep.subr.mxu0 0.0
    %750 = vmatpush1.xpose.msra.mxu0 0.0
    %751 = vmatprep.subr.mxu0 0.0
    %752 = vmatpush1.xpose.msra.mxu0 0.0
    %753 = vmatprep.subr.mxu0 0.0
    %754 = vmatpush1.xpose.msra.mxu0 0.0
    %755 = vmatprep.subr.mxu0 0.0
    %756 = vmatpush1.xpose.msra.mxu0 0.0
    %757 = vmatprep.subr.mxu0 0.0
    %758 = vmatpush1.xpose.msra.mxu0 0.0
    %759 = vmatprep.subr.mxu0 0.0
    %760 = vmatpush1.xpose.msra.mxu0 0.0
    %761 = vmatprep.subr.mxu0 0.0
    %762 = vmatpush1.xpose.msra.mxu0 0.0
    %763 = vmatprep.subr.mxu0 0.0
    %764 = vmatpush1.xpose.msra.mxu0 0.0
    %765 = vmatprep.subr.mxu0 0.0
    %766 = vmatpush1.xpose.msra.mxu0 0.0
    %767 = vmatprep.subr.mxu0 0.0
    %768 = vmatpush1.xpose.msra.mxu0 0.0
    %769 = vmatprep.subr.mxu0 0.0
    %770 = vmatpush1.xpose.msra.mxu0 0.0
    %771 = vmatprep.subr.mxu0 0.0
    %772 = vmatpush1.xpose.msra.mxu0 0.0
    %773 = vmatprep.subr.mxu0 0.0
    %774 = vmatpush1.xpose.msra.mxu0 0.0
    %775 = vmatprep.subr.mxu0 0.0
    %776 = vmatpush1.xpose.msra.mxu0 0.0
    %777 = vmatprep.subr.mxu0 0.0
    %778 = vmatpush1.xpose.msra.mxu0 0.0
    %779 = vmatprep.subr.mxu0 0.0
    %780 = vmatpush1.xpose.msra.mxu0 0.0
    %781 = vmatprep.mubr.f32.mxu0 0.0
    %v782 = vand.u32 %v612, 4294901760
    %783 = vmatmul.mubr.f32.gmra.mrb[0].mxu0 %v782
    %v784 = vpop.f32.mrb[0].mxu0
    %v785 = vadd.f32 %v694, %v784
    %v786 = vpop.f32.mrb[0].mxu0
    %787 = vmatprep.mubr.f32.mxu0 0.0
    %v788 = vand.u32 %v614, 4294901760
    %789 = vmatmul.mubr.f32.gmra.mrb[0].mxu0 %v788
    %v790 = vpop.f32.mrb[0].mxu0
    %v791 = vadd.f32 %v704, %v790
    %v792 = vpop.f32.mrb[0].mxu0
    %793 = vdwg.mxu0
    %794 = vmatprep.subr.mxu0 0.0
    %v795 = vand.u32 %v616, 4294901760
    %v796 = vsub.f32 %v616, %v795
    %797 = vmatpush1.xpose.msra.mxu0 %v796
    %798 = vmatprep.subr.mxu0 0.0
    %v799 = vand.u32 %v618, 4294901760
    %v800 = vsub.f32 %v618, %v799
    %801 = vmatpush1.xpose.msra.mxu0 %v800
    %802 = vmatprep.subr.mxu0 0.0
    %803 = vmatpush1.xpose.msra.mxu0 0.0
    %804 = vmatprep.subr.mxu0 0.0
    %805 = vmatpush1.xpose.msra.mxu0 0.0
    %806 = vmatprep.subr.mxu0 0.0
    %807 = vmatpush1.xpose.msra.mxu0 0.0
    %808 = vmatprep.subr.mxu0 0.0
    %809 = vmatpush1.xpose.msra.mxu0 0.0
    %810 = vmatprep.subr.mxu0 0.0
    %811 = vmatpush1.xpose.msra.mxu0 0.0
    %812 = vmatprep.subr.mxu0 0.0
    %813 = vmatpush1.xpose.msra.mxu0 0.0
    %814 = vmatprep.subr.mxu0 0.0
    %815 = vmatpush1.xpose.msra.mxu0 0.0
    %816 = vmatprep.subr.mxu0 0.0
    %817 = vmatpush1.xpose.msra.mxu0 0.0
    %818 = vmatprep.subr.mxu0 0.0
    %819 = vmatpush1.xpose.msra.mxu0 0.0
    %820 = vmatprep.subr.mxu0 0.0
    %821 = vmatpush1.xpose.msra.mxu0 0.0
    %822 = vmatprep.subr.mxu0 0.0
    %823 = vmatpush1.xpose.msra.mxu0 0.0
    %824 = vmatprep.subr.mxu0 0.0
    %825 = vmatpush1.xpose.msra.mxu0 0.0
    %826 = vmatprep.subr.mxu0 0.0
    %827 = vmatpush1.xpose.msra.mxu0 0.0
    %828 = vmatprep.subr.mxu0 0.0
    %829 = vmatpush1.xpose.msra.mxu0 0.0
    %830 = vmatprep.subr.mxu0 0.0
    %831 = vmatpush1.xpose.msra.mxu0 0.0
    %832 = vmatprep.subr.mxu0 0.0
    %833 = vmatpush1.xpose.msra.mxu0 0.0
    %834 = vmatprep.subr.mxu0 0.0
    %835 = vmatpush1.xpose.msra.mxu0 0.0
    %836 = vmatprep.subr.mxu0 0.0
    %837 = vmatpush1.xpose.msra.mxu0 0.0
    %838 = vmatprep.subr.mxu0 0.0
    %839 = vmatpush1.xpose.msra.mxu0 0.0
    %840 = vmatprep.subr.mxu0 0.0
    %841 = vmatpush1.xpose.msra.mxu0 0.0
    %842 = vmatprep.subr.mxu0 0.0
    %843 = vmatpush1.xpose.msra.mxu0 0.0
    %844 = vmatprep.subr.mxu0 0.0
    %845 = vmatpush1.xpose.msra.mxu0 0.0
    %846 = vmatprep.subr.mxu0 0.0
    %847 = vmatpush1.xpose.msra.mxu0 0.0
    %848 = vmatprep.subr.mxu0 0.0
    %849 = vmatpush1.xpose.msra.mxu0 0.0
    %850 = vmatprep.subr.mxu0 0.0
    %851 = vmatpush1.xpose.msra.mxu0 0.0
    %852 = vmatprep.subr.mxu0 0.0
    %853 = vmatpush1.xpose.msra.mxu0 0.0
    %854 = vmatprep.subr.mxu0 0.0
    %855 = vmatpush1.xpose.msra.mxu0 0.0
    %856 = vmatprep.subr.mxu0 0.0
    %857 = vmatpush1.xpose.msra.mxu0 0.0
    %858 = vmatprep.subr.mxu0 0.0
    %859 = vmatpush1.xpose.msra.mxu0 0.0
    %860 = vmatprep.subr.mxu0 0.0
    %861 = vmatpush1.xpose.msra.mxu0 0.0
    %862 = vmatprep.mubr.f32.mxu0 0.0
    %v863 = vand.u32 %v612, 4294901760
    %v864 = vsub.f32 %v612, %v863
    %865 = vmatmul.mubr.f32.gmra.mrb[0].mxu0 %v864
    %v866 = vpop.f32.mrb[0].mxu0
    %v867 = vadd.f32 %v785, %v866
    %v868 = vpop.f32.mrb[0].mxu0
    %869 = vmatprep.mubr.f32.mxu0 0.0
    %v870 = vand.u32 %v614, 4294901760
    %v871 = vsub.f32 %v614, %v870
    %872 = vmatmul.mubr.f32.gmra.mrb[0].mxu0 %v871
    %v873 = vpop.f32.mrb[0].mxu0
    %v874 = vadd.f32 %v791, %v873
    %v875 = vpop.f32.mrb[0].mxu0
    %876 = vdwg.mxu0
    %877 = vmatprep.subr.mxu0 0.0
    %v878 = vand.u32 %v616, 4294901760
    %879 = vmatpush1.xpose.msra.mxu0 %v878
    %880 = vmatprep.subr.mxu0 0.0
    %v881 = vand.u32 %v618, 4294901760
    %882 = vmatpush1.xpose.msra.mxu0 %v881
    %883 = vmatprep.subr.mxu0 0.0
    %884 = vmatpush1.xpose.msra.mxu0 0.0
    %885 = vmatprep.subr.mxu0 0.0
    %886 = vmatpush1.xpose.msra.mxu0 0.0
    %887 = vmatprep.subr.mxu0 0.0
    %888 = vmatpush1.xpose.msra.mxu0 0.0
    %889 = vmatprep.subr.mxu0 0.0
    %890 = vmatpush1.xpose.msra.mxu0 0.0
    %891 = vmatprep.subr.mxu0 0.0
    %892 = vmatpush1.xpose.msra.mxu0 0.0
    %893 = vmatprep.subr.mxu0 0.0
    %894 = vmatpush1.xpose.msra.mxu0 0.0
    %895 = vmatprep.subr.mxu0 0.0
    %896 = vmatpush1.xpose.msra.mxu0 0.0
    %897 = vmatprep.subr.mxu0 0.0
    %898 = vmatpush1.xpose.msra.mxu0 0.0
    %899 = vmatprep.subr.mxu0 0.0
    %900 = vmatpush1.xpose.msra.mxu0 0.0
    %901 = vmatprep.subr.mxu0 0.0
    %902 = vmatpush1.xpose.msra.mxu0 0.0
    %903 = vmatprep.subr.mxu0 0.0
    %904 = vmatpush1.xpose.msra.mxu0 0.0
    %905 = vmatprep.subr.mxu0 0.0
    %906 = vmatpush1.xpose.msra.mxu0 0.0
    %907 = vmatprep.subr.mxu0 0.0
    %908 = vmatpush1.xpose.msra.mxu0 0.0
    %909 = vmatprep.subr.mxu0 0.0
    %910 = vmatpush1.xpose.msra.mxu0 0.0
    %911 = vmatprep.subr.mxu0 0.0
    %912 = vmatpush1.xpose.msra.mxu0 0.0
    %913 = vmatprep.subr.mxu0 0.0
    %914 = vmatpush1.xpose.msra.mxu0 0.0
    %915 = vmatprep.subr.mxu0 0.0
    %916 = vmatpush1.xpose.msra.mxu0 0.0
    %917 = vmatprep.subr.mxu0 0.0
    %918 = vmatpush1.xpose.msra.mxu0 0.0
    %919 = vmatprep.subr.mxu0 0.0
    %920 = vmatpush1.xpose.msra.mxu0 0.0
    %921 = vmatprep.subr.mxu0 0.0
    %922 = vmatpush1.xpose.msra.mxu0 0.0
    %923 = vmatprep.subr.mxu0 0.0
    %924 = vmatpush1.xpose.msra.mxu0 0.0
    %925 = vmatprep.subr.mxu0 0.0
    %926 = vmatpush1.xpose.msra.mxu0 0.0
    %927 = vmatprep.subr.mxu0 0.0
    %928 = vmatpush1.xpose.msra.mxu0 0.0
    %929 = vmatprep.subr.mxu0 0.0
    %930 = vmatpush1.xpose.msra.mxu0 0.0
    %931 = vmatprep.subr.mxu0 0.0
    %932 = vmatpush1.xpose.msra.mxu0 0.0
    %933 = vmatprep.subr.mxu0 0.0
    %934 = vmatpush1.xpose.msra.mxu0 0.0
    %935 = vmatprep.subr.mxu0 0.0
    %936 = vmatpush1.xpose.msra.mxu0 0.0
    %937 = vmatprep.subr.mxu0 0.0
    %938 = vmatpush1.xpose.msra.mxu0 0.0
    %939 = vmatprep.subr.mxu0 0.0
    %940 = vmatpush1.xpose.msra.mxu0 0.0
    %941 = vmatprep.subr.mxu0 0.0
    %942 = vmatpush1.xpose.msra.mxu0 0.0
    %943 = vmatprep.mubr.f32.mxu0 0.0
    %v944 = vand.u32 %v612, 4294901760
    %v945 = vsub.f32 %v612, %v944
    %v946 = vand.u32 %v945, 4294901760
    %947 = vmatmul.mubr.f32.gmra.mrb[0].mxu0 %v946
    %v948 = vpop.f32.mrb[0].mxu0
    %v949 = vadd.f32 %v867, %v948
    %v950 = vpop.f32.mrb[0].mxu0
    %951 = vmatprep.mubr.f32.mxu0 0.0
    %v952 = vand.u32 %v614, 4294901760
    %v953 = vsub.f32 %v614, %v952
    %v954 = vand.u32 %v953, 4294901760
    %955 = vmatmul.mubr.f32.gmra.mrb[0].mxu0 %v954
    %v956 = vpop.f32.mrb[0].mxu0
    %v957 = vadd.f32 %v874, %v956
    %v958 = vpop.f32.mrb[0].mxu0
    %959 = vdwg.mxu0
    %960 = vmatprep.subr.mxu0 0.0
    %v961 = vand.u32 %v616, 4294901760
    %v962 = vsub.f32 %v616, %v961
    %v963 = vand.u32 %v962, 4294901760
    %964 = vmatpush1.xpose.msra.mxu0 %v963
    %965 = vmatprep.subr.mxu0 0.0
    %v966 = vand.u32 %v618, 4294901760
    %v967 = vsub.f32 %v618, %v966
    %v968 = vand.u32 %v967, 4294901760
    %969 = vmatpush1.xpose.msra.mxu0 %v968
    %970 = vmatprep.subr.mxu0 0.0
    %971 = vmatpush1.xpose.msra.mxu0 0.0
    %972 = vmatprep.subr.mxu0 0.0
    %973 = vmatpush1.xpose.msra.mxu0 0.0
    %974 = vmatprep.subr.mxu0 0.0
    %975 = vmatpush1.xpose.msra.mxu0 0.0
    %976 = vmatprep.subr.mxu0 0.0
    %977 = vmatpush1.xpose.msra.mxu0 0.0
    %978 = vmatprep.subr.mxu0 0.0
    %979 = vmatpush1.xpose.msra.mxu0 0.0
    %980 = vmatprep.subr.mxu0 0.0
    %981 = vmatpush1.xpose.msra.mxu0 0.0
    %982 = vmatprep.subr.mxu0 0.0
    %983 = vmatpush1.xpose.msra.mxu0 0.0
    %984 = vmatprep.subr.mxu0 0.0
    %985 = vmatpush1.xpose.msra.mxu0 0.0
    %986 = vmatprep.subr.mxu0 0.0
    %987 = vmatpush1.xpose.msra.mxu0 0.0
    %988 = vmatprep.subr.mxu0 0.0
    %989 = vmatpush1.xpose.msra.mxu0 0.0
    %990 = vmatprep.subr.mxu0 0.0
    %991 = vmatpush1.xpose.msra.mxu0 0.0
    %992 = vmatprep.subr.mxu0 0.0
    %993 = vmatpush1.xpose.msra.mxu0 0.0
    %994 = vmatprep.subr.mxu0 0.0
    %995 = vmatpush1.xpose.msra.mxu0 0.0
    %996 = vmatprep.subr.mxu0 0.0
    %997 = vmatpush1.xpose.msra.mxu0 0.0
    %998 = vmatprep.subr.mxu0 0.0
    %999 = vmatpush1.xpose.msra.mxu0 0.0
    %1000 = vmatprep.subr.mxu0 0.0
    %1001 = vmatpush1.xpose.msra.mxu0 0.0
    %1002 = vmatprep.subr.mxu0 0.0
    %1003 = vmatpush1.xpose.msra.mxu0 0.0
    %1004 = vmatprep.subr.mxu0 0.0
    %1005 = vmatpush1.xpose.msra.mxu0 0.0
    %1006 = vmatprep.subr.mxu0 0.0
    %1007 = vmatpush1.xpose.msra.mxu0 0.0
    %1008 = vmatprep.subr.mxu0 0.0
    %1009 = vmatpush1.xpose.msra.mxu0 0.0
    %1010 = vmatprep.subr.mxu0 0.0
    %1011 = vmatpush1.xpose.msra.mxu0 0.0
    %1012 = vmatprep.subr.mxu0 0.0
    %1013 = vmatpush1.xpose.msra.mxu0 0.0
    %1014 = vmatprep.subr.mxu0 0.0
    %1015 = vmatpush1.xpose.msra.mxu0 0.0
    %1016 = vmatprep.subr.mxu0 0.0
    %1017 = vmatpush1.xpose.msra.mxu0 0.0
    %1018 = vmatprep.subr.mxu0 0.0
    %1019 = vmatpush1.xpose.msra.mxu0 0.0
    %1020 = vmatprep.subr.mxu0 0.0
    %1021 = vmatpush1.xpose.msra.mxu0 0.0
    %1022 = vmatprep.subr.mxu0 0.0
    %1023 = vmatpush1.xpose.msra.mxu0 0.0
    %1024 = vmatprep.subr.mxu0 0.0
    %1025 = vmatpush1.xpose.msra.mxu0 0.0
    %1026 = vmatprep.subr.mxu0 0.0
    %1027 = vmatpush1.xpose.msra.mxu0 0.0
    %1028 = vmatprep.subr.mxu0 0.0
    %1029 = vmatpush1.xpose.msra.mxu0 0.0
    %1030 = vmatprep.mubr.f32.mxu0 0.0
    %v1031 = vand.u32 %v612, 4294901760
    %1032 = vmatmul.mubr.f32.gmra.mrb[0].mxu0 %v1031
    %v1033 = vpop.f32.mrb[0].mxu0
    %v1034 = vadd.f32 %v949, %v1033
    %v1035 = vpop.f32.mrb[0].mxu0
    %1036 = vmatprep.mubr.f32.mxu0 0.0
    %v1037 = vand.u32 %v614, 4294901760
    %1038 = vmatmul.mubr.f32.gmra.mrb[0].mxu0 %v1037
    %v1039 = vpop.f32.mrb[0].mxu0
    %v1040 = vadd.f32 %v957, %v1039
    %v1041 = vpop.f32.mrb[0].mxu0
    %1042 = vdwg.mxu0
    %1043 = vmatprep.subr.mxu0 0.0
    %v1044 = vand.u32 %v616, 4294901760
    %1045 = vmatpush1.xpose.msra.mxu0 %v1044
    %1046 = vmatprep.subr.mxu0 0.0
    %v1047 = vand.u32 %v618, 4294901760
    %1048 = vmatpush1.xpose.msra.mxu0 %v1047
    %1049 = vmatprep.subr.mxu0 0.0
    %1050 = vmatpush1.xpose.msra.mxu0 0.0
    %1051 = vmatprep.subr.mxu0 0.0
    %1052 = vmatpush1.xpose.msra.mxu0 0.0
    %1053 = vmatprep.subr.mxu0 0.0
    %1054 = vmatpush1.xpose.msra.mxu0 0.0
    %1055 = vmatprep.subr.mxu0 0.0
    %1056 = vmatpush1.xpose.msra.mxu0 0.0
    %1057 = vmatprep.subr.mxu0 0.0
    %1058 = vmatpush1.xpose.msra.mxu0 0.0
    %1059 = vmatprep.subr.mxu0 0.0
    %1060 = vmatpush1.xpose.msra.mxu0 0.0
    %1061 = vmatprep.subr.mxu0 0.0
    %1062 = vmatpush1.xpose.msra.mxu0 0.0
    %1063 = vmatprep.subr.mxu0 0.0
    %1064 = vmatpush1.xpose.msra.mxu0 0.0
    %1065 = vmatprep.subr.mxu0 0.0
    %1066 = vmatpush1.xpose.msra.mxu0 0.0
    %1067 = vmatprep.subr.mxu0 0.0
    %1068 = vmatpush1.xpose.msra.mxu0 0.0
    %1069 = vmatprep.subr.mxu0 0.0
    %1070 = vmatpush1.xpose.msra.mxu0 0.0
    %1071 = vmatprep.subr.mxu0 0.0
    %1072 = vmatpush1.xpose.msra.mxu0 0.0
    %1073 = vmatprep.subr.mxu0 0.0
    %1074 = vmatpush1.xpose.msra.mxu0 0.0
    %1075 = vmatprep.subr.mxu0 0.0
    %1076 = vmatpush1.xpose.msra.mxu0 0.0
    %1077 = vmatprep.subr.mxu0 0.0
    %1078 = vmatpush1.xpose.msra.mxu0 0.0
    %1079 = vmatprep.subr.mxu0 0.0
    %1080 = vmatpush1.xpose.msra.mxu0 0.0
    %1081 = vmatprep.subr.mxu0 0.0
    %1082 = vmatpush1.xpose.msra.mxu0 0.0
    %1083 = vmatprep.subr.mxu0 0.0
    %1084 = vmatpush1.xpose.msra.mxu0 0.0
    %1085 = vmatprep.subr.mxu0 0.0
    %1086 = vmatpush1.xpose.msra.mxu0 0.0
    %1087 = vmatprep.subr.mxu0 0.0
    %1088 = vmatpush1.xpose.msra.mxu0 0.0
    %1089 = vmatprep.subr.mxu0 0.0
    %1090 = vmatpush1.xpose.msra.mxu0 0.0
    %1091 = vmatprep.subr.mxu0 0.0
    %1092 = vmatpush1.xpose.msra.mxu0 0.0
    %1093 = vmatprep.subr.mxu0 0.0
    %1094 = vmatpush1.xpose.msra.mxu0 0.0
    %1095 = vmatprep.subr.mxu0 0.0
    %1096 = vmatpush1.xpose.msra.mxu0 0.0
    %1097 = vmatprep.subr.mxu0 0.0
    %1098 = vmatpush1.xpose.msra.mxu0 0.0
    %1099 = vmatprep.subr.mxu0 0.0
    %1100 = vmatpush1.xpose.msra.mxu0 0.0
    %1101 = vmatprep.subr.mxu0 0.0
    %1102 = vmatpush1.xpose.msra.mxu0 0.0
    %1103 = vmatprep.subr.mxu0 0.0
    %1104 = vmatpush1.xpose.msra.mxu0 0.0
    %1105 = vmatprep.subr.mxu0 0.0
    %1106 = vmatpush1.xpose.msra.mxu0 0.0
    %1107 = vmatprep.subr.mxu0 0.0
    %1108 = vmatpush1.xpose.msra.mxu0 0.0
    %1109 = vmatprep.mubr.f32.mxu0 0.0
    %v1110 = vand.u32 %v612, 4294901760
    %1111 = vmatmul.mubr.f32.gmra.mrb[0].mxu0 %v1110
    %v1112 = vpop.f32.mrb[0].mxu0
    %v1113 = vadd.f32 %v1034, %v1112
    %v1114 = vpop.f32.mrb[0].mxu0
    %1115 = vmatprep.mubr.f32.mxu0 0.0
    %v1116 = vand.u32 %v614, 4294901760
    %1117 = vmatmul.mubr.f32.gmra.mrb[0].mxu0 %v1116
    %v1118 = vpop.f32.mrb[0].mxu0
    %v1119 = vadd.f32 %v1040, %v1118
    %v1120 = vpop.f32.mrb[0].mxu0
    %1121 = vdwg.mxu0
    %v1122 = vmul.f32 %v1113, 0.17677669
    %v1123 = vmul.f32 %v1119, 0.17677669
    %v1124 = vadd.f32 %v1122, %v61
    %v1125 = vadd.f32 %v1123, %v62
    %vm1126 = vcmask 130048
    %v1127 = vsel %vm1126, %v1124, -inf
    %1128 = vmax.xlane.f32.xlu0 %v1127
    %v1129 = vpop.xlane.xlu0 %1128
    %v1130 = vsel %vm1126, %v1125, -inf
    %1131 = vmax.xlane.f32.xlu0 %v1130
    %v1132 = vpop.xlane.xlu0 %1131
    %v1133 = vsub.f32 %v1124, %v1129
    %v1134 = vsub.f32 %v1125, %v1132
    %v1135 = vmul.f32 %v1133, 1.442695
    %v1136 = vpow.pop %v1135
    %v1137 = vmul.f32 %v1134, 1.442695
    %v1138 = vpow.pop %v1137
    %v1139 = vsel %vm1126, %v1136, 0.0
    %1140 = vadd.xlane.f32.xlu0 %v1139
    %v1141 = vpop.xlane.xlu0 %1140
    %v1142 = vsel %vm1126, %v1138, 0.0
    %1143 = vadd.xlane.f32.xlu0 %v1142
    %v1144 = vpop.xlane.xlu0 %1143
    %v1145 = vrcp.pop %v1141
    %v1146 = vmul.f32 %v1136, %v1145
    %v1147 = vrcp.pop %v1144
    %v1148 = vmul.f32 %v1138, %v1147
    %1149 = vrot.lane.b32.xlu0 %v597, 64
    %v1150 = vpop.permute.xlu0 %1149
    %1151 = vrot.lane.b32.xlu0 %v603, 64
    %v1152 = vpop.permute.xlu0 %1151
    %v1156 = vsel %vm1126, %v1146, 0
    %v1159 = vsel %vm1126, %v1148, 0
    %1161 = vmatprep.subr.mxu0 0.0
    %v1162 = vand.u32 %v1150, 4294901760
    %1163 = vmatpush1.msra.mxu0 %v1162
    %1164 = vmatprep.subr.mxu0 0.0
    %v1165 = vand.u32 %v1152, 4294901760
    %1166 = vmatpush1.msra.mxu0 %v1165
    %1167 = vmatprep.subr.mxu0 0.0
    %1168 = vmatpush1.msra.mxu0 0.0
    %1169 = vmatprep.subr.mxu0 0.0
    %1170 = vmatpush1.msra.mxu0 0.0
    %1171 = vmatprep.subr.mxu0 0.0
    %1172 = vmatpush1.msra.mxu0 0.0
    %1173 = vmatprep.subr.mxu0 0.0
    %1174 = vmatpush1.msra.mxu0 0.0
    %1175 = vmatprep.subr.mxu0 0.0
    %1176 = vmatpush1.msra.mxu0 0.0
    %1177 = vmatprep.subr.mxu0 0.0
    %1178 = vmatpush1.msra.mxu0 0.0
    %1179 = vmatprep.subr.mxu0 0.0
    %1180 = vmatpush1.msra.mxu0 0.0
    %1181 = vmatprep.subr.mxu0 0.0
    %1182 = vmatpush1.msra.mxu0 0.0
    %1183 = vmatprep.subr.mxu0 0.0
    %1184 = vmatpush1.msra.mxu0 0.0
    %1185 = vmatprep.subr.mxu0 0.0
    %1186 = vmatpush1.msra.mxu0 0.0
    %1187 = vmatprep.subr.mxu0 0.0
    %1188 = vmatpush1.msra.mxu0 0.0
    %1189 = vmatprep.subr.mxu0 0.0
    %1190 = vmatpush1.msra.mxu0 0.0
    %1191 = vmatprep.subr.mxu0 0.0
    %1192 = vmatpush1.msra.mxu0 0.0
    %1193 = vmatprep.subr.mxu0 0.0
    %1194 = vmatpush1.msra.mxu0 0.0
    %1195 = vmatprep.subr.mxu0 0.0
    %1196 = vmatpush1.msra.mxu0 0.0
    %1197 = vmatprep.subr.mxu0 0.0
    %1198 = vmatpush1.msra.mxu0 0.0
    %1199 = vmatprep.subr.mxu0 0.0
    %1200 = vmatpush1.msra.mxu0 0.0
    %1201 = vmatprep.subr.mxu0 0.0
    %1202 = vmatpush1.msra.mxu0 0.0
    %1203 = vmatprep.subr.mxu0 0.0
    %1204 = vmatpush1.msra.mxu0 0.0
    %1205 = vmatprep.subr.mxu0 0.0
    %1206 = vmatpush1.msra.mxu0 0.0
    %1207 = vmatprep.subr.mxu0 0.0
    %1208 = vmatpush1.msra.mxu0 0.0
    %1209 = vmatprep.subr.mxu0 0.0
    %1210 = vmatpush1.msra.mxu0 0.0
    %1211 = vmatprep.subr.mxu0 0.0
    %1212 = vmatpush1.msra.mxu0 0.0
    %1213 = vmatprep.subr.mxu0 0.0
    %1214 = vmatpush1.msra.mxu0 0.0
    %1215 = vmatprep.subr.mxu0 0.0
    %1216 = vmatpush1.msra.mxu0 0.0
    %1217 = vmatprep.subr.mxu0 0.0
    %1218 = vmatpush1.msra.mxu0 0.0
    %1219 = vmatprep.subr.mxu0 0.0
    %1220 = vmatpush1.msra.mxu0 0.0
    %1221 = vmatprep.subr.mxu0 0.0
    %1222 = vmatpush1.msra.mxu0 0.0
    %1223 = vmatprep.subr.mxu0 0.0
    %1224 = vmatpush1.msra.mxu0 0.0
    %1225 = vmatprep.subr.mxu0 0.0
    %1226 = vmatpush1.msra.mxu0 0.0
    %1227 = vmatprep.mubr.f32.mxu0 0.0
    %v1228 = vand.u32 %v1156, 4294901760
    %v1229 = vsub.f32 %v1156, %v1228
    %v1230 = vand.u32 %v1229, 4294901760
    %v1231 = vsub.f32 %v1229, %v1230
    %v1232 = vand.u32 %v1231, 4294901760
    %1233 = vmatmul.mubr.f32.gmra.mrb[0].mxu0 %v1232
    %v1234 = vpop.f32.mrb[0].mxu0
    %v1235 = vadd.f32 0.0, %v1234
    %v1236 = vpop.f32.mrb[0].mxu0
    %1237 = vmatprep.mubr.f32.mxu0 0.0
    %v1238 = vand.u32 %v1159, 4294901760
    %v1239 = vsub.f32 %v1159, %v1238
    %v1240 = vand.u32 %v1239, 4294901760
    %v1241 = vsub.f32 %v1239, %v1240
    %v1242 = vand.u32 %v1241, 4294901760
    %1243 = vmatmul.mubr.f32.gmra.mrb[0].mxu0 %v1242
    %v1244 = vpop.f32.mrb[0].mxu0
    %v1245 = vadd.f32 0.0, %v1244
    %v1246 = vpop.f32.mrb[0].mxu0
    %1247 = vdwg.mxu0
    %1248 = vmatprep.subr.mxu0 0.0
    %v1249 = vand.u32 %v1150, 4294901760
    %v1250 = vsub.f32 %v1150, %v1249
    %v1251 = vand.u32 %v1250, 4294901760
    %v1252 = vsub.f32 %v1250, %v1251
    %v1253 = vand.u32 %v1252, 4294901760
    %1254 = vmatpush1.msra.mxu0 %v1253
    %1255 = vmatprep.subr.mxu0 0.0
    %v1256 = vand.u32 %v1152, 4294901760
    %v1257 = vsub.f32 %v1152, %v1256
    %v1258 = vand.u32 %v1257, 4294901760
    %v1259 = vsub.f32 %v1257, %v1258
    %v1260 = vand.u32 %v1259, 4294901760
    %1261 = vmatpush1.msra.mxu0 %v1260
    %1262 = vmatprep.subr.mxu0 0.0
    %1263 = vmatpush1.msra.mxu0 0.0
    %1264 = vmatprep.subr.mxu0 0.0
    %1265 = vmatpush1.msra.mxu0 0.0
    %1266 = vmatprep.subr.mxu0 0.0
    %1267 = vmatpush1.msra.mxu0 0.0
    %1268 = vmatprep.subr.mxu0 0.0
    %1269 = vmatpush1.msra.mxu0 0.0
    %1270 = vmatprep.subr.mxu0 0.0
    %1271 = vmatpush1.msra.mxu0 0.0
    %1272 = vmatprep.subr.mxu0 0.0
    %1273 = vmatpush1.msra.mxu0 0.0
    %1274 = vmatprep.subr.mxu0 0.0
    %1275 = vmatpush1.msra.mxu0 0.0
    %1276 = vmatprep.subr.mxu0 0.0
    %1277 = vmatpush1.msra.mxu0 0.0
    %1278 = vmatprep.subr.mxu0 0.0
    %1279 = vmatpush1.msra.mxu0 0.0
    %1280 = vmatprep.subr.mxu0 0.0
    %1281 = vmatpush1.msra.mxu0 0.0
    %1282 = vmatprep.subr.mxu0 0.0
    %1283 = vmatpush1.msra.mxu0 0.0
    %1284 = vmatprep.subr.mxu0 0.0
    %1285 = vmatpush1.msra.mxu0 0.0
    %1286 = vmatprep.subr.mxu0 0.0
    %1287 = vmatpush1.msra.mxu0 0.0
    %1288 = vmatprep.subr.mxu0 0.0
    %1289 = vmatpush1.msra.mxu0 0.0
    %1290 = vmatprep.subr.mxu0 0.0
    %1291 = vmatpush1.msra.mxu0 0.0
    %1292 = vmatprep.subr.mxu0 0.0
    %1293 = vmatpush1.msra.mxu0 0.0
    %1294 = vmatprep.subr.mxu0 0.0
    %1295 = vmatpush1.msra.mxu0 0.0
    %1296 = vmatprep.subr.mxu0 0.0
    %1297 = vmatpush1.msra.mxu0 0.0
    %1298 = vmatprep.subr.mxu0 0.0
    %1299 = vmatpush1.msra.mxu0 0.0
    %1300 = vmatprep.subr.mxu0 0.0
    %1301 = vmatpush1.msra.mxu0 0.0
    %1302 = vmatprep.subr.mxu0 0.0
    %1303 = vmatpush1.msra.mxu0 0.0
    %1304 = vmatprep.subr.mxu0 0.0
    %1305 = vmatpush1.msra.mxu0 0.0
    %1306 = vmatprep.subr.mxu0 0.0
    %1307 = vmatpush1.msra.mxu0 0.0
    %1308 = vmatprep.subr.mxu0 0.0
    %1309 = vmatpush1.msra.mxu0 0.0
    %1310 = vmatprep.subr.mxu0 0.0
    %1311 = vmatpush1.msra.mxu0 0.0
    %1312 = vmatprep.subr.mxu0 0.0
    %1313 = vmatpush1.msra.mxu0 0.0
    %1314 = vmatprep.subr.mxu0 0.0
    %1315 = vmatpush1.msra.mxu0 0.0
    %1316 = vmatprep.subr.mxu0 0.0
    %1317 = vmatpush1.msra.mxu0 0.0
    %1318 = vmatprep.subr.mxu0 0.0
    %1319 = vmatpush1.msra.mxu0 0.0
    %1320 = vmatprep.subr.mxu0 0.0
    %1321 = vmatpush1.msra.mxu0 0.0
    %1322 = vmatprep.mubr.f32.mxu0 0.0
    %v1323 = vand.u32 %v1156, 4294901760
    %1324 = vmatmul.mubr.f32.gmra.mrb[0].mxu0 %v1323
    %v1325 = vpop.f32.mrb[0].mxu0
    %v1326 = vadd.f32 %v1235, %v1325
    %v1327 = vpop.f32.mrb[0].mxu0
    %1328 = vmatprep.mubr.f32.mxu0 0.0
    %v1329 = vand.u32 %v1159, 4294901760
    %1330 = vmatmul.mubr.f32.gmra.mrb[0].mxu0 %v1329
    %v1331 = vpop.f32.mrb[0].mxu0
    %v1332 = vadd.f32 %v1245, %v1331
    %v1333 = vpop.f32.mrb[0].mxu0
    %1334 = vdwg.mxu0
    %1335 = vmatprep.subr.mxu0 0.0
    %v1336 = vand.u32 %v1150, 4294901760
    %v1337 = vsub.f32 %v1150, %v1336
    %1338 = vmatpush1.msra.mxu0 %v1337
    %1339 = vmatprep.subr.mxu0 0.0
    %v1340 = vand.u32 %v1152, 4294901760
    %v1341 = vsub.f32 %v1152, %v1340
    %1342 = vmatpush1.msra.mxu0 %v1341
    %1343 = vmatprep.subr.mxu0 0.0
    %1344 = vmatpush1.msra.mxu0 0.0
    %1345 = vmatprep.subr.mxu0 0.0
    %1346 = vmatpush1.msra.mxu0 0.0
    %1347 = vmatprep.subr.mxu0 0.0
    %1348 = vmatpush1.msra.mxu0 0.0
    %1349 = vmatprep.subr.mxu0 0.0
    %1350 = vmatpush1.msra.mxu0 0.0
    %1351 = vmatprep.subr.mxu0 0.0
    %1352 = vmatpush1.msra.mxu0 0.0
    %1353 = vmatprep.subr.mxu0 0.0
    %1354 = vmatpush1.msra.mxu0 0.0
    %1355 = vmatprep.subr.mxu0 0.0
    %1356 = vmatpush1.msra.mxu0 0.0
    %1357 = vmatprep.subr.mxu0 0.0
    %1358 = vmatpush1.msra.mxu0 0.0
    %1359 = vmatprep.subr.mxu0 0.0
    %1360 = vmatpush1.msra.mxu0 0.0
    %1361 = vmatprep.subr.mxu0 0.0
    %1362 = vmatpush1.msra.mxu0 0.0
    %1363 = vmatprep.subr.mxu0 0.0
    %1364 = vmatpush1.msra.mxu0 0.0
    %1365 = vmatprep.subr.mxu0 0.0
    %1366 = vmatpush1.msra.mxu0 0.0
    %1367 = vmatprep.subr.mxu0 0.0
    %1368 = vmatpush1.msra.mxu0 0.0
    %1369 = vmatprep.subr.mxu0 0.0
    %1370 = vmatpush1.msra.mxu0 0.0
    %1371 = vmatprep.subr.mxu0 0.0
    %1372 = vmatpush1.msra.mxu0 0.0
    %1373 = vmatprep.subr.mxu0 0.0
    %1374 = vmatpush1.msra.mxu0 0.0
    %1375 = vmatprep.subr.mxu0 0.0
    %1376 = vmatpush1.msra.mxu0 0.0
    %1377 = vmatprep.subr.mxu0 0.0
    %1378 = vmatpush1.msra.mxu0 0.0
    %1379 = vmatprep.subr.mxu0 0.0
    %1380 = vmatpush1.msra.mxu0 0.0
    %1381 = vmatprep.subr.mxu0 0.0
    %1382 = vmatpush1.msra.mxu0 0.0
    %1383 = vmatprep.subr.mxu0 0.0
    %1384 = vmatpush1.msra.mxu0 0.0
    %1385 = vmatprep.subr.mxu0 0.0
    %1386 = vmatpush1.msra.mxu0 0.0
    %1387 = vmatprep.subr.mxu0 0.0
    %1388 = vmatpush1.msra.mxu0 0.0
    %1389 = vmatprep.subr.mxu0 0.0
    %1390 = vmatpush1.msra.mxu0 0.0
    %1391 = vmatprep.subr.mxu0 0.0
    %1392 = vmatpush1.msra.mxu0 0.0
    %1393 = vmatprep.subr.mxu0 0.0
    %1394 = vmatpush1.msra.mxu0 0.0
    %1395 = vmatprep.subr.mxu0 0.0
    %1396 = vmatpush1.msra.mxu0 0.0
    %1397 = vmatprep.subr.mxu0 0.0
    %1398 = vmatpush1.msra.mxu0 0.0
    %1399 = vmatprep.subr.mxu0 0.0
    %1400 = vmatpush1.msra.mxu0 0.0
    %1401 = vmatprep.subr.mxu0 0.0
    %1402 = vmatpush1.msra.mxu0 0.0
    %1403 = vmatprep.mubr.f32.mxu0 0.0
    %v1404 = vand.u32 %v1156, 4294901760
    %v1405 = vsub.f32 %v1156, %v1404
    %1406 = vmatmul.mubr.f32.gmra.mrb[0].mxu0 %v1405
    %v1407 = vpop.f32.mrb[0].mxu0
    %v1408 = vadd.f32 %v1326, %v1407
    %v1409 = vpop.f32.mrb[0].mxu0
    %1410 = vmatprep.mubr.f32.mxu0 0.0
    %v1411 = vand.u32 %v1159, 4294901760
    %v1412 = vsub.f32 %v1159, %v1411
    %1413 = vmatmul.mubr.f32.gmra.mrb[0].mxu0 %v1412
    %v1414 = vpop.f32.mrb[0].mxu0
    %v1415 = vadd.f32 %v1332, %v1414
    %v1416 = vpop.f32.mrb[0].mxu0
    %1417 = vdwg.mxu0
    %1418 = vmatprep.subr.mxu0 0.0
    %v1419 = vand.u32 %v1150, 4294901760
    %1420 = vmatpush1.msra.mxu0 %v1419
    %1421 = vmatprep.subr.mxu0 0.0
    %v1422 = vand.u32 %v1152, 4294901760
    %1423 = vmatpush1.msra.mxu0 %v1422
    %1424 = vmatprep.subr.mxu0 0.0
    %1425 = vmatpush1.msra.mxu0 0.0
    %1426 = vmatprep.subr.mxu0 0.0
    %1427 = vmatpush1.msra.mxu0 0.0
    %1428 = vmatprep.subr.mxu0 0.0
    %1429 = vmatpush1.msra.mxu0 0.0
    %1430 = vmatprep.subr.mxu0 0.0
    %1431 = vmatpush1.msra.mxu0 0.0
    %1432 = vmatprep.subr.mxu0 0.0
    %1433 = vmatpush1.msra.mxu0 0.0
    %1434 = vmatprep.subr.mxu0 0.0
    %1435 = vmatpush1.msra.mxu0 0.0
    %1436 = vmatprep.subr.mxu0 0.0
    %1437 = vmatpush1.msra.mxu0 0.0
    %1438 = vmatprep.subr.mxu0 0.0
    %1439 = vmatpush1.msra.mxu0 0.0
    %1440 = vmatprep.subr.mxu0 0.0
    %1441 = vmatpush1.msra.mxu0 0.0
    %1442 = vmatprep.subr.mxu0 0.0
    %1443 = vmatpush1.msra.mxu0 0.0
    %1444 = vmatprep.subr.mxu0 0.0
    %1445 = vmatpush1.msra.mxu0 0.0
    %1446 = vmatprep.subr.mxu0 0.0
    %1447 = vmatpush1.msra.mxu0 0.0
    %1448 = vmatprep.subr.mxu0 0.0
    %1449 = vmatpush1.msra.mxu0 0.0
    %1450 = vmatprep.subr.mxu0 0.0
    %1451 = vmatpush1.msra.mxu0 0.0
    %1452 = vmatprep.subr.mxu0 0.0
    %1453 = vmatpush1.msra.mxu0 0.0
    %1454 = vmatprep.subr.mxu0 0.0
    %1455 = vmatpush1.msra.mxu0 0.0
    %1456 = vmatprep.subr.mxu0 0.0
    %1457 = vmatpush1.msra.mxu0 0.0
    %1458 = vmatprep.subr.mxu0 0.0
    %1459 = vmatpush1.msra.mxu0 0.0
    %1460 = vmatprep.subr.mxu0 0.0
    %1461 = vmatpush1.msra.mxu0 0.0
    %1462 = vmatprep.subr.mxu0 0.0
    %1463 = vmatpush1.msra.mxu0 0.0
    %1464 = vmatprep.subr.mxu0 0.0
    %1465 = vmatpush1.msra.mxu0 0.0
    %1466 = vmatprep.subr.mxu0 0.0
    %1467 = vmatpush1.msra.mxu0 0.0
    %1468 = vmatprep.subr.mxu0 0.0
    %1469 = vmatpush1.msra.mxu0 0.0
    %1470 = vmatprep.subr.mxu0 0.0
    %1471 = vmatpush1.msra.mxu0 0.0
    %1472 = vmatprep.subr.mxu0 0.0
    %1473 = vmatpush1.msra.mxu0 0.0
    %1474 = vmatprep.subr.mxu0 0.0
    %1475 = vmatpush1.msra.mxu0 0.0
    %1476 = vmatprep.subr.mxu0 0.0
    %1477 = vmatpush1.msra.mxu0 0.0
    %1478 = vmatprep.subr.mxu0 0.0
    %1479 = vmatpush1.msra.mxu0 0.0
    %1480 = vmatprep.subr.mxu0 0.0
    %1481 = vmatpush1.msra.mxu0 0.0
    %1482 = vmatprep.subr.mxu0 0.0
    %1483 = vmatpush1.msra.mxu0 0.0
    %1484 = vmatprep.mubr.f32.mxu0 0.0
    %v1485 = vand.u32 %v1156, 4294901760
    %v1486 = vsub.f32 %v1156, %v1485
    %v1487 = vand.u32 %v1486, 4294901760
    %1488 = vmatmul.mubr.f32.gmra.mrb[0].mxu0 %v1487
    %v1489 = vpop.f32.mrb[0].mxu0
    %v1490 = vadd.f32 %v1408, %v1489
    %v1491 = vpop.f32.mrb[0].mxu0
    %1492 = vmatprep.mubr.f32.mxu0 0.0
    %v1493 = vand.u32 %v1159, 4294901760
    %v1494 = vsub.f32 %v1159, %v1493
    %v1495 = vand.u32 %v1494, 4294901760
    %1496 = vmatmul.mubr.f32.gmra.mrb[0].mxu0 %v1495
    %v1497 = vpop.f32.mrb[0].mxu0
    %v1498 = vadd.f32 %v1415, %v1497
    %v1499 = vpop.f32.mrb[0].mxu0
    %1500 = vdwg.mxu0
    %1501 = vmatprep.subr.mxu0 0.0
    %v1502 = vand.u32 %v1150, 4294901760
    %v1503 = vsub.f32 %v1150, %v1502
    %v1504 = vand.u32 %v1503, 4294901760
    %1505 = vmatpush1.msra.mxu0 %v1504
    %1506 = vmatprep.subr.mxu0 0.0
    %v1507 = vand.u32 %v1152, 4294901760
    %v1508 = vsub.f32 %v1152, %v1507
    %v1509 = vand.u32 %v1508, 4294901760
    %1510 = vmatpush1.msra.mxu0 %v1509
    %1511 = vmatprep.subr.mxu0 0.0
    %1512 = vmatpush1.msra.mxu0 0.0
    %1513 = vmatprep.subr.mxu0 0.0
    %1514 = vmatpush1.msra.mxu0 0.0
    %1515 = vmatprep.subr.mxu0 0.0
    %1516 = vmatpush1.msra.mxu0 0.0
    %1517 = vmatprep.subr.mxu0 0.0
    %1518 = vmatpush1.msra.mxu0 0.0
    %1519 = vmatprep.subr.mxu0 0.0
    %1520 = vmatpush1.msra.mxu0 0.0
    %1521 = vmatprep.subr.mxu0 0.0
    %1522 = vmatpush1.msra.mxu0 0.0
    %1523 = vmatprep.subr.mxu0 0.0
    %1524 = vmatpush1.msra.mxu0 0.0
    %1525 = vmatprep.subr.mxu0 0.0
    %1526 = vmatpush1.msra.mxu0 0.0
    %1527 = vmatprep.subr.mxu0 0.0
    %1528 = vmatpush1.msra.mxu0 0.0
    %1529 = vmatprep.subr.mxu0 0.0
    %1530 = vmatpush1.msra.mxu0 0.0
    %1531 = vmatprep.subr.mxu0 0.0
    %1532 = vmatpush1.msra.mxu0 0.0
    %1533 = vmatprep.subr.mxu0 0.0
    %1534 = vmatpush1.msra.mxu0 0.0
    %1535 = vmatprep.subr.mxu0 0.0
    %1536 = vmatpush1.msra.mxu0 0.0
    %1537 = vmatprep.subr.mxu0 0.0
    %1538 = vmatpush1.msra.mxu0 0.0
    %1539 = vmatprep.subr.mxu0 0.0
    %1540 = vmatpush1.msra.mxu0 0.0
    %1541 = vmatprep.subr.mxu0 0.0
    %1542 = vmatpush1.msra.mxu0 0.0
    %1543 = vmatprep.subr.mxu0 0.0
    %1544 = vmatpush1.msra.mxu0 0.0
    %1545 = vmatprep.subr.mxu0 0.0
    %1546 = vmatpush1.msra.mxu0 0.0
    %1547 = vmatprep.subr.mxu0 0.0
    %1548 = vmatpush1.msra.mxu0 0.0
    %1549 = vmatprep.subr.mxu0 0.0
    %1550 = vmatpush1.msra.mxu0 0.0
    %1551 = vmatprep.subr.mxu0 0.0
    %1552 = vmatpush1.msra.mxu0 0.0
    %1553 = vmatprep.subr.mxu0 0.0
    %1554 = vmatpush1.msra.mxu0 0.0
    %1555 = vmatprep.subr.mxu0 0.0
    %1556 = vmatpush1.msra.mxu0 0.0
    %1557 = vmatprep.subr.mxu0 0.0
    %1558 = vmatpush1.msra.mxu0 0.0
    %1559 = vmatprep.subr.mxu0 0.0
    %1560 = vmatpush1.msra.mxu0 0.0
    %1561 = vmatprep.subr.mxu0 0.0
    %1562 = vmatpush1.msra.mxu0 0.0
    %1563 = vmatprep.subr.mxu0 0.0
    %1564 = vmatpush1.msra.mxu0 0.0
    %1565 = vmatprep.subr.mxu0 0.0
    %1566 = vmatpush1.msra.mxu0 0.0
    %1567 = vmatprep.subr.mxu0 0.0
    %1568 = vmatpush1.msra.mxu0 0.0
    %1569 = vmatprep.subr.mxu0 0.0
    %1570 = vmatpush1.msra.mxu0 0.0
    %1571 = vmatprep.mubr.f32.mxu0 0.0
    %v1572 = vand.u32 %v1156, 4294901760
    %1573 = vmatmul.mubr.f32.gmra.mrb[0].mxu0 %v1572
    %v1574 = vpop.f32.mrb[0].mxu0
    %v1575 = vadd.f32 %v1490, %v1574
    %v1576 = vpop.f32.mrb[0].mxu0
    %1577 = vmatprep.mubr.f32.mxu0 0.0
    %v1578 = vand.u32 %v1159, 4294901760
    %1579 = vmatmul.mubr.f32.gmra.mrb[0].mxu0 %v1578
    %v1580 = vpop.f32.mrb[0].mxu0
    %v1581 = vadd.f32 %v1498, %v1580
    %v1582 = vpop.f32.mrb[0].mxu0
    %1583 = vdwg.mxu0
    %1584 = vmatprep.subr.mxu0 0.0
    %v1585 = vand.u32 %v1150, 4294901760
    %1586 = vmatpush1.msra.mxu0 %v1585
    %1587 = vmatprep.subr.mxu0 0.0
    %v1588 = vand.u32 %v1152, 4294901760
    %1589 = vmatpush1.msra.mxu0 %v1588
    %1590 = vmatprep.subr.mxu0 0.0
    %1591 = vmatpush1.msra.mxu0 0.0
    %1592 = vmatprep.subr.mxu0 0.0
    %1593 = vmatpush1.msra.mxu0 0.0
    %1594 = vmatprep.subr.mxu0 0.0
    %1595 = vmatpush1.msra.mxu0 0.0
    %1596 = vmatprep.subr.mxu0 0.0
    %1597 = vmatpush1.msra.mxu0 0.0
    %1598 = vmatprep.subr.mxu0 0.0
    %1599 = vmatpush1.msra.mxu0 0.0
    %1600 = vmatprep.subr.mxu0 0.0
    %1601 = vmatpush1.msra.mxu0 0.0
    %1602 = vmatprep.subr.mxu0 0.0
    %1603 = vmatpush1.msra.mxu0 0.0
    %1604 = vmatprep.subr.mxu0 0.0
    %1605 = vmatpush1.msra.mxu0 0.0
    %1606 = vmatprep.subr.mxu0 0.0
    %1607 = vmatpush1.msra.mxu0 0.0
    %1608 = vmatprep.subr.mxu0 0.0
    %1609 = vmatpush1.msra.mxu0 0.0
    %1610 = vmatprep.subr.mxu0 0.0
    %1611 = vmatpush1.msra.mxu0 0.0
    %1612 = vmatprep.subr.mxu0 0.0
    %1613 = vmatpush1.msra.mxu0 0.0
    %1614 = vmatprep.subr.mxu0 0.0
    %1615 = vmatpush1.msra.mxu0 0.0
    %1616 = vmatprep.subr.mxu0 0.0
    %1617 = vmatpush1.msra.mxu0 0.0
    %1618 = vmatprep.subr.mxu0 0.0
    %1619 = vmatpush1.msra.mxu0 0.0
    %1620 = vmatprep.subr.mxu0 0.0
    %1621 = vmatpush1.msra.mxu0 0.0
    %1622 = vmatprep.subr.mxu0 0.0
    %1623 = vmatpush1.msra.mxu0 0.0
    %1624 = vmatprep.subr.mxu0 0.0
    %1625 = vmatpush1.msra.mxu0 0.0
    %1626 = vmatprep.subr.mxu0 0.0
    %1627 = vmatpush1.msra.mxu0 0.0
    %1628 = vmatprep.subr.mxu0 0.0
    %1629 = vmatpush1.msra.mxu0 0.0
    %1630 = vmatprep.subr.mxu0 0.0
    %1631 = vmatpush1.msra.mxu0 0.0
    %1632 = vmatprep.subr.mxu0 0.0
    %1633 = vmatpush1.msra.mxu0 0.0
    %1634 = vmatprep.subr.mxu0 0.0
    %1635 = vmatpush1.msra.mxu0 0.0
    %1636 = vmatprep.subr.mxu0 0.0
    %1637 = vmatpush1.msra.mxu0 0.0
    %1638 = vmatprep.subr.mxu0 0.0
    %1639 = vmatpush1.msra.mxu0 0.0
    %1640 = vmatprep.subr.mxu0 0.0
    %1641 = vmatpush1.msra.mxu0 0.0
    %1642 = vmatprep.subr.mxu0 0.0
    %1643 = vmatpush1.msra.mxu0 0.0
    %1644 = vmatprep.subr.mxu0 0.0
    %1645 = vmatpush1.msra.mxu0 0.0
    %1646 = vmatprep.subr.mxu0 0.0
    %1647 = vmatpush1.msra.mxu0 0.0
    %1648 = vmatprep.subr.mxu0 0.0
    %1649 = vmatpush1.msra.mxu0 0.0
    %1650 = vmatprep.mubr.f32.mxu0 0.0
    %v1651 = vand.u32 %v1156, 4294901760
    %1652 = vmatmul.mubr.f32.gmra.mrb[0].mxu0 %v1651
    %v1653 = vpop.f32.mrb[0].mxu0
    %v1654 = vadd.f32 %v1575, %v1653
    %v1655 = vpop.f32.mrb[0].mxu0
    %1656 = vmatprep.mubr.f32.mxu0 0.0
    %v1657 = vand.u32 %v1159, 4294901760
    %1658 = vmatmul.mubr.f32.gmra.mrb[0].mxu0 %v1657
    %v1659 = vpop.f32.mrb[0].mxu0
    %v1660 = vadd.f32 %v1581, %v1659
    %v1661 = vpop.f32.mrb[0].mxu0
    %1662 = vdwg.mxu0
    %v1663 = vlaneseq
    %v1664 = vshrl.u32 %v1663, 7
    %v1665 = vsub.s32 1, %v1664
    %v1666 = vrot.slane %v58, %v1665
    %1671 = vrot.lane.b32.xlu0 %v63, 32
    %v1672 = vpop.permute.xlu0 %1671
    %1673 = vrot.lane.b32.xlu0 %v64, 32
    %v1674 = vpop.permute.xlu0 %1673
    %1675 = vrot.lane.b32.xlu0 %v65, 32
    %v1676 = vpop.permute.xlu0 %1675
    %1677 = vrot.lane.b32.xlu0 %v66, 32
    %v1678 = vpop.permute.xlu0 %1677
    %v1684 = vsel %vm71, %v1654, 0
    %v1687 = vsel %vm71, %v1660, 0
    %1689 = vmatprep.subr.mxu0 0.0
    %v1690 = vand.u32 %v1672, 4294901760
    %1691 = vmatpush1.msra.mxu0 %v1690
    %1692 = vmatprep.subr.mxu0 0.0
    %v1693 = vand.u32 %v1674, 4294901760
    %1694 = vmatpush1.msra.mxu0 %v1693
    %1695 = vmatprep.subr.mxu0 0.0
    %v1696 = vand.u32 %v1676, 4294901760
    %1697 = vmatpush1.msra.mxu0 %v1696
    %1698 = vmatprep.subr.mxu0 0.0
    %v1699 = vand.u32 %v1678, 4294901760
    %1700 = vmatpush1.msra.mxu0 %v1699
    %1701 = vmatprep.subr.mxu0 0.0
    %1702 = vmatpush1.msra.mxu0 0.0
    %1703 = vmatprep.subr.mxu0 0.0
    %1704 = vmatpush1.msra.mxu0 0.0
    %1705 = vmatprep.subr.mxu0 0.0
    %1706 = vmatpush1.msra.mxu0 0.0
    %1707 = vmatprep.subr.mxu0 0.0
    %1708 = vmatpush1.msra.mxu0 0.0
    %1709 = vmatprep.subr.mxu0 0.0
    %1710 = vmatpush1.msra.mxu0 0.0
    %1711 = vmatprep.subr.mxu0 0.0
    %1712 = vmatpush1.msra.mxu0 0.0
    %1713 = vmatprep.subr.mxu0 0.0
    %1714 = vmatpush1.msra.mxu0 0.0
    %1715 = vmatprep.subr.mxu0 0.0
    %1716 = vmatpush1.msra.mxu0 0.0
    %1717 = vmatprep.subr.mxu0 0.0
    %1718 = vmatpush1.msra.mxu0 0.0
    %1719 = vmatprep.subr.mxu0 0.0
    %1720 = vmatpush1.msra.mxu0 0.0
    %1721 = vmatprep.subr.mxu0 0.0
    %1722 = vmatpush1.msra.mxu0 0.0
    %1723 = vmatprep.subr.mxu0 0.0
    %1724 = vmatpush1.msra.mxu0 0.0
    %1725 = vmatprep.subr.mxu0 0.0
    %1726 = vmatpush1.msra.mxu0 0.0
    %1727 = vmatprep.subr.mxu0 0.0
    %1728 = vmatpush1.msra.mxu0 0.0
    %1729 = vmatprep.subr.mxu0 0.0
    %1730 = vmatpush1.msra.mxu0 0.0
    %1731 = vmatprep.subr.mxu0 0.0
    %1732 = vmatpush1.msra.mxu0 0.0
    %1733 = vmatprep.subr.mxu0 0.0
    %1734 = vmatpush1.msra.mxu0 0.0
    %1735 = vmatprep.subr.mxu0 0.0
    %1736 = vmatpush1.msra.mxu0 0.0
    %1737 = vmatprep.subr.mxu0 0.0
    %1738 = vmatpush1.msra.mxu0 0.0
    %1739 = vmatprep.subr.mxu0 0.0
    %1740 = vmatpush1.msra.mxu0 0.0
    %1741 = vmatprep.subr.mxu0 0.0
    %1742 = vmatpush1.msra.mxu0 0.0
    %1743 = vmatprep.subr.mxu0 0.0
    %1744 = vmatpush1.msra.mxu0 0.0
    %1745 = vmatprep.subr.mxu0 0.0
    %1746 = vmatpush1.msra.mxu0 0.0
    %1747 = vmatprep.subr.mxu0 0.0
    %1748 = vmatpush1.msra.mxu0 0.0
    %1749 = vmatprep.subr.mxu0 0.0
    %1750 = vmatpush1.msra.mxu0 0.0
    %1751 = vmatprep.subr.mxu0 0.0
    %1752 = vmatpush1.msra.mxu0 0.0
    %1753 = vmatprep.subr.mxu0 0.0
    %1754 = vmatpush1.msra.mxu0 0.0
    %1755 = vmatprep.subr.mxu0 0.0
    %1756 = vmatpush1.msra.mxu0 0.0
    %1757 = vmatprep.mubr.f32.mxu0 0.0
    %v1758 = vand.u32 %v1684, 4294901760
    %v1759 = vsub.f32 %v1684, %v1758
    %v1760 = vand.u32 %v1759, 4294901760
    %v1761 = vsub.f32 %v1759, %v1760
    %v1762 = vand.u32 %v1761, 4294901760
    %1763 = vmatmul.mubr.f32.gmra.mrb[0].mxu0 %v1762
    %v1764 = vpop.f32.mrb[0].mxu0
    %v1765 = vadd.f32 %v1666, %v1764
    %v1766 = vpop.f32.mrb[0].mxu0
    %1767 = vmatprep.mubr.f32.mxu0 0.0
    %v1768 = vand.u32 %v1687, 4294901760
    %v1769 = vsub.f32 %v1687, %v1768
    %v1770 = vand.u32 %v1769, 4294901760
    %v1771 = vsub.f32 %v1769, %v1770
    %v1772 = vand.u32 %v1771, 4294901760
    %1773 = vmatmul.mubr.f32.gmra.mrb[0].mxu0 %v1772
    %v1774 = vpop.f32.mrb[0].mxu0
    %v1775 = vadd.f32 %v1666, %v1774
    %v1776 = vpop.f32.mrb[0].mxu0
    %1777 = vdwg.mxu0
    %1778 = vmatprep.subr.mxu0 0.0
    %v1779 = vand.u32 %v1672, 4294901760
    %v1780 = vsub.f32 %v1672, %v1779
    %v1781 = vand.u32 %v1780, 4294901760
    %v1782 = vsub.f32 %v1780, %v1781
    %v1783 = vand.u32 %v1782, 4294901760
    %1784 = vmatpush1.msra.mxu0 %v1783
    %1785 = vmatprep.subr.mxu0 0.0
    %v1786 = vand.u32 %v1674, 4294901760
    %v1787 = vsub.f32 %v1674, %v1786
    %v1788 = vand.u32 %v1787, 4294901760
    %v1789 = vsub.f32 %v1787, %v1788
    %v1790 = vand.u32 %v1789, 4294901760
    %1791 = vmatpush1.msra.mxu0 %v1790
    %1792 = vmatprep.subr.mxu0 0.0
    %v1793 = vand.u32 %v1676, 4294901760
    %v1794 = vsub.f32 %v1676, %v1793
    %v1795 = vand.u32 %v1794, 4294901760
    %v1796 = vsub.f32 %v1794, %v1795
    %v1797 = vand.u32 %v1796, 4294901760
    %1798 = vmatpush1.msra.mxu0 %v1797
    %1799 = vmatprep.subr.mxu0 0.0
    %v1800 = vand.u32 %v1678, 4294901760
    %v1801 = vsub.f32 %v1678, %v1800
    %v1802 = vand.u32 %v1801, 4294901760
    %v1803 = vsub.f32 %v1801, %v1802
    %v1804 = vand.u32 %v1803, 4294901760
    %1805 = vmatpush1.msra.mxu0 %v1804
    %1806 = vmatprep.subr.mxu0 0.0
    %1807 = vmatpush1.msra.mxu0 0.0
    %1808 = vmatprep.subr.mxu0 0.0
    %1809 = vmatpush1.msra.mxu0 0.0
    %1810 = vmatprep.subr.mxu0 0.0
    %1811 = vmatpush1.msra.mxu0 0.0
    %1812 = vmatprep.subr.mxu0 0.0
    %1813 = vmatpush1.msra.mxu0 0.0
    %1814 = vmatprep.subr.mxu0 0.0
    %1815 = vmatpush1.msra.mxu0 0.0
    %1816 = vmatprep.subr.mxu0 0.0
    %1817 = vmatpush1.msra.mxu0 0.0
    %1818 = vmatprep.subr.mxu0 0.0
    %1819 = vmatpush1.msra.mxu0 0.0
    %1820 = vmatprep.subr.mxu0 0.0
    %1821 = vmatpush1.msra.mxu0 0.0
    %1822 = vmatprep.subr.mxu0 0.0
    %1823 = vmatpush1.msra.mxu0 0.0
    %1824 = vmatprep.subr.mxu0 0.0
    %1825 = vmatpush1.msra.mxu0 0.0
    %1826 = vmatprep.subr.mxu0 0.0
    %1827 = vmatpush1.msra.mxu0 0.0
    %1828 = vmatprep.subr.mxu0 0.0
    %1829 = vmatpush1.msra.mxu0 0.0
    %1830 = vmatprep.subr.mxu0 0.0
    %1831 = vmatpush1.msra.mxu0 0.0
    %1832 = vmatprep.subr.mxu0 0.0
    %1833 = vmatpush1.msra.mxu0 0.0
    %1834 = vmatprep.subr.mxu0 0.0
    %1835 = vmatpush1.msra.mxu0 0.0
    %1836 = vmatprep.subr.mxu0 0.0
    %1837 = vmatpush1.msra.mxu0 0.0
    %1838 = vmatprep.subr.mxu0 0.0
    %1839 = vmatpush1.msra.mxu0 0.0
    %1840 = vmatprep.subr.mxu0 0.0
    %1841 = vmatpush1.msra.mxu0 0.0
    %1842 = vmatprep.subr.mxu0 0.0
    %1843 = vmatpush1.msra.mxu0 0.0
    %1844 = vmatprep.subr.mxu0 0.0
    %1845 = vmatpush1.msra.mxu0 0.0
    %1846 = vmatprep.subr.mxu0 0.0
    %1847 = vmatpush1.msra.mxu0 0.0
    %1848 = vmatprep.subr.mxu0 0.0
    %1849 = vmatpush1.msra.mxu0 0.0
    %1850 = vmatprep.subr.mxu0 0.0
    %1851 = vmatpush1.msra.mxu0 0.0
    %1852 = vmatprep.subr.mxu0 0.0
    %1853 = vmatpush1.msra.mxu0 0.0
    %1854 = vmatprep.subr.mxu0 0.0
    %1855 = vmatpush1.msra.mxu0 0.0
    %1856 = vmatprep.subr.mxu0 0.0
    %1857 = vmatpush1.msra.mxu0 0.0
    %1858 = vmatprep.subr.mxu0 0.0
    %1859 = vmatpush1.msra.mxu0 0.0
    %1860 = vmatprep.subr.mxu0 0.0
    %1861 = vmatpush1.msra.mxu0 0.0
    %1862 = vmatprep.mubr.f32.mxu0 0.0
    %v1863 = vand.u32 %v1684, 4294901760
    %1864 = vmatmul.mubr.f32.gmra.mrb[0].mxu0 %v1863
    %v1865 = vpop.f32.mrb[0].mxu0
    %v1866 = vadd.f32 %v1765, %v1865
    %v1867 = vpop.f32.mrb[0].mxu0
    %1868 = vmatprep.mubr.f32.mxu0 0.0
    %v1869 = vand.u32 %v1687, 4294901760
    %1870 = vmatmul.mubr.f32.gmra.mrb[0].mxu0 %v1869
    %v1871 = vpop.f32.mrb[0].mxu0
    %v1872 = vadd.f32 %v1775, %v1871
    %v1873 = vpop.f32.mrb[0].mxu0
    %1874 = vdwg.mxu0
    %1875 = vmatprep.subr.mxu0 0.0
    %v1876 = vand.u32 %v1672, 4294901760
    %v1877 = vsub.f32 %v1672, %v1876
    %1878 = vmatpush1.msra.mxu0 %v1877
    %1879 = vmatprep.subr.mxu0 0.0
    %v1880 = vand.u32 %v1674, 4294901760
    %v1881 = vsub.f32 %v1674, %v1880
    %1882 = vmatpush1.msra.mxu0 %v1881
    %1883 = vmatprep.subr.mxu0 0.0
    %v1884 = vand.u32 %v1676, 4294901760
    %v1885 = vsub.f32 %v1676, %v1884
    %1886 = vmatpush1.msra.mxu0 %v1885
    %1887 = vmatprep.subr.mxu0 0.0
    %v1888 = vand.u32 %v1678, 4294901760
    %v1889 = vsub.f32 %v1678, %v1888
    %1890 = vmatpush1.msra.mxu0 %v1889
    %1891 = vmatprep.subr.mxu0 0.0
    %1892 = vmatpush1.msra.mxu0 0.0
    %1893 = vmatprep.subr.mxu0 0.0
    %1894 = vmatpush1.msra.mxu0 0.0
    %1895 = vmatprep.subr.mxu0 0.0
    %1896 = vmatpush1.msra.mxu0 0.0
    %1897 = vmatprep.subr.mxu0 0.0
    %1898 = vmatpush1.msra.mxu0 0.0
    %1899 = vmatprep.subr.mxu0 0.0
    %1900 = vmatpush1.msra.mxu0 0.0
    %1901 = vmatprep.subr.mxu0 0.0
    %1902 = vmatpush1.msra.mxu0 0.0
    %1903 = vmatprep.subr.mxu0 0.0
    %1904 = vmatpush1.msra.mxu0 0.0
    %1905 = vmatprep.subr.mxu0 0.0
    %1906 = vmatpush1.msra.mxu0 0.0
    %1907 = vmatprep.subr.mxu0 0.0
    %1908 = vmatpush1.msra.mxu0 0.0
    %1909 = vmatprep.subr.mxu0 0.0
    %1910 = vmatpush1.msra.mxu0 0.0
    %1911 = vmatprep.subr.mxu0 0.0
    %1912 = vmatpush1.msra.mxu0 0.0
    %1913 = vmatprep.subr.mxu0 0.0
    %1914 = vmatpush1.msra.mxu0 0.0
    %1915 = vmatprep.subr.mxu0 0.0
    %1916 = vmatpush1.msra.mxu0 0.0
    %1917 = vmatprep.subr.mxu0 0.0
    %1918 = vmatpush1.msra.mxu0 0.0
    %1919 = vmatprep.subr.mxu0 0.0
    %1920 = vmatpush1.msra.mxu0 0.0
    %1921 = vmatprep.subr.mxu0 0.0
    %1922 = vmatpush1.msra.mxu0 0.0
    %1923 = vmatprep.subr.mxu0 0.0
    %1924 = vmatpush1.msra.mxu0 0.0
    %1925 = vmatprep.subr.mxu0 0.0
    %1926 = vmatpush1.msra.mxu0 0.0
    %1927 = vmatprep.subr.mxu0 0.0
    %1928 = vmatpush1.msra.mxu0 0.0
    %1929 = vmatprep.subr.mxu0 0.0
    %1930 = vmatpush1.msra.mxu0 0.0
    %1931 = vmatprep.subr.mxu0 0.0
    %1932 = vmatpush1.msra.mxu0 0.0
    %1933 = vmatprep.subr.mxu0 0.0
    %1934 = vmatpush1.msra.mxu0 0.0
    %1935 = vmatprep.subr.mxu0 0.0
    %1936 = vmatpush1.msra.mxu0 0.0
    %1937 = vmatprep.subr.mxu0 0.0
    %1938 = vmatpush1.msra.mxu0 0.0
    %1939 = vmatprep.subr.mxu0 0.0
    %1940 = vmatpush1.msra.mxu0 0.0
    %1941 = vmatprep.subr.mxu0 0.0
    %1942 = vmatpush1.msra.mxu0 0.0
    %1943 = vmatprep.subr.mxu0 0.0
    %1944 = vmatpush1.msra.mxu0 0.0
    %1945 = vmatprep.subr.mxu0 0.0
    %1946 = vmatpush1.msra.mxu0 0.0
    %1947 = vmatprep.mubr.f32.mxu0 0.0
    %v1948 = vand.u32 %v1684, 4294901760
    %v1949 = vsub.f32 %v1684, %v1948
    %1950 = vmatmul.mubr.f32.gmra.mrb[0].mxu0 %v1949
    %v1951 = vpop.f32.mrb[0].mxu0
    %v1952 = vadd.f32 %v1866, %v1951
    %v1953 = vpop.f32.mrb[0].mxu0
    %1954 = vmatprep.mubr.f32.mxu0 0.0
    %v1955 = vand.u32 %v1687, 4294901760
    %v1956 = vsub.f32 %v1687, %v1955
    %1957 = vmatmul.mubr.f32.gmra.mrb[0].mxu0 %v1956
    %v1958 = vpop.f32.mrb[0].mxu0
    %v1959 = vadd.f32 %v1872, %v1958
    %v1960 = vpop.f32.mrb[0].mxu0
    %1961 = vdwg.mxu0
    %1962 = vmatprep.subr.mxu0 0.0
    %v1963 = vand.u32 %v1672, 4294901760
    %1964 = vmatpush1.msra.mxu0 %v1963
    %1965 = vmatprep.subr.mxu0 0.0
    %v1966 = vand.u32 %v1674, 4294901760
    %1967 = vmatpush1.msra.mxu0 %v1966
    %1968 = vmatprep.subr.mxu0 0.0
    %v1969 = vand.u32 %v1676, 4294901760
    %1970 = vmatpush1.msra.mxu0 %v1969
    %1971 = vmatprep.subr.mxu0 0.0
    %v1972 = vand.u32 %v1678, 4294901760
    %1973 = vmatpush1.msra.mxu0 %v1972
    %1974 = vmatprep.subr.mxu0 0.0
    %1975 = vmatpush1.msra.mxu0 0.0
    %1976 = vmatprep.subr.mxu0 0.0
    %1977 = vmatpush1.msra.mxu0 0.0
    %1978 = vmatprep.subr.mxu0 0.0
    %1979 = vmatpush1.msra.mxu0 0.0
    %1980 = vmatprep.subr.mxu0 0.0
    %1981 = vmatpush1.msra.mxu0 0.0
    %1982 = vmatprep.subr.mxu0 0.0
    %1983 = vmatpush1.msra.mxu0 0.0
    %1984 = vmatprep.subr.mxu0 0.0
    %1985 = vmatpush1.msra.mxu0 0.0
    %1986 = vmatprep.subr.mxu0 0.0
    %1987 = vmatpush1.msra.mxu0 0.0
    %1988 = vmatprep.subr.mxu0 0.0
    %1989 = vmatpush1.msra.mxu0 0.0
    %1990 = vmatprep.subr.mxu0 0.0
    %1991 = vmatpush1.msra.mxu0 0.0
    %1992 = vmatprep.subr.mxu0 0.0
    %1993 = vmatpush1.msra.mxu0 0.0
    %1994 = vmatprep.subr.mxu0 0.0
    %1995 = vmatpush1.msra.mxu0 0.0
    %1996 = vmatprep.subr.mxu0 0.0
    %1997 = vmatpush1.msra.mxu0 0.0
    %1998 = vmatprep.subr.mxu0 0.0
    %1999 = vmatpush1.msra.mxu0 0.0
    %2000 = vmatprep.subr.mxu0 0.0
    %2001 = vmatpush1.msra.mxu0 0.0
    %2002 = vmatprep.subr.mxu0 0.0
    %2003 = vmatpush1.msra.mxu0 0.0
    %2004 = vmatprep.subr.mxu0 0.0
    %2005 = vmatpush1.msra.mxu0 0.0
    %2006 = vmatprep.subr.mxu0 0.0
    %2007 = vmatpush1.msra.mxu0 0.0
    %2008 = vmatprep.subr.mxu0 0.0
    %2009 = vmatpush1.msra.mxu0 0.0
    %2010 = vmatprep.subr.mxu0 0.0
    %2011 = vmatpush1.msra.mxu0 0.0
    %2012 = vmatprep.subr.mxu0 0.0
    %2013 = vmatpush1.msra.mxu0 0.0
    %2014 = vmatprep.subr.mxu0 0.0
    %2015 = vmatpush1.msra.mxu0 0.0
    %2016 = vmatprep.subr.mxu0 0.0
    %2017 = vmatpush1.msra.mxu0 0.0
    %2018 = vmatprep.subr.mxu0 0.0
    %2019 = vmatpush1.msra.mxu0 0.0
    %2020 = vmatprep.subr.mxu0 0.0
    %2021 = vmatpush1.msra.mxu0 0.0
    %2022 = vmatprep.subr.mxu0 0.0
    %2023 = vmatpush1.msra.mxu0 0.0
    %2024 = vmatprep.subr.mxu0 0.0
    %2025 = vmatpush1.msra.mxu0 0.0
    %2026 = vmatprep.subr.mxu0 0.0
    %2027 = vmatpush1.msra.mxu0 0.0
    %2028 = vmatprep.subr.mxu0 0.0
    %2029 = vmatpush1.msra.mxu0 0.0
    %2030 = vmatprep.mubr.f32.mxu0 0.0
    %v2031 = vand.u32 %v1684, 4294901760
    %v2032 = vsub.f32 %v1684, %v2031
    %v2033 = vand.u32 %v2032, 4294901760
    %2034 = vmatmul.mubr.f32.gmra.mrb[0].mxu0 %v2033
    %v2035 = vpop.f32.mrb[0].mxu0
    %v2036 = vadd.f32 %v1952, %v2035
    %v2037 = vpop.f32.mrb[0].mxu0
    %2038 = vmatprep.mubr.f32.mxu0 0.0
    %v2039 = vand.u32 %v1687, 4294901760
    %v2040 = vsub.f32 %v1687, %v2039
    %v2041 = vand.u32 %v2040, 4294901760
    %2042 = vmatmul.mubr.f32.gmra.mrb[0].mxu0 %v2041
    %v2043 = vpop.f32.mrb[0].mxu0
    %v2044 = vadd.f32 %v1959, %v2043
    %v2045 = vpop.f32.mrb[0].mxu0
    %2046 = vdwg.mxu0
    %2047 = vmatprep.subr.mxu0 0.0
    %v2048 = vand.u32 %v1672, 4294901760
    %v2049 = vsub.f32 %v1672, %v2048
    %v2050 = vand.u32 %v2049, 4294901760
    %2051 = vmatpush1.msra.mxu0 %v2050
    %2052 = vmatprep.subr.mxu0 0.0
    %v2053 = vand.u32 %v1674, 4294901760
    %v2054 = vsub.f32 %v1674, %v2053
    %v2055 = vand.u32 %v2054, 4294901760
    %2056 = vmatpush1.msra.mxu0 %v2055
    %2057 = vmatprep.subr.mxu0 0.0
    %v2058 = vand.u32 %v1676, 4294901760
    %v2059 = vsub.f32 %v1676, %v2058
    %v2060 = vand.u32 %v2059, 4294901760
    %2061 = vmatpush1.msra.mxu0 %v2060
    %2062 = vmatprep.subr.mxu0 0.0
    %v2063 = vand.u32 %v1678, 4294901760
    %v2064 = vsub.f32 %v1678, %v2063
    %v2065 = vand.u32 %v2064, 4294901760
    %2066 = vmatpush1.msra.mxu0 %v2065
    %2067 = vmatprep.subr.mxu0 0.0
    %2068 = vmatpush1.msra.mxu0 0.0
    %2069 = vmatprep.subr.mxu0 0.0
    %2070 = vmatpush1.msra.mxu0 0.0
    %2071 = vmatprep.subr.mxu0 0.0
    %2072 = vmatpush1.msra.mxu0 0.0
    %2073 = vmatprep.subr.mxu0 0.0
    %2074 = vmatpush1.msra.mxu0 0.0
    %2075 = vmatprep.subr.mxu0 0.0
    %2076 = vmatpush1.msra.mxu0 0.0
    %2077 = vmatprep.subr.mxu0 0.0
    %2078 = vmatpush1.msra.mxu0 0.0
    %2079 = vmatprep.subr.mxu0 0.0
    %2080 = vmatpush1.msra.mxu0 0.0
    %2081 = vmatprep.subr.mxu0 0.0
    %2082 = vmatpush1.msra.mxu0 0.0
    %2083 = vmatprep.subr.mxu0 0.0
    %2084 = vmatpush1.msra.mxu0 0.0
    %2085 = vmatprep.subr.mxu0 0.0
    %2086 = vmatpush1.msra.mxu0 0.0
    %2087 = vmatprep.subr.mxu0 0.0
    %2088 = vmatpush1.msra.mxu0 0.0
    %2089 = vmatprep.subr.mxu0 0.0
    %2090 = vmatpush1.msra.mxu0 0.0
    %2091 = vmatprep.subr.mxu0 0.0
    %2092 = vmatpush1.msra.mxu0 0.0
    %2093 = vmatprep.subr.mxu0 0.0
    %2094 = vmatpush1.msra.mxu0 0.0
    %2095 = vmatprep.subr.mxu0 0.0
    %2096 = vmatpush1.msra.mxu0 0.0
    %2097 = vmatprep.subr.mxu0 0.0
    %2098 = vmatpush1.msra.mxu0 0.0
    %2099 = vmatprep.subr.mxu0 0.0
    %2100 = vmatpush1.msra.mxu0 0.0
    %2101 = vmatprep.subr.mxu0 0.0
    %2102 = vmatpush1.msra.mxu0 0.0
    %2103 = vmatprep.subr.mxu0 0.0
    %2104 = vmatpush1.msra.mxu0 0.0
    %2105 = vmatprep.subr.mxu0 0.0
    %2106 = vmatpush1.msra.mxu0 0.0
    %2107 = vmatprep.subr.mxu0 0.0
    %2108 = vmatpush1.msra.mxu0 0.0
    %2109 = vmatprep.subr.mxu0 0.0
    %2110 = vmatpush1.msra.mxu0 0.0
    %2111 = vmatprep.subr.mxu0 0.0
    %2112 = vmatpush1.msra.mxu0 0.0
    %2113 = vmatprep.subr.mxu0 0.0
    %2114 = vmatpush1.msra.mxu0 0.0
    %2115 = vmatprep.subr.mxu0 0.0
    %2116 = vmatpush1.msra.mxu0 0.0
    %2117 = vmatprep.subr.mxu0 0.0
    %2118 = vmatpush1.msra.mxu0 0.0
    %2119 = vmatprep.subr.mxu0 0.0
    %2120 = vmatpush1.msra.mxu0 0.0
    %2121 = vmatprep.subr.mxu0 0.0
    %2122 = vmatpush1.msra.mxu0 0.0
    %2123 = vmatprep.mubr.f32.mxu0 0.0
    %v2124 = vand.u32 %v1684, 4294901760
    %2125 = vmatmul.mubr.f32.gmra.mrb[0].mxu0 %v2124
    %v2126 = vpop.f32.mrb[0].mxu0
    %v2127 = vadd.f32 %v2036, %v2126
    %v2128 = vpop.f32.mrb[0].mxu0
    %2129 = vmatprep.mubr.f32.mxu0 0.0
    %v2130 = vand.u32 %v1687, 4294901760
    %2131 = vmatmul.mubr.f32.gmra.mrb[0].mxu0 %v2130
    %v2132 = vpop.f32.mrb[0].mxu0
    %v2133 = vadd.f32 %v2044, %v2132
    %v2134 = vpop.f32.mrb[0].mxu0
    %2135 = vdwg.mxu0
    %2136 = vmatprep.subr.mxu0 0.0
    %v2137 = vand.u32 %v1672, 4294901760
    %2138 = vmatpush1.msra.mxu0 %v2137
    %2139 = vmatprep.subr.mxu0 0.0
    %v2140 = vand.u32 %v1674, 4294901760
    %2141 = vmatpush1.msra.mxu0 %v2140
    %2142 = vmatprep.subr.mxu0 0.0
    %v2143 = vand.u32 %v1676, 4294901760
    %2144 = vmatpush1.msra.mxu0 %v2143
    %2145 = vmatprep.subr.mxu0 0.0
    %v2146 = vand.u32 %v1678, 4294901760
    %2147 = vmatpush1.msra.mxu0 %v2146
    %2148 = vmatprep.subr.mxu0 0.0
    %2149 = vmatpush1.msra.mxu0 0.0
    %2150 = vmatprep.subr.mxu0 0.0
    %2151 = vmatpush1.msra.mxu0 0.0
    %2152 = vmatprep.subr.mxu0 0.0
    %2153 = vmatpush1.msra.mxu0 0.0
    %2154 = vmatprep.subr.mxu0 0.0
    %2155 = vmatpush1.msra.mxu0 0.0
    %2156 = vmatprep.subr.mxu0 0.0
    %2157 = vmatpush1.msra.mxu0 0.0
    %2158 = vmatprep.subr.mxu0 0.0
    %2159 = vmatpush1.msra.mxu0 0.0
    %2160 = vmatprep.subr.mxu0 0.0
    %2161 = vmatpush1.msra.mxu0 0.0
    %2162 = vmatprep.subr.mxu0 0.0
    %2163 = vmatpush1.msra.mxu0 0.0
    %2164 = vmatprep.subr.mxu0 0.0
    %2165 = vmatpush1.msra.mxu0 0.0
    %2166 = vmatprep.subr.mxu0 0.0
    %2167 = vmatpush1.msra.mxu0 0.0
    %2168 = vmatprep.subr.mxu0 0.0
    %2169 = vmatpush1.msra.mxu0 0.0
    %2170 = vmatprep.subr.mxu0 0.0
    %2171 = vmatpush1.msra.mxu0 0.0
    %2172 = vmatprep.subr.mxu0 0.0
    %2173 = vmatpush1.msra.mxu0 0.0
    %2174 = vmatprep.subr.mxu0 0.0
    %2175 = vmatpush1.msra.mxu0 0.0
    %2176 = vmatprep.subr.mxu0 0.0
    %2177 = vmatpush1.msra.mxu0 0.0
    %2178 = vmatprep.subr.mxu0 0.0
    %2179 = vmatpush1.msra.mxu0 0.0
    %2180 = vmatprep.subr.mxu0 0.0
    %2181 = vmatpush1.msra.mxu0 0.0
    %2182 = vmatprep.subr.mxu0 0.0
    %2183 = vmatpush1.msra.mxu0 0.0
    %2184 = vmatprep.subr.mxu0 0.0
    %2185 = vmatpush1.msra.mxu0 0.0
    %2186 = vmatprep.subr.mxu0 0.0
    %2187 = vmatpush1.msra.mxu0 0.0
    %2188 = vmatprep.subr.mxu0 0.0
    %2189 = vmatpush1.msra.mxu0 0.0
    %2190 = vmatprep.subr.mxu0 0.0
    %2191 = vmatpush1.msra.mxu0 0.0
    %2192 = vmatprep.subr.mxu0 0.0
    %2193 = vmatpush1.msra.mxu0 0.0
    %2194 = vmatprep.subr.mxu0 0.0
    %2195 = vmatpush1.msra.mxu0 0.0
    %2196 = vmatprep.subr.mxu0 0.0
    %2197 = vmatpush1.msra.mxu0 0.0
    %2198 = vmatprep.subr.mxu0 0.0
    %2199 = vmatpush1.msra.mxu0 0.0
    %2200 = vmatprep.subr.mxu0 0.0
    %2201 = vmatpush1.msra.mxu0 0.0
    %2202 = vmatprep.subr.mxu0 0.0
    %2203 = vmatpush1.msra.mxu0 0.0
    %2204 = vmatprep.mubr.f32.mxu0 0.0
    %v2205 = vand.u32 %v1684, 4294901760
    %2206 = vmatmul.mubr.f32.gmra.mrb[0].mxu0 %v2205
    %v2207 = vpop.f32.mrb[0].mxu0
    %v2208 = vadd.f32 %v2127, %v2207
    %v2209 = vpop.f32.mrb[0].mxu0
    %2210 = vmatprep.mubr.f32.mxu0 0.0
    %v2211 = vand.u32 %v1687, 4294901760
    %2212 = vmatmul.mubr.f32.gmra.mrb[0].mxu0 %v2211
    %v2213 = vpop.f32.mrb[0].mxu0
    %v2214 = vadd.f32 %v2133, %v2213
    %v2215 = vpop.f32.mrb[0].mxu0
    %2216 = vdwg.mxu0
    %v2217 = vadd.f32 %v2208, %v56
    %v2218 = vadd.f32 %v2214, %v57
    %v2219 = vsel %vm71, %v2217, 0.0
    %2220 = vadd.xlane.f32.xlu0 %v2219
    %v2221 = vpop.xlane.xlu0 %2220
    %v2222 = vsel %vm71, %v2218, 0.0
    %2223 = vadd.xlane.f32.xlu0 %v2222
    %v2224 = vpop.xlane.xlu0 %2223
    %v2225 = vrcp.pop 32.0
    %v2226 = vmul.f32 %v2221, %v2225
    %v2227 = vmul.f32 %v2224, %v2225
    %v2228 = vsub.f32 %v2217, %v2226
    %v2229 = vsub.f32 %v2218, %v2227
    %v2230 = vmul.f32 %v2228, %v2228
    %v2231 = vmul.f32 %v2229, %v2229
    %v2232 = vsel %vm71, %v2230, 0.0
    %2233 = vadd.xlane.f32.xlu0 %v2232
    %v2234 = vpop.xlane.xlu0 %2233
    %v2235 = vsel %vm71, %v2231, 0.0
    %2236 = vadd.xlane.f32.xlu0 %v2235
    %v2237 = vpop.xlane.xlu0 %2236
    %v2238 = vmul.f32 %v2234, %v2225
    %v2239 = vmul.f32 %v2237, %v2225
    %v2240 = vadd.f32 %v2238, 1e-05
    %v2241 = vadd.f32 %v2239, 1e-05
    %v2242 = vrsqrt.pop %v2240
    %v2243 = vrsqrt.pop %v2241
    %v2244 = vmul.f32 %v2228, %v2242
    %v2245 = vmul.f32 %v2229, %v2243
    %2247 = vrot.lane.b32.xlu0 %v1666, 64
    %v2248 = vpop.permute.xlu0 %2247
    %v2250 = vmul.f32 %v2244, %v2248
    %v2251 = vmul.f32 %v2245, %v2248
    %2252 = vrot.lane.b32.xlu0 %v1666, 32
    %v2253 = vpop.permute.xlu0 %2252
    %v2255 = vadd.f32 %v2250, %v2253
    %v2256 = vadd.f32 %v2251, %v2253
    %v2257 = vld [vmem:[#allocation5 + $0x8] sm:$0xff]
    %v2258 = vld [vmem:[#allocation5 + $0x10] sm:$0xff]
    %v2259 = vld [vmem:[#allocation5 + $0x18] sm:$0xff]
    %v2260 = vld [vmem:[#allocation5 + $0x40] sm:$0xff]
    %v2261 = vld [vmem:[#allocation5 + $0x48] sm:$0xff]
    %v2262 = vld [vmem:[#allocation5 + $0x50] sm:$0xff]
    %v2263 = vld [vmem:[#allocation5 + $0x78] sm:$0xff]
    %v2264 = vld [vmem:[#allocation5 + $0x80] sm:$0xff]
    %v2265 = vld [vmem:[#allocation5 + $0x88] sm:$0xff]
    %v2266 = vld [vmem:[#allocation5 + $0xb0] sm:$0xff]
    %v2267 = vld [vmem:[#allocation5 + $0xb8] sm:$0xff]
    %v2268 = vld [vmem:[#allocation5 + $0xc0] sm:$0xff]
    %v2269 = vlaneseq
    %v2270 = vshrl.u32 %v2269, 7
    %v2271 = vsub.s32 2, %v2270
    %v2272 = vrot.slane %v58, %v2271
    %v2273 = vlaneseq
    %v2274 = vshrl.u32 %v2273, 7
    %v2275 = vsub.s32 2, %v2274
    %v2276 = vrot.slane %v59, %v2275
    %v2277 = vlaneseq
    %v2278 = vshrl.u32 %v2277, 7
    %v2279 = vsub.s32 2, %v2278
    %v2280 = vrot.slane %v60, %v2279
    %v2282 = vsel %vm71, %v2255, 0
    %v2285 = vsel %vm71, %v2256, 0
    %v2287 = vand.u32 %v2258, 4294901760
    %2288 = vmatprep.subr.mxu0 %v2287
    %v2289 = vand.u32 %v2257, 4294901760
    %2290 = vmatpush1.msra.mxu0 %v2289
    %v2291 = vand.u32 %v2261, 4294901760
    %2292 = vmatprep.subr.mxu0 %v2291
    %v2293 = vand.u32 %v2260, 4294901760
    %2294 = vmatpush1.msra.mxu0 %v2293
    %v2295 = vand.u32 %v2264, 4294901760
    %2296 = vmatprep.subr.mxu0 %v2295
    %v2297 = vand.u32 %v2263, 4294901760
    %2298 = vmatpush1.msra.mxu0 %v2297
    %v2299 = vand.u32 %v2267, 4294901760
    %2300 = vmatprep.subr.mxu0 %v2299
    %v2301 = vand.u32 %v2266, 4294901760
    %2302 = vmatpush1.msra.mxu0 %v2301
    %2303 = vmatprep.subr.mxu0 0.0
    %2304 = vmatpush1.msra.mxu0 0.0
    %2305 = vmatprep.subr.mxu0 0.0
    %2306 = vmatpush1.msra.mxu0 0.0
    %2307 = vmatprep.subr.mxu0 0.0
    %2308 = vmatpush1.msra.mxu0 0.0
    %2309 = vmatprep.subr.mxu0 0.0
    %2310 = vmatpush1.msra.mxu0 0.0
    %2311 = vmatprep.subr.mxu0 0.0
    %2312 = vmatpush1.msra.mxu0 0.0
    %2313 = vmatprep.subr.mxu0 0.0
    %2314 = vmatpush1.msra.mxu0 0.0
    %2315 = vmatprep.subr.mxu0 0.0
    %2316 = vmatpush1.msra.mxu0 0.0
    %2317 = vmatprep.subr.mxu0 0.0
    %2318 = vmatpush1.msra.mxu0 0.0
    %2319 = vmatprep.subr.mxu0 0.0
    %2320 = vmatpush1.msra.mxu0 0.0
    %2321 = vmatprep.subr.mxu0 0.0
    %2322 = vmatpush1.msra.mxu0 0.0
    %2323 = vmatprep.subr.mxu0 0.0
    %2324 = vmatpush1.msra.mxu0 0.0
    %2325 = vmatprep.subr.mxu0 0.0
    %2326 = vmatpush1.msra.mxu0 0.0
    %2327 = vmatprep.subr.mxu0 0.0
    %2328 = vmatpush1.msra.mxu0 0.0
    %2329 = vmatprep.subr.mxu0 0.0
    %2330 = vmatpush1.msra.mxu0 0.0
    %2331 = vmatprep.subr.mxu0 0.0
    %2332 = vmatpush1.msra.mxu0 0.0
    %2333 = vmatprep.subr.mxu0 0.0
    %2334 = vmatpush1.msra.mxu0 0.0
    %2335 = vmatprep.subr.mxu0 0.0
    %2336 = vmatpush1.msra.mxu0 0.0
    %2337 = vmatprep.subr.mxu0 0.0
    %2338 = vmatpush1.msra.mxu0 0.0
    %2339 = vmatprep.subr.mxu0 0.0
    %2340 = vmatpush1.msra.mxu0 0.0
    %2341 = vmatprep.subr.mxu0 0.0
    %2342 = vmatpush1.msra.mxu0 0.0
    %2343 = vmatprep.subr.mxu0 0.0
    %2344 = vmatpush1.msra.mxu0 0.0
    %2345 = vmatprep.subr.mxu0 0.0
    %2346 = vmatpush1.msra.mxu0 0.0
    %2347 = vmatprep.subr.mxu0 0.0
    %2348 = vmatpush1.msra.mxu0 0.0
    %2349 = vmatprep.subr.mxu0 0.0
    %2350 = vmatpush1.msra.mxu0 0.0
    %2351 = vmatprep.subr.mxu0 0.0
    %2352 = vmatpush1.msra.mxu0 0.0
    %2353 = vmatprep.subr.mxu0 0.0
    %2354 = vmatpush1.msra.mxu0 0.0
    %2355 = vmatprep.subr.mxu0 0.0
    %2356 = vmatpush1.msra.mxu0 0.0
    %2357 = vmatprep.subr.mxu0 0.0
    %2358 = vmatpush1.msra.mxu0 0.0
    %2359 = vmatprep.mubr.f32.mxu0 0.0
    %v2360 = vand.u32 %v2282, 4294901760
    %v2361 = vsub.f32 %v2282, %v2360
    %v2362 = vand.u32 %v2361, 4294901760
    %v2363 = vsub.f32 %v2361, %v2362
    %v2364 = vand.u32 %v2363, 4294901760
    %2365 = vmatmul.mubr.f32.gmra.mrb[0].mxu0 %v2364
    %v2366 = vpop.f32.mrb[0].mxu0
    %v2367 = vadd.f32 %v2272, %v2366
    %v2368 = vpop.f32.mrb[0].mxu0
    %v2369 = vadd.f32 %v2276, %v2368
    %2370 = vmatprep.mubr.f32.mxu0 0.0
    %v2371 = vand.u32 %v2285, 4294901760
    %v2372 = vsub.f32 %v2285, %v2371
    %v2373 = vand.u32 %v2372, 4294901760
    %v2374 = vsub.f32 %v2372, %v2373
    %v2375 = vand.u32 %v2374, 4294901760
    %2376 = vmatmul.mubr.f32.gmra.mrb[0].mxu0 %v2375
    %v2377 = vpop.f32.mrb[0].mxu0
    %v2378 = vadd.f32 %v2272, %v2377
    %v2379 = vpop.f32.mrb[0].mxu0
    %v2380 = vadd.f32 %v2276, %v2379
    %2381 = vdwg.mxu0
    %v2382 = vand.u32 %v2258, 4294901760
    %v2383 = vsub.f32 %v2258, %v2382
    %v2384 = vand.u32 %v2383, 4294901760
    %v2385 = vsub.f32 %v2383, %v2384
    %v2386 = vand.u32 %v2385, 4294901760
    %2387 = vmatprep.subr.mxu0 %v2386
    %v2388 = vand.u32 %v2257, 4294901760
    %v2389 = vsub.f32 %v2257, %v2388
    %v2390 = vand.u32 %v2389, 4294901760
    %v2391 = vsub.f32 %v2389, %v2390
    %v2392 = vand.u32 %v2391, 4294901760
    %2393 = vmatpush1.msra.mxu0 %v2392
    %v2394 = vand.u32 %v2261, 4294901760
    %v2395 = vsub.f32 %v2261, %v2394
    %v2396 = vand.u32 %v2395, 4294901760
    %v2397 = vsub.f32 %v2395, %v2396
    %v2398 = vand.u32 %v2397, 4294901760
    %2399 = vmatprep.subr.mxu0 %v2398
    %v2400 = vand.u32 %v2260, 4294901760
    %v2401 = vsub.f32 %v2260, %v2400
    %v2402 = vand.u32 %v2401, 4294901760
    %v2403 = vsub.f32 %v2401, %v2402
    %v2404 = vand.u32 %v2403, 4294901760
    %2405 = vmatpush1.msra.mxu0 %v2404
    %v2406 = vand.u32 %v2264, 4294901760
    %v2407 = vsub.f32 %v2264, %v2406
    %v2408 = vand.u32 %v2407, 4294901760
    %v2409 = vsub.f32 %v2407, %v2408
    %v2410 = vand.u32 %v2409, 4294901760
    %2411 = vmatprep.subr.mxu0 %v2410
    %v2412 = vand.u32 %v2263, 4294901760
    %v2413 = vsub.f32 %v2263, %v2412
    %v2414 = vand.u32 %v2413, 4294901760
    %v2415 = vsub.f32 %v2413, %v2414
    %v2416 = vand.u32 %v2415, 4294901760
    %2417 = vmatpush1.msra.mxu0 %v2416
    %v2418 = vand.u32 %v2267, 4294901760
    %v2419 = vsub.f32 %v2267, %v2418
    %v2420 = vand.u32 %v2419, 4294901760
    %v2421 = vsub.f32 %v2419, %v2420
    %v2422 = vand.u32 %v2421, 4294901760
    %2423 = vmatprep.subr.mxu0 %v2422
    %v2424 = vand.u32 %v2266, 4294901760
    %v2425 = vsub.f32 %v2266, %v2424
    %v2426 = vand.u32 %v2425, 4294901760
    %v2427 = vsub.f32 %v2425, %v2426
    %v2428 = vand.u32 %v2427, 4294901760
    %2429 = vmatpush1.msra.mxu0 %v2428
    %2430 = vmatprep.subr.mxu0 0.0
    %2431 = vmatpush1.msra.mxu0 0.0
    %2432 = vmatprep.subr.mxu0 0.0
    %2433 = vmatpush1.msra.mxu0 0.0
    %2434 = vmatprep.subr.mxu0 0.0
    %2435 = vmatpush1.msra.mxu0 0.0
    %2436 = vmatprep.subr.mxu0 0.0
    %2437 = vmatpush1.msra.mxu0 0.0
    %2438 = vmatprep.subr.mxu0 0.0
    %2439 = vmatpush1.msra.mxu0 0.0
    %2440 = vmatprep.subr.mxu0 0.0
    %2441 = vmatpush1.msra.mxu0 0.0
    %2442 = vmatprep.subr.mxu0 0.0
    %2443 = vmatpush1.msra.mxu0 0.0
    %2444 = vmatprep.subr.mxu0 0.0
    %2445 = vmatpush1.msra.mxu0 0.0
    %2446 = vmatprep.subr.mxu0 0.0
    %2447 = vmatpush1.msra.mxu0 0.0
    %2448 = vmatprep.subr.mxu0 0.0
    %2449 = vmatpush1.msra.mxu0 0.0
    %2450 = vmatprep.subr.mxu0 0.0
    %2451 = vmatpush1.msra.mxu0 0.0
    %2452 = vmatprep.subr.mxu0 0.0
    %2453 = vmatpush1.msra.mxu0 0.0
    %2454 = vmatprep.subr.mxu0 0.0
    %2455 = vmatpush1.msra.mxu0 0.0
    %2456 = vmatprep.subr.mxu0 0.0
    %2457 = vmatpush1.msra.mxu0 0.0
    %2458 = vmatprep.subr.mxu0 0.0
    %2459 = vmatpush1.msra.mxu0 0.0
    %2460 = vmatprep.subr.mxu0 0.0
    %2461 = vmatpush1.msra.mxu0 0.0
    %2462 = vmatprep.subr.mxu0 0.0
    %2463 = vmatpush1.msra.mxu0 0.0
    %2464 = vmatprep.subr.mxu0 0.0
    %2465 = vmatpush1.msra.mxu0 0.0
    %2466 = vmatprep.subr.mxu0 0.0
    %2467 = vmatpush1.msra.mxu0 0.0
    %2468 = vmatprep.subr.mxu0 0.0
    %2469 = vmatpush1.msra.mxu0 0.0
    %2470 = vmatprep.subr.mxu0 0.0
    %2471 = vmatpush1.msra.mxu0 0.0
    %2472 = vmatprep.subr.mxu0 0.0
    %2473 = vmatpush1.msra.mxu0 0.0
    %2474 = vmatprep.subr.mxu0 0.0
    %2475 = vmatpush1.msra.mxu0 0.0
    %2476 = vmatprep.subr.mxu0 0.0
    %2477 = vmatpush1.msra.mxu0 0.0
    %2478 = vmatprep.subr.mxu0 0.0
    %2479 = vmatpush1.msra.mxu0 0.0
    %2480 = vmatprep.subr.mxu0 0.0
    %2481 = vmatpush1.msra.mxu0 0.0
    %2482 = vmatprep.subr.mxu0 0.0
    %2483 = vmatpush1.msra.mxu0 0.0
    %2484 = vmatprep.subr.mxu0 0.0
    %2485 = vmatpush1.msra.mxu0 0.0
    %2486 = vmatprep.mubr.f32.mxu0 0.0
    %v2487 = vand.u32 %v2282, 4294901760
    %2488 = vmatmul.mubr.f32.gmra.mrb[0].mxu0 %v2487
    %v2489 = vpop.f32.mrb[0].mxu0
    %v2490 = vadd.f32 %v2367, %v2489
    %v2491 = vpop.f32.mrb[0].mxu0
    %v2492 = vadd.f32 %v2369, %v2491
    %2493 = vmatprep.mubr.f32.mxu0 0.0
    %v2494 = vand.u32 %v2285, 4294901760
    %2495 = vmatmul.mubr.f32.gmra.mrb[0].mxu0 %v2494
    %v2496 = vpop.f32.mrb[0].mxu0
    %v2497 = vadd.f32 %v2378, %v2496
    %v2498 = vpop.f32.mrb[0].mxu0
    %v2499 = vadd.f32 %v2380, %v2498
    %2500 = vdwg.mxu0
    %v2501 = vand.u32 %v2258, 4294901760
    %v2502 = vsub.f32 %v2258, %v2501
    %2503 = vmatprep.subr.mxu0 %v2502
    %v2504 = vand.u32 %v2257, 4294901760
    %v2505 = vsub.f32 %v2257, %v2504
    %2506 = vmatpush1.msra.mxu0 %v2505
    %v2507 = vand.u32 %v2261, 4294901760
    %v2508 = vsub.f32 %v2261, %v2507
    %2509 = vmatprep.subr.mxu0 %v2508
    %v2510 = vand.u32 %v2260, 4294901760
    %v2511 = vsub.f32 %v2260, %v2510
    %2512 = vmatpush1.msra.mxu0 %v2511
    %v2513 = vand.u32 %v2264, 4294901760
    %v2514 = vsub.f32 %v2264, %v2513
    %2515 = vmatprep.subr.mxu0 %v2514
    %v2516 = vand.u32 %v2263, 4294901760
    %v2517 = vsub.f32 %v2263, %v2516
    %2518 = vmatpush1.msra.mxu0 %v2517
    %v2519 = vand.u32 %v2267, 4294901760
    %v2520 = vsub.f32 %v2267, %v2519
    %2521 = vmatprep.subr.mxu0 %v2520
    %v2522 = vand.u32 %v2266, 4294901760
    %v2523 = vsub.f32 %v2266, %v2522
    %2524 = vmatpush1.msra.mxu0 %v2523
    %2525 = vmatprep.subr.mxu0 0.0
    %2526 = vmatpush1.msra.mxu0 0.0
    %2527 = vmatprep.subr.mxu0 0.0
    %2528 = vmatpush1.msra.mxu0 0.0
    %2529 = vmatprep.subr.mxu0 0.0
    %2530 = vmatpush1.msra.mxu0 0.0
    %2531 = vmatprep.subr.mxu0 0.0
    %2532 = vmatpush1.msra.mxu0 0.0
    %2533 = vmatprep.subr.mxu0 0.0
    %2534 = vmatpush1.msra.mxu0 0.0
    %2535 = vmatprep.subr.mxu0 0.0
    %2536 = vmatpush1.msra.mxu0 0.0
    %2537 = vmatprep.subr.mxu0 0.0
    %2538 = vmatpush1.msra.mxu0 0.0
    %2539 = vmatprep.subr.mxu0 0.0
    %2540 = vmatpush1.msra.mxu0 0.0
    %2541 = vmatprep.subr.mxu0 0.0
    %2542 = vmatpush1.msra.mxu0 0.0
    %2543 = vmatprep.subr.mxu0 0.0
    %2544 = vmatpush1.msra.mxu0 0.0
    %2545 = vmatprep.subr.mxu0 0.0
    %2546 = vmatpush1.msra.mxu0 0.0
    %2547 = vmatprep.subr.mxu0 0.0
    %2548 = vmatpush1.msra.mxu0 0.0
    %2549 = vmatprep.subr.mxu0 0.0
    %2550 = vmatpush1.msra.mxu0 0.0
    %2551 = vmatprep.subr.mxu0 0.0
    %2552 = vmatpush1.msra.mxu0 0.0
    %2553 = vmatprep.subr.mxu0 0.0
    %2554 = vmatpush1.msra.mxu0 0.0
    %2555 = vmatprep.subr.mxu0 0.0
    %2556 = vmatpush1.msra.mxu0 0.0
    %2557 = vmatprep.subr.mxu0 0.0
    %2558 = vmatpush1.msra.mxu0 0.0
    %2559 = vmatprep.subr.mxu0 0.0
    %2560 = vmatpush1.msra.mxu0 0.0
    %2561 = vmatprep.subr.mxu0 0.0
    %2562 = vmatpush1.msra.mxu0 0.0
    %2563 = vmatprep.subr.mxu0 0.0
    %2564 = vmatpush1.msra.mxu0 0.0
    %2565 = vmatprep.subr.mxu0 0.0
    %2566 = vmatpush1.msra.mxu0 0.0
    %2567 = vmatprep.subr.mxu0 0.0
    %2568 = vmatpush1.msra.mxu0 0.0
    %2569 = vmatprep.subr.mxu0 0.0
    %2570 = vmatpush1.msra.mxu0 0.0
    %2571 = vmatprep.subr.mxu0 0.0
    %2572 = vmatpush1.msra.mxu0 0.0
    %2573 = vmatprep.subr.mxu0 0.0
    %2574 = vmatpush1.msra.mxu0 0.0
    %2575 = vmatprep.subr.mxu0 0.0
    %2576 = vmatpush1.msra.mxu0 0.0
    %2577 = vmatprep.subr.mxu0 0.0
    %2578 = vmatpush1.msra.mxu0 0.0
    %2579 = vmatprep.subr.mxu0 0.0
    %2580 = vmatpush1.msra.mxu0 0.0
    %2581 = vmatprep.mubr.f32.mxu0 0.0
    %v2582 = vand.u32 %v2282, 4294901760
    %v2583 = vsub.f32 %v2282, %v2582
    %2584 = vmatmul.mubr.f32.gmra.mrb[0].mxu0 %v2583
    %v2585 = vpop.f32.mrb[0].mxu0
    %v2586 = vadd.f32 %v2490, %v2585
    %v2587 = vpop.f32.mrb[0].mxu0
    %v2588 = vadd.f32 %v2492, %v2587
    %2589 = vmatprep.mubr.f32.mxu0 0.0
    %v2590 = vand.u32 %v2285, 4294901760
    %v2591 = vsub.f32 %v2285, %v2590
    %2592 = vmatmul.mubr.f32.gmra.mrb[0].mxu0 %v2591
    %v2593 = vpop.f32.mrb[0].mxu0
    %v2594 = vadd.f32 %v2497, %v2593
    %v2595 = vpop.f32.mrb[0].mxu0
    %v2596 = vadd.f32 %v2499, %v2595
    %2597 = vdwg.mxu0
    %v2598 = vand.u32 %v2258, 4294901760
    %2599 = vmatprep.subr.mxu0 %v2598
    %v2600 = vand.u32 %v2257, 4294901760
    %2601 = vmatpush1.msra.mxu0 %v2600
    %v2602 = vand.u32 %v2261, 4294901760
    %2603 = vmatprep.subr.mxu0 %v2602
    %v2604 = vand.u32 %v2260, 4294901760
    %2605 = vmatpush1.msra.mxu0 %v2604
    %v2606 = vand.u32 %v2264, 4294901760
    %2607 = vmatprep.subr.mxu0 %v2606
    %v2608 = vand.u32 %v2263, 4294901760
    %2609 = vmatpush1.msra.mxu0 %v2608
    %v2610 = vand.u32 %v2267, 4294901760
    %2611 = vmatprep.subr.mxu0 %v2610
    %v2612 = vand.u32 %v2266, 4294901760
    %2613 = vmatpush1.msra.mxu0 %v2612
    %2614 = vmatprep.subr.mxu0 0.0
    %2615 = vmatpush1.msra.mxu0 0.0
    %2616 = vmatprep.subr.mxu0 0.0
    %2617 = vmatpush1.msra.mxu0 0.0
    %2618 = vmatprep.subr.mxu0 0.0
    %2619 = vmatpush1.msra.mxu0 0.0
    %2620 = vmatprep.subr.mxu0 0.0
    %2621 = vmatpush1.msra.mxu0 0.0
    %2622 = vmatprep.subr.mxu0 0.0
    %2623 = vmatpush1.msra.mxu0 0.0
    %2624 = vmatprep.subr.mxu0 0.0
    %2625 = vmatpush1.msra.mxu0 0.0
    %2626 = vmatprep.subr.mxu0 0.0
    %2627 = vmatpush1.msra.mxu0 0.0
    %2628 = vmatprep.subr.mxu0 0.0
    %2629 = vmatpush1.msra.mxu0 0.0
    %2630 = vmatprep.subr.mxu0 0.0
    %2631 = vmatpush1.msra.mxu0 0.0
    %2632 = vmatprep.subr.mxu0 0.0
    %2633 = vmatpush1.msra.mxu0 0.0
    %2634 = vmatprep.subr.mxu0 0.0
    %2635 = vmatpush1.msra.mxu0 0.0
    %2636 = vmatprep.subr.mxu0 0.0
    %2637 = vmatpush1.msra.mxu0 0.0
    %2638 = vmatprep.subr.mxu0 0.0
    %2639 = vmatpush1.msra.mxu0 0.0
    %2640 = vmatprep.subr.mxu0 0.0
    %2641 = vmatpush1.msra.mxu0 0.0
    %2642 = vmatprep.subr.mxu0 0.0
    %2643 = vmatpush1.msra.mxu0 0.0
    %2644 = vmatprep.subr.mxu0 0.0
    %2645 = vmatpush1.msra.mxu0 0.0
    %2646 = vmatprep.subr.mxu0 0.0
    %2647 = vmatpush1.msra.mxu0 0.0
    %2648 = vmatprep.subr.mxu0 0.0
    %2649 = vmatpush1.msra.mxu0 0.0
    %2650 = vmatprep.subr.mxu0 0.0
    %2651 = vmatpush1.msra.mxu0 0.0
    %2652 = vmatprep.subr.mxu0 0.0
    %2653 = vmatpush1.msra.mxu0 0.0
    %2654 = vmatprep.subr.mxu0 0.0
    %2655 = vmatpush1.msra.mxu0 0.0
    %2656 = vmatprep.subr.mxu0 0.0
    %2657 = vmatpush1.msra.mxu0 0.0
    %2658 = vmatprep.subr.mxu0 0.0
    %2659 = vmatpush1.msra.mxu0 0.0
    %2660 = vmatprep.subr.mxu0 0.0
    %2661 = vmatpush1.msra.mxu0 0.0
    %2662 = vmatprep.subr.mxu0 0.0
    %2663 = vmatpush1.msra.mxu0 0.0
    %2664 = vmatprep.subr.mxu0 0.0
    %2665 = vmatpush1.msra.mxu0 0.0
    %2666 = vmatprep.subr.mxu0 0.0
    %2667 = vmatpush1.msra.mxu0 0.0
    %2668 = vmatprep.subr.mxu0 0.0
    %2669 = vmatpush1.msra.mxu0 0.0
    %2670 = vmatprep.mubr.f32.mxu0 0.0
    %v2671 = vand.u32 %v2282, 4294901760
    %v2672 = vsub.f32 %v2282, %v2671
    %v2673 = vand.u32 %v2672, 4294901760
    %2674 = vmatmul.mubr.f32.gmra.mrb[0].mxu0 %v2673
    %v2675 = vpop.f32.mrb[0].mxu0
    %v2676 = vadd.f32 %v2586, %v2675
    %v2677 = vpop.f32.mrb[0].mxu0
    %v2678 = vadd.f32 %v2588, %v2677
    %2679 = vmatprep.mubr.f32.mxu0 0.0
    %v2680 = vand.u32 %v2285, 4294901760
    %v2681 = vsub.f32 %v2285, %v2680
    %v2682 = vand.u32 %v2681, 4294901760
    %2683 = vmatmul.mubr.f32.gmra.mrb[0].mxu0 %v2682
    %v2684 = vpop.f32.mrb[0].mxu0
    %v2685 = vadd.f32 %v2594, %v2684
    %v2686 = vpop.f32.mrb[0].mxu0
    %v2687 = vadd.f32 %v2596, %v2686
    %2688 = vdwg.mxu0
    %v2689 = vand.u32 %v2258, 4294901760
    %v2690 = vsub.f32 %v2258, %v2689
    %v2691 = vand.u32 %v2690, 4294901760
    %2692 = vmatprep.subr.mxu0 %v2691
    %v2693 = vand.u32 %v2257, 4294901760
    %v2694 = vsub.f32 %v2257, %v2693
    %v2695 = vand.u32 %v2694, 4294901760
    %2696 = vmatpush1.msra.mxu0 %v2695
    %v2697 = vand.u32 %v2261, 4294901760
    %v2698 = vsub.f32 %v2261, %v2697
    %v2699 = vand.u32 %v2698, 4294901760
    %2700 = vmatprep.subr.mxu0 %v2699
    %v2701 = vand.u32 %v2260, 4294901760
    %v2702 = vsub.f32 %v2260, %v2701
    %v2703 = vand.u32 %v2702, 4294901760
    %2704 = vmatpush1.msra.mxu0 %v2703
    %v2705 = vand.u32 %v2264, 4294901760
    %v2706 = vsub.f32 %v2264, %v2705
    %v2707 = vand.u32 %v2706, 4294901760
    %2708 = vmatprep.subr.mxu0 %v2707
    %v2709 = vand.u32 %v2263, 4294901760
    %v2710 = vsub.f32 %v2263, %v2709
    %v2711 = vand.u32 %v2710, 4294901760
    %2712 = vmatpush1.msra.mxu0 %v2711
    %v2713 = vand.u32 %v2267, 4294901760
    %v2714 = vsub.f32 %v2267, %v2713
    %v2715 = vand.u32 %v2714, 4294901760
    %2716 = vmatprep.subr.mxu0 %v2715
    %v2717 = vand.u32 %v2266, 4294901760
    %v2718 = vsub.f32 %v2266, %v2717
    %v2719 = vand.u32 %v2718, 4294901760
    %2720 = vmatpush1.msra.mxu0 %v2719
    %2721 = vmatprep.subr.mxu0 0.0
    %2722 = vmatpush1.msra.mxu0 0.0
    %2723 = vmatprep.subr.mxu0 0.0
    %2724 = vmatpush1.msra.mxu0 0.0
    %2725 = vmatprep.subr.mxu0 0.0
    %2726 = vmatpush1.msra.mxu0 0.0
    %2727 = vmatprep.subr.mxu0 0.0
    %2728 = vmatpush1.msra.mxu0 0.0
    %2729 = vmatprep.subr.mxu0 0.0
    %2730 = vmatpush1.msra.mxu0 0.0
    %2731 = vmatprep.subr.mxu0 0.0
    %2732 = vmatpush1.msra.mxu0 0.0
    %2733 = vmatprep.subr.mxu0 0.0
    %2734 = vmatpush1.msra.mxu0 0.0
    %2735 = vmatprep.subr.mxu0 0.0
    %2736 = vmatpush1.msra.mxu0 0.0
    %2737 = vmatprep.subr.mxu0 0.0
    %2738 = vmatpush1.msra.mxu0 0.0
    %2739 = vmatprep.subr.mxu0 0.0
    %2740 = vmatpush1.msra.mxu0 0.0
    %2741 = vmatprep.subr.mxu0 0.0
    %2742 = vmatpush1.msra.mxu0 0.0
    %2743 = vmatprep.subr.mxu0 0.0
    %2744 = vmatpush1.msra.mxu0 0.0
    %2745 = vmatprep.subr.mxu0 0.0
    %2746 = vmatpush1.msra.mxu0 0.0
    %2747 = vmatprep.subr.mxu0 0.0
    %2748 = vmatpush1.msra.mxu0 0.0
    %2749 = vmatprep.subr.mxu0 0.0
    %2750 = vmatpush1.msra.mxu0 0.0
    %2751 = vmatprep.subr.mxu0 0.0
    %2752 = vmatpush1.msra.mxu0 0.0
    %2753 = vmatprep.subr.mxu0 0.0
    %2754 = vmatpush1.msra.mxu0 0.0
    %2755 = vmatprep.subr.mxu0 0.0
    %2756 = vmatpush1.msra.mxu0 0.0
    %2757 = vmatprep.subr.mxu0 0.0
    %2758 = vmatpush1.msra.mxu0 0.0
    %2759 = vmatprep.subr.mxu0 0.0
    %2760 = vmatpush1.msra.mxu0 0.0
    %2761 = vmatprep.subr.mxu0 0.0
    %2762 = vmatpush1.msra.mxu0 0.0
    %2763 = vmatprep.subr.mxu0 0.0
    %2764 = vmatpush1.msra.mxu0 0.0
    %2765 = vmatprep.subr.mxu0 0.0
    %2766 = vmatpush1.msra.mxu0 0.0
    %2767 = vmatprep.subr.mxu0 0.0
    %2768 = vmatpush1.msra.mxu0 0.0
    %2769 = vmatprep.subr.mxu0 0.0
    %2770 = vmatpush1.msra.mxu0 0.0
    %2771 = vmatprep.subr.mxu0 0.0
    %2772 = vmatpush1.msra.mxu0 0.0
    %2773 = vmatprep.subr.mxu0 0.0
    %2774 = vmatpush1.msra.mxu0 0.0
    %2775 = vmatprep.subr.mxu0 0.0
    %2776 = vmatpush1.msra.mxu0 0.0
    %2777 = vmatprep.mubr.f32.mxu0 0.0
    %v2778 = vand.u32 %v2282, 4294901760
    %2779 = vmatmul.mubr.f32.gmra.mrb[0].mxu0 %v2778
    %v2780 = vpop.f32.mrb[0].mxu0
    %v2781 = vadd.f32 %v2676, %v2780
    %v2782 = vpop.f32.mrb[0].mxu0
    %v2783 = vadd.f32 %v2678, %v2782
    %2784 = vmatprep.mubr.f32.mxu0 0.0
    %v2785 = vand.u32 %v2285, 4294901760
    %2786 = vmatmul.mubr.f32.gmra.mrb[0].mxu0 %v2785
    %v2787 = vpop.f32.mrb[0].mxu0
    %v2788 = vadd.f32 %v2685, %v2787
    %v2789 = vpop.f32.mrb[0].mxu0
    %v2790 = vadd.f32 %v2687, %v2789
    %2791 = vdwg.mxu0
    %v2792 = vand.u32 %v2258, 4294901760
    %2793 = vmatprep.subr.mxu0 %v2792
    %v2794 = vand.u32 %v2257, 4294901760
    %2795 = vmatpush1.msra.mxu0 %v2794
    %v2796 = vand.u32 %v2261, 4294901760
    %2797 = vmatprep.subr.mxu0 %v2796
    %v2798 = vand.u32 %v2260, 4294901760
    %2799 = vmatpush1.msra.mxu0 %v2798
    %v2800 = vand.u32 %v2264, 4294901760
    %2801 = vmatprep.subr.mxu0 %v2800
    %v2802 = vand.u32 %v2263, 4294901760
    %2803 = vmatpush1.msra.mxu0 %v2802
    %v2804 = vand.u32 %v2267, 4294901760
    %2805 = vmatprep.subr.mxu0 %v2804
    %v2806 = vand.u32 %v2266, 4294901760
    %2807 = vmatpush1.msra.mxu0 %v2806
    %2808 = vmatprep.subr.mxu0 0.0
    %2809 = vmatpush1.msra.mxu0 0.0
    %2810 = vmatprep.subr.mxu0 0.0
    %2811 = vmatpush1.msra.mxu0 0.0
    %2812 = vmatprep.subr.mxu0 0.0
    %2813 = vmatpush1.msra.mxu0 0.0
    %2814 = vmatprep.subr.mxu0 0.0
    %2815 = vmatpush1.msra.mxu0 0.0
    %2816 = vmatprep.subr.mxu0 0.0
    %2817 = vmatpush1.msra.mxu0 0.0
    %2818 = vmatprep.subr.mxu0 0.0
    %2819 = vmatpush1.msra.mxu0 0.0
    %2820 = vmatprep.subr.mxu0 0.0
    %2821 = vmatpush1.msra.mxu0 0.0
    %2822 = vmatprep.subr.mxu0 0.0
    %2823 = vmatpush1.msra.mxu0 0.0
    %2824 = vmatprep.subr.mxu0 0.0
    %2825 = vmatpush1.msra.mxu0 0.0
    %2826 = vmatprep.subr.mxu0 0.0
    %2827 = vmatpush1.msra.mxu0 0.0
    %2828 = vmatprep.subr.mxu0 0.0
    %2829 = vmatpush1.msra.mxu0 0.0
    %2830 = vmatprep.subr.mxu0 0.0
    %2831 = vmatpush1.msra.mxu0 0.0
    %2832 = vmatprep.subr.mxu0 0.0
    %2833 = vmatpush1.msra.mxu0 0.0
    %2834 = vmatprep.subr.mxu0 0.0
    %2835 = vmatpush1.msra.mxu0 0.0
    %2836 = vmatprep.subr.mxu0 0.0
    %2837 = vmatpush1.msra.mxu0 0.0
    %2838 = vmatprep.subr.mxu0 0.0
    %2839 = vmatpush1.msra.mxu0 0.0
    %2840 = vmatprep.subr.mxu0 0.0
    %2841 = vmatpush1.msra.mxu0 0.0
    %2842 = vmatprep.subr.mxu0 0.0
    %2843 = vmatpush1.msra.mxu0 0.0
    %2844 = vmatprep.subr.mxu0 0.0
    %2845 = vmatpush1.msra.mxu0 0.0
    %2846 = vmatprep.subr.mxu0 0.0
    %2847 = vmatpush1.msra.mxu0 0.0
    %2848 = vmatprep.subr.mxu0 0.0
    %2849 = vmatpush1.msra.mxu0 0.0
    %2850 = vmatprep.subr.mxu0 0.0
    %2851 = vmatpush1.msra.mxu0 0.0
    %2852 = vmatprep.subr.mxu0 0.0
    %2853 = vmatpush1.msra.mxu0 0.0
    %2854 = vmatprep.subr.mxu0 0.0
    %2855 = vmatpush1.msra.mxu0 0.0
    %2856 = vmatprep.subr.mxu0 0.0
    %2857 = vmatpush1.msra.mxu0 0.0
    %2858 = vmatprep.subr.mxu0 0.0
    %2859 = vmatpush1.msra.mxu0 0.0
    %2860 = vmatprep.subr.mxu0 0.0
    %2861 = vmatpush1.msra.mxu0 0.0
    %2862 = vmatprep.subr.mxu0 0.0
    %2863 = vmatpush1.msra.mxu0 0.0
    %2864 = vmatprep.mubr.f32.mxu0 0.0
    %v2865 = vand.u32 %v2282, 4294901760
    %2866 = vmatmul.mubr.f32.gmra.mrb[0].mxu0 %v2865
    %v2867 = vpop.f32.mrb[0].mxu0
    %v2868 = vadd.f32 %v2781, %v2867
    %v2869 = vpop.f32.mrb[0].mxu0
    %v2870 = vadd.f32 %v2783, %v2869
    %2871 = vmatprep.mubr.f32.mxu0 0.0
    %v2872 = vand.u32 %v2285, 4294901760
    %2873 = vmatmul.mubr.f32.gmra.mrb[0].mxu0 %v2872
    %v2874 = vpop.f32.mrb[0].mxu0
    %v2875 = vadd.f32 %v2788, %v2874
    %v2876 = vpop.f32.mrb[0].mxu0
    %v2877 = vadd.f32 %v2790, %v2876
    %2878 = vdwg.mxu0
    %2879 = vmatprep.subr.mxu0 0.0
    %v2880 = vand.u32 %v2259, 4294901760
    %2881 = vmatpush1.msra.mxu0 %v2880
    %2882 = vmatprep.subr.mxu0 0.0
    %v2883 = vand.u32 %v2262, 4294901760
    %2884 = vmatpush1.msra.mxu0 %v2883
    %2885 = vmatprep.subr.mxu0 0.0
    %v2886 = vand.u32 %v2265, 4294901760
    %2887 = vmatpush1.msra.mxu0 %v2886
    %2888 = vmatprep.subr.mxu0 0.0
    %v2889 = vand.u32 %v2268, 4294901760
    %2890 = vmatpush1.msra.mxu0 %v2889
    %2891 = vmatprep.subr.mxu0 0.0
    %2892 = vmatpush1.msra.mxu0 0.0
    %2893 = vmatprep.subr.mxu0 0.0
    %2894 = vmatpush1.msra.mxu0 0.0
    %2895 = vmatprep.subr.mxu0 0.0
    %2896 = vmatpush1.msra.mxu0 0.0
    %2897 = vmatprep.subr.mxu0 0.0
    %2898 = vmatpush1.msra.mxu0 0.0
    %2899 = vmatprep.subr.mxu0 0.0
    %2900 = vmatpush1.msra.mxu0 0.0
    %2901 = vmatprep.subr.mxu0 0.0
    %2902 = vmatpush1.msra.mxu0 0.0
    %2903 = vmatprep.subr.mxu0 0.0
    %2904 = vmatpush1.msra.mxu0 0.0
    %2905 = vmatprep.subr.mxu0 0.0
    %2906 = vmatpush1.msra.mxu0 0.0
    %2907 = vmatprep.subr.mxu0 0.0
    %2908 = vmatpush1.msra.mxu0 0.0
    %2909 = vmatprep.subr.mxu0 0.0
    %2910 = vmatpush1.msra.mxu0 0.0
    %2911 = vmatprep.subr.mxu0 0.0
    %2912 = vmatpush1.msra.mxu0 0.0
    %2913 = vmatprep.subr.mxu0 0.0
    %2914 = vmatpush1.msra.mxu0 0.0
    %2915 = vmatprep.subr.mxu0 0.0
    %2916 = vmatpush1.msra.mxu0 0.0
    %2917 = vmatprep.subr.mxu0 0.0
    %2918 = vmatpush1.msra.mxu0 0.0
    %2919 = vmatprep.subr.mxu0 0.0
    %2920 = vmatpush1.msra.mxu0 0.0
    %2921 = vmatprep.subr.mxu0 0.0
    %2922 = vmatpush1.msra.mxu0 0.0
    %2923 = vmatprep.subr.mxu0 0.0
    %2924 = vmatpush1.msra.mxu0 0.0
    %2925 = vmatprep.subr.mxu0 0.0
    %2926 = vmatpush1.msra.mxu0 0.0
    %2927 = vmatprep.subr.mxu0 0.0
    %2928 = vmatpush1.msra.mxu0 0.0
    %2929 = vmatprep.subr.mxu0 0.0
    %2930 = vmatpush1.msra.mxu0 0.0
    %2931 = vmatprep.subr.mxu0 0.0
    %2932 = vmatpush1.msra.mxu0 0.0
    %2933 = vmatprep.subr.mxu0 0.0
    %2934 = vmatpush1.msra.mxu0 0.0
    %2935 = vmatprep.subr.mxu0 0.0
    %2936 = vmatpush1.msra.mxu0 0.0
    %2937 = vmatprep.subr.mxu0 0.0
    %2938 = vmatpush1.msra.mxu0 0.0
    %2939 = vmatprep.subr.mxu0 0.0
    %2940 = vmatpush1.msra.mxu0 0.0
    %2941 = vmatprep.subr.mxu0 0.0
    %2942 = vmatpush1.msra.mxu0 0.0
    %2943 = vmatprep.subr.mxu0 0.0
    %2944 = vmatpush1.msra.mxu0 0.0
    %2945 = vmatprep.subr.mxu0 0.0
    %2946 = vmatpush1.msra.mxu0 0.0
    %2947 = vmatprep.mubr.f32.mxu0 0.0
    %v2948 = vand.u32 %v2282, 4294901760
    %v2949 = vsub.f32 %v2282, %v2948
    %v2950 = vand.u32 %v2949, 4294901760
    %v2951 = vsub.f32 %v2949, %v2950
    %v2952 = vand.u32 %v2951, 4294901760
    %2953 = vmatmul.mubr.f32.gmra.mrb[0].mxu0 %v2952
    %v2954 = vpop.f32.mrb[0].mxu0
    %v2955 = vadd.f32 %v2280, %v2954
    %v2956 = vpop.f32.mrb[0].mxu0
    %2957 = vmatprep.mubr.f32.mxu0 0.0
    %v2958 = vand.u32 %v2285, 4294901760
    %v2959 = vsub.f32 %v2285, %v2958
    %v2960 = vand.u32 %v2959, 4294901760
    %v2961 = vsub.f32 %v2959, %v2960
    %v2962 = vand.u32 %v2961, 4294901760
    %2963 = vmatmul.mubr.f32.gmra.mrb[0].mxu0 %v2962
    %v2964 = vpop.f32.mrb[0].mxu0
    %v2965 = vadd.f32 %v2280, %v2964
    %v2966 = vpop.f32.mrb[0].mxu0
    %2967 = vdwg.mxu0
    %2968 = vmatprep.subr.mxu0 0.0
    %v2969 = vand.u32 %v2259, 4294901760
    %v2970 = vsub.f32 %v2259, %v2969
    %v2971 = vand.u32 %v2970, 4294901760
    %v2972 = vsub.f32 %v2970, %v2971
    %v2973 = vand.u32 %v2972, 4294901760
    %2974 = vmatpush1.msra.mxu0 %v2973
    %2975 = vmatprep.subr.mxu0 0.0
    %v2976 = vand.u32 %v2262, 4294901760
    %v2977 = vsub.f32 %v2262, %v2976
    %v2978 = vand.u32 %v2977, 4294901760
    %v2979 = vsub.f32 %v2977, %v2978
    %v2980 = vand.u32 %v2979, 4294901760
    %2981 = vmatpush1.msra.mxu0 %v2980
    %2982 = vmatprep.subr.mxu0 0.0
    %v2983 = vand.u32 %v2265, 4294901760
    %v2984 = vsub.f32 %v2265, %v2983
    %v2985 = vand.u32 %v2984, 4294901760
    %v2986 = vsub.f32 %v2984, %v2985
    %v2987 = vand.u32 %v2986, 4294901760
    %2988 = vmatpush1.msra.mxu0 %v2987
    %2989 = vmatprep.subr.mxu0 0.0
    %v2990 = vand.u32 %v2268, 4294901760
    %v2991 = vsub.f32 %v2268, %v2990
    %v2992 = vand.u32 %v2991, 4294901760
    %v2993 = vsub.f32 %v2991, %v2992
    %v2994 = vand.u32 %v2993, 4294901760
    %2995 = vmatpush1.msra.mxu0 %v2994
    %2996 = vmatprep.subr.mxu0 0.0
    %2997 = vmatpush1.msra.mxu0 0.0
    %2998 = vmatprep.subr.mxu0 0.0
    %2999 = vmatpush1.msra.mxu0 0.0
    %3000 = vmatprep.subr.mxu0 0.0
    %3001 = vmatpush1.msra.mxu0 0.0
    %3002 = vmatprep.subr.mxu0 0.0
    %3003 = vmatpush1.msra.mxu0 0.0
    %3004 = vmatprep.subr.mxu0 0.0
    %3005 = vmatpush1.msra.mxu0 0.0
    %3006 = vmatprep.subr.mxu0 0.0
    %3007 = vmatpush1.msra.mxu0 0.0
    %3008 = vmatprep.subr.mxu0 0.0
    %3009 = vmatpush1.msra.mxu0 0.0
    %3010 = vmatprep.subr.mxu0 0.0
    %3011 = vmatpush1.msra.mxu0 0.0
    %3012 = vmatprep.subr.mxu0 0.0
    %3013 = vmatpush1.msra.mxu0 0.0
    %3014 = vmatprep.subr.mxu0 0.0
    %3015 = vmatpush1.msra.mxu0 0.0
    %3016 = vmatprep.subr.mxu0 0.0
    %3017 = vmatpush1.msra.mxu0 0.0
    %3018 = vmatprep.subr.mxu0 0.0
    %3019 = vmatpush1.msra.mxu0 0.0
    %3020 = vmatprep.subr.mxu0 0.0
    %3021 = vmatpush1.msra.mxu0 0.0
    %3022 = vmatprep.subr.mxu0 0.0
    %3023 = vmatpush1.msra.mxu0 0.0
    %3024 = vmatprep.subr.mxu0 0.0
    %3025 = vmatpush1.msra.mxu0 0.0
    %3026 = vmatprep.subr.mxu0 0.0
    %3027 = vmatpush1.msra.mxu0 0.0
    %3028 = vmatprep.subr.mxu0 0.0
    %3029 = vmatpush1.msra.mxu0 0.0
    %3030 = vmatprep.subr.mxu0 0.0
    %3031 = vmatpush1.msra.mxu0 0.0
    %3032 = vmatprep.subr.mxu0 0.0
    %3033 = vmatpush1.msra.mxu0 0.0
    %3034 = vmatprep.subr.mxu0 0.0
    %3035 = vmatpush1.msra.mxu0 0.0
    %3036 = vmatprep.subr.mxu0 0.0
    %3037 = vmatpush1.msra.mxu0 0.0
    %3038 = vmatprep.subr.mxu0 0.0
    %3039 = vmatpush1.msra.mxu0 0.0
    %3040 = vmatprep.subr.mxu0 0.0
    %3041 = vmatpush1.msra.mxu0 0.0
    %3042 = vmatprep.subr.mxu0 0.0
    %3043 = vmatpush1.msra.mxu0 0.0
    %3044 = vmatprep.subr.mxu0 0.0
    %3045 = vmatpush1.msra.mxu0 0.0
    %3046 = vmatprep.subr.mxu0 0.0
    %3047 = vmatpush1.msra.mxu0 0.0
    %3048 = vmatprep.subr.mxu0 0.0
    %3049 = vmatpush1.msra.mxu0 0.0
    %3050 = vmatprep.subr.mxu0 0.0
    %3051 = vmatpush1.msra.mxu0 0.0
    %3052 = vmatprep.mubr.f32.mxu0 0.0
    %v3053 = vand.u32 %v2282, 4294901760
    %3054 = vmatmul.mubr.f32.gmra.mrb[0].mxu0 %v3053
    %v3055 = vpop.f32.mrb[0].mxu0
    %v3056 = vadd.f32 %v2955, %v3055
    %v3057 = vpop.f32.mrb[0].mxu0
    %3058 = vmatprep.mubr.f32.mxu0 0.0
    %v3059 = vand.u32 %v2285, 4294901760
    %3060 = vmatmul.mubr.f32.gmra.mrb[0].mxu0 %v3059
    %v3061 = vpop.f32.mrb[0].mxu0
    %v3062 = vadd.f32 %v2965, %v3061
    %v3063 = vpop.f32.mrb[0].mxu0
    %3064 = vdwg.mxu0
    %3065 = vmatprep.subr.mxu0 0.0
    %v3066 = vand.u32 %v2259, 4294901760
    %v3067 = vsub.f32 %v2259, %v3066
    %3068 = vmatpush1.msra.mxu0 %v3067
    %3069 = vmatprep.subr.mxu0 0.0
    %v3070 = vand.u32 %v2262, 4294901760
    %v3071 = vsub.f32 %v2262, %v3070
    %3072 = vmatpush1.msra.mxu0 %v3071
    %3073 = vmatprep.subr.mxu0 0.0
    %v3074 = vand.u32 %v2265, 4294901760
    %v3075 = vsub.f32 %v2265, %v3074
    %3076 = vmatpush1.msra.mxu0 %v3075
    %3077 = vmatprep.subr.mxu0 0.0
    %v3078 = vand.u32 %v2268, 4294901760
    %v3079 = vsub.f32 %v2268, %v3078
    %3080 = vmatpush1.msra.mxu0 %v3079
    %3081 = vmatprep.subr.mxu0 0.0
    %3082 = vmatpush1.msra.mxu0 0.0
    %3083 = vmatprep.subr.mxu0 0.0
    %3084 = vmatpush1.msra.mxu0 0.0
    %3085 = vmatprep.subr.mxu0 0.0
    %3086 = vmatpush1.msra.mxu0 0.0
    %3087 = vmatprep.subr.mxu0 0.0
    %3088 = vmatpush1.msra.mxu0 0.0
    %3089 = vmatprep.subr.mxu0 0.0
    %3090 = vmatpush1.msra.mxu0 0.0
    %3091 = vmatprep.subr.mxu0 0.0
    %3092 = vmatpush1.msra.mxu0 0.0
    %3093 = vmatprep.subr.mxu0 0.0
    %3094 = vmatpush1.msra.mxu0 0.0
    %3095 = vmatprep.subr.mxu0 0.0
    %3096 = vmatpush1.msra.mxu0 0.0
    %3097 = vmatprep.subr.mxu0 0.0
    %3098 = vmatpush1.msra.mxu0 0.0
    %3099 = vmatprep.subr.mxu0 0.0
    %3100 = vmatpush1.msra.mxu0 0.0
    %3101 = vmatprep.subr.mxu0 0.0
    %3102 = vmatpush1.msra.mxu0 0.0
    %3103 = vmatprep.subr.mxu0 0.0
    %3104 = vmatpush1.msra.mxu0 0.0
    %3105 = vmatprep.subr.mxu0 0.0
    %3106 = vmatpush1.msra.mxu0 0.0
    %3107 = vmatprep.subr.mxu0 0.0
    %3108 = vmatpush1.msra.mxu0 0.0
    %3109 = vmatprep.subr.mxu0 0.0
    %3110 = vmatpush1.msra.mxu0 0.0
    %3111 = vmatprep.subr.mxu0 0.0
    %3112 = vmatpush1.msra.mxu0 0.0
    %3113 = vmatprep.subr.mxu0 0.0
    %3114 = vmatpush1.msra.mxu0 0.0
    %3115 = vmatprep.subr.mxu0 0.0
    %3116 = vmatpush1.msra.mxu0 0.0
    %3117 = vmatprep.subr.mxu0 0.0
    %3118 = vmatpush1.msra.mxu0 0.0
    %3119 = vmatprep.subr.mxu0 0.0
    %3120 = vmatpush1.msra.mxu0 0.0
    %3121 = vmatprep.subr.mxu0 0.0
    %3122 = vmatpush1.msra.mxu0 0.0
    %3123 = vmatprep.subr.mxu0 0.0
    %3124 = vmatpush1.msra.mxu0 0.0
    %3125 = vmatprep.subr.mxu0 0.0
    %3126 = vmatpush1.msra.mxu0 0.0
    %3127 = vmatprep.subr.mxu0 0.0
    %3128 = vmatpush1.msra.mxu0 0.0
    %3129 = vmatprep.subr.mxu0 0.0
    %3130 = vmatpush1.msra.mxu0 0.0
    %3131 = vmatprep.subr.mxu0 0.0
    %3132 = vmatpush1.msra.mxu0 0.0
    %3133 = vmatprep.subr.mxu0 0.0
    %3134 = vmatpush1.msra.mxu0 0.0
    %3135 = vmatprep.subr.mxu0 0.0
    %3136 = vmatpush1.msra.mxu0 0.0
    %3137 = vmatprep.mubr.f32.mxu0 0.0
    %v3138 = vand.u32 %v2282, 4294901760
    %v3139 = vsub.f32 %v2282, %v3138
    %3140 = vmatmul.mubr.f32.gmra.mrb[0].mxu0 %v3139
    %v3141 = vpop.f32.mrb[0].mxu0
    %v3142 = vadd.f32 %v3056, %v3141
    %v3143 = vpop.f32.mrb[0].mxu0
    %3144 = vmatprep.mubr.f32.mxu0 0.0
    %v3145 = vand.u32 %v2285, 4294901760
    %v3146 = vsub.f32 %v2285, %v3145
    %3147 = vmatmul.mubr.f32.gmra.mrb[0].mxu0 %v3146
    %v3148 = vpop.f32.mrb[0].mxu0
    %v3149 = vadd.f32 %v3062, %v3148
    %v3150 = vpop.f32.mrb[0].mxu0
    %3151 = vdwg.mxu0
    %3152 = vmatprep.subr.mxu0 0.0
    %v3153 = vand.u32 %v2259, 4294901760
    %3154 = vmatpush1.msra.mxu0 %v3153
    %3155 = vmatprep.subr.mxu0 0.0
    %v3156 = vand.u32 %v2262, 4294901760
    %3157 = vmatpush1.msra.mxu0 %v3156
    %3158 = vmatprep.subr.mxu0 0.0
    %v3159 = vand.u32 %v2265, 4294901760
    %3160 = vmatpush1.msra.mxu0 %v3159
    %3161 = vmatprep.subr.mxu0 0.0
    %v3162 = vand.u32 %v2268, 4294901760
    %3163 = vmatpush1.msra.mxu0 %v3162
    %3164 = vmatprep.subr.mxu0 0.0
    %3165 = vmatpush1.msra.mxu0 0.0
    %3166 = vmatprep.subr.mxu0 0.0
    %3167 = vmatpush1.msra.mxu0 0.0
    %3168 = vmatprep.subr.mxu0 0.0
    %3169 = vmatpush1.msra.mxu0 0.0
    %3170 = vmatprep.subr.mxu0 0.0
    %3171 = vmatpush1.msra.mxu0 0.0
    %3172 = vmatprep.subr.mxu0 0.0
    %3173 = vmatpush1.msra.mxu0 0.0
    %3174 = vmatprep.subr.mxu0 0.0
    %3175 = vmatpush1.msra.mxu0 0.0
    %3176 = vmatprep.subr.mxu0 0.0
    %3177 = vmatpush1.msra.mxu0 0.0
    %3178 = vmatprep.subr.mxu0 0.0
    %3179 = vmatpush1.msra.mxu0 0.0
    %3180 = vmatprep.subr.mxu0 0.0
    %3181 = vmatpush1.msra.mxu0 0.0
    %3182 = vmatprep.subr.mxu0 0.0
    %3183 = vmatpush1.msra.mxu0 0.0
    %3184 = vmatprep.subr.mxu0 0.0
    %3185 = vmatpush1.msra.mxu0 0.0
    %3186 = vmatprep.subr.mxu0 0.0
    %3187 = vmatpush1.msra.mxu0 0.0
    %3188 = vmatprep.subr.mxu0 0.0
    %3189 = vmatpush1.msra.mxu0 0.0
    %3190 = vmatprep.subr.mxu0 0.0
    %3191 = vmatpush1.msra.mxu0 0.0
    %3192 = vmatprep.subr.mxu0 0.0
    %3193 = vmatpush1.msra.mxu0 0.0
    %3194 = vmatprep.subr.mxu0 0.0
    %3195 = vmatpush1.msra.mxu0 0.0
    %3196 = vmatprep.subr.mxu0 0.0
    %3197 = vmatpush1.msra.mxu0 0.0
    %3198 = vmatprep.subr.mxu0 0.0
    %3199 = vmatpush1.msra.mxu0 0.0
    %3200 = vmatprep.subr.mxu0 0.0
    %3201 = vmatpush1.msra.mxu0 0.0
    %3202 = vmatprep.subr.mxu0 0.0
    %3203 = vmatpush1.msra.mxu0 0.0
    %3204 = vmatprep.subr.mxu0 0.0
    %3205 = vmatpush1.msra.mxu0 0.0
    %3206 = vmatprep.subr.mxu0 0.0
    %3207 = vmatpush1.msra.mxu0 0.0
    %3208 = vmatprep.subr.mxu0 0.0
    %3209 = vmatpush1.msra.mxu0 0.0
    %3210 = vmatprep.subr.mxu0 0.0
    %3211 = vmatpush1.msra.mxu0 0.0
    %3212 = vmatprep.subr.mxu0 0.0
    %3213 = vmatpush1.msra.mxu0 0.0
    %3214 = vmatprep.subr.mxu0 0.0
    %3215 = vmatpush1.msra.mxu0 0.0
    %3216 = vmatprep.subr.mxu0 0.0
    %3217 = vmatpush1.msra.mxu0 0.0
    %3218 = vmatprep.subr.mxu0 0.0
    %3219 = vmatpush1.msra.mxu0 0.0
    %3220 = vmatprep.mubr.f32.mxu0 0.0
    %v3221 = vand.u32 %v2282, 4294901760
    %v3222 = vsub.f32 %v2282, %v3221
    %v3223 = vand.u32 %v3222, 4294901760
    %3224 = vmatmul.mubr.f32.gmra.mrb[0].mxu0 %v3223
    %v3225 = vpop.f32.mrb[0].mxu0
    %v3226 = vadd.f32 %v3142, %v3225
    %v3227 = vpop.f32.mrb[0].mxu0
    %3228 = vmatprep.mubr.f32.mxu0 0.0
    %v3229 = vand.u32 %v2285, 4294901760
    %v3230 = vsub.f32 %v2285, %v3229
    %v3231 = vand.u32 %v3230, 4294901760
    %3232 = vmatmul.mubr.f32.gmra.mrb[0].mxu0 %v3231
    %v3233 = vpop.f32.mrb[0].mxu0
    %v3234 = vadd.f32 %v3149, %v3233
    %v3235 = vpop.f32.mrb[0].mxu0
    %3236 = vdwg.mxu0
    %3237 = vmatprep.subr.mxu0 0.0
    %v3238 = vand.u32 %v2259, 4294901760
    %v3239 = vsub.f32 %v2259, %v3238
    %v3240 = vand.u32 %v3239, 4294901760
    %3241 = vmatpush1.msra.mxu0 %v3240
    %3242 = vmatprep.subr.mxu0 0.0
    %v3243 = vand.u32 %v2262, 4294901760
    %v3244 = vsub.f32 %v2262, %v3243
    %v3245 = vand.u32 %v3244, 4294901760
    %3246 = vmatpush1.msra.mxu0 %v3245
    %3247 = vmatprep.subr.mxu0 0.0
    %v3248 = vand.u32 %v2265, 4294901760
    %v3249 = vsub.f32 %v2265, %v3248
    %v3250 = vand.u32 %v3249, 4294901760
    %3251 = vmatpush1.msra.mxu0 %v3250
    %3252 = vmatprep.subr.mxu0 0.0
    %v3253 = vand.u32 %v2268, 4294901760
    %v3254 = vsub.f32 %v2268, %v3253
    %v3255 = vand.u32 %v3254, 4294901760
    %3256 = vmatpush1.msra.mxu0 %v3255
    %3257 = vmatprep.subr.mxu0 0.0
    %3258 = vmatpush1.msra.mxu0 0.0
    %3259 = vmatprep.subr.mxu0 0.0
    %3260 = vmatpush1.msra.mxu0 0.0
    %3261 = vmatprep.subr.mxu0 0.0
    %3262 = vmatpush1.msra.mxu0 0.0
    %3263 = vmatprep.subr.mxu0 0.0
    %3264 = vmatpush1.msra.mxu0 0.0
    %3265 = vmatprep.subr.mxu0 0.0
    %3266 = vmatpush1.msra.mxu0 0.0
    %3267 = vmatprep.subr.mxu0 0.0
    %3268 = vmatpush1.msra.mxu0 0.0
    %3269 = vmatprep.subr.mxu0 0.0
    %3270 = vmatpush1.msra.mxu0 0.0
    %3271 = vmatprep.subr.mxu0 0.0
    %3272 = vmatpush1.msra.mxu0 0.0
    %3273 = vmatprep.subr.mxu0 0.0
    %3274 = vmatpush1.msra.mxu0 0.0
    %3275 = vmatprep.subr.mxu0 0.0
    %3276 = vmatpush1.msra.mxu0 0.0
    %3277 = vmatprep.subr.mxu0 0.0
    %3278 = vmatpush1.msra.mxu0 0.0
    %3279 = vmatprep.subr.mxu0 0.0
    %3280 = vmatpush1.msra.mxu0 0.0
    %3281 = vmatprep.subr.mxu0 0.0
    %3282 = vmatpush1.msra.mxu0 0.0
    %3283 = vmatprep.subr.mxu0 0.0
    %3284 = vmatpush1.msra.mxu0 0.0
    %3285 = vmatprep.subr.mxu0 0.0
    %3286 = vmatpush1.msra.mxu0 0.0
    %3287 = vmatprep.subr.mxu0 0.0
    %3288 = vmatpush1.msra.mxu0 0.0
    %3289 = vmatprep.subr.mxu0 0.0
    %3290 = vmatpush1.msra.mxu0 0.0
    %3291 = vmatprep.subr.mxu0 0.0
    %3292 = vmatpush1.msra.mxu0 0.0
    %3293 = vmatprep.subr.mxu0 0.0
    %3294 = vmatpush1.msra.mxu0 0.0
    %3295 = vmatprep.subr.mxu0 0.0
    %3296 = vmatpush1.msra.mxu0 0.0
    %3297 = vmatprep.subr.mxu0 0.0
    %3298 = vmatpush1.msra.mxu0 0.0
    %3299 = vmatprep.subr.mxu0 0.0
    %3300 = vmatpush1.msra.mxu0 0.0
    %3301 = vmatprep.subr.mxu0 0.0
    %3302 = vmatpush1.msra.mxu0 0.0
    %3303 = vmatprep.subr.mxu0 0.0
    %3304 = vmatpush1.msra.mxu0 0.0
    %3305 = vmatprep.subr.mxu0 0.0
    %3306 = vmatpush1.msra.mxu0 0.0
    %3307 = vmatprep.subr.mxu0 0.0
    %3308 = vmatpush1.msra.mxu0 0.0
    %3309 = vmatprep.subr.mxu0 0.0
    %3310 = vmatpush1.msra.mxu0 0.0
    %3311 = vmatprep.subr.mxu0 0.0
    %3312 = vmatpush1.msra.mxu0 0.0
    %3313 = vmatprep.mubr.f32.mxu0 0.0
    %v3314 = vand.u32 %v2282, 4294901760
    %3315 = vmatmul.mubr.f32.gmra.mrb[0].mxu0 %v3314
    %v3316 = vpop.f32.mrb[0].mxu0
    %v3317 = vadd.f32 %v3226, %v3316
    %v3318 = vpop.f32.mrb[0].mxu0
    %3319 = vmatprep.mubr.f32.mxu0 0.0
    %v3320 = vand.u32 %v2285, 4294901760
    %3321 = vmatmul.mubr.f32.gmra.mrb[0].mxu0 %v3320
    %v3322 = vpop.f32.mrb[0].mxu0
    %v3323 = vadd.f32 %v3234, %v3322
    %v3324 = vpop.f32.mrb[0].mxu0
    %3325 = vdwg.mxu0
    %3326 = vmatprep.subr.mxu0 0.0
    %v3327 = vand.u32 %v2259, 4294901760
    %3328 = vmatpush1.msra.mxu0 %v3327
    %3329 = vmatprep.subr.mxu0 0.0
    %v3330 = vand.u32 %v2262, 4294901760
    %3331 = vmatpush1.msra.mxu0 %v3330
    %3332 = vmatprep.subr.mxu0 0.0
    %v3333 = vand.u32 %v2265, 4294901760
    %3334 = vmatpush1.msra.mxu0 %v3333
    %3335 = vmatprep.subr.mxu0 0.0
    %v3336 = vand.u32 %v2268, 4294901760
    %3337 = vmatpush1.msra.mxu0 %v3336
    %3338 = vmatprep.subr.mxu0 0.0
    %3339 = vmatpush1.msra.mxu0 0.0
    %3340 = vmatprep.subr.mxu0 0.0
    %3341 = vmatpush1.msra.mxu0 0.0
    %3342 = vmatprep.subr.mxu0 0.0
    %3343 = vmatpush1.msra.mxu0 0.0
    %3344 = vmatprep.subr.mxu0 0.0
    %3345 = vmatpush1.msra.mxu0 0.0
    %3346 = vmatprep.subr.mxu0 0.0
    %3347 = vmatpush1.msra.mxu0 0.0
    %3348 = vmatprep.subr.mxu0 0.0
    %3349 = vmatpush1.msra.mxu0 0.0
    %3350 = vmatprep.subr.mxu0 0.0
    %3351 = vmatpush1.msra.mxu0 0.0
    %3352 = vmatprep.subr.mxu0 0.0
    %3353 = vmatpush1.msra.mxu0 0.0
    %3354 = vmatprep.subr.mxu0 0.0
    %3355 = vmatpush1.msra.mxu0 0.0
    %3356 = vmatprep.subr.mxu0 0.0
    %3357 = vmatpush1.msra.mxu0 0.0
    %3358 = vmatprep.subr.mxu0 0.0
    %3359 = vmatpush1.msra.mxu0 0.0
    %3360 = vmatprep.subr.mxu0 0.0
    %3361 = vmatpush1.msra.mxu0 0.0
    %3362 = vmatprep.subr.mxu0 0.0
    %3363 = vmatpush1.msra.mxu0 0.0
    %3364 = vmatprep.subr.mxu0 0.0
    %3365 = vmatpush1.msra.mxu0 0.0
    %3366 = vmatprep.subr.mxu0 0.0
    %3367 = vmatpush1.msra.mxu0 0.0
    %3368 = vmatprep.subr.mxu0 0.0
    %3369 = vmatpush1.msra.mxu0 0.0
    %3370 = vmatprep.subr.mxu0 0.0
    %3371 = vmatpush1.msra.mxu0 0.0
    %3372 = vmatprep.subr.mxu0 0.0
    %3373 = vmatpush1.msra.mxu0 0.0
    %3374 = vmatprep.subr.mxu0 0.0
    %3375 = vmatpush1.msra.mxu0 0.0
    %3376 = vmatprep.subr.mxu0 0.0
    %3377 = vmatpush1.msra.mxu0 0.0
    %3378 = vmatprep.subr.mxu0 0.0
    %3379 = vmatpush1.msra.mxu0 0.0
    %3380 = vmatprep.subr.mxu0 0.0
    %3381 = vmatpush1.msra.mxu0 0.0
    %3382 = vmatprep.subr.mxu0 0.0
    %3383 = vmatpush1.msra.mxu0 0.0
    %3384 = vmatprep.subr.mxu0 0.0
    %3385 = vmatpush1.msra.mxu0 0.0
    %3386 = vmatprep.subr.mxu0 0.0
    %3387 = vmatpush1.msra.mxu0 0.0
    %3388 = vmatprep.subr.mxu0 0.0
    %3389 = vmatpush1.msra.mxu0 0.0
    %3390 = vmatprep.subr.mxu0 0.0
    %3391 = vmatpush1.msra.mxu0 0.0
    %3392 = vmatprep.subr.mxu0 0.0
    %3393 = vmatpush1.msra.mxu0 0.0
    %3394 = vmatprep.mubr.f32.mxu0 0.0
    %v3395 = vand.u32 %v2282, 4294901760
    %3396 = vmatmul.mubr.f32.gmra.mrb[0].mxu0 %v3395
    %v3397 = vpop.f32.mrb[0].mxu0
    %v3398 = vadd.f32 %v3317, %v3397
    %v3399 = vpop.f32.mrb[0].mxu0
    %3400 = vmatprep.mubr.f32.mxu0 0.0
    %v3401 = vand.u32 %v2285, 4294901760
    %3402 = vmatmul.mubr.f32.gmra.mrb[0].mxu0 %v3401
    %v3403 = vpop.f32.mrb[0].mxu0
    %v3404 = vadd.f32 %v3323, %v3403
    %v3405 = vpop.f32.mrb[0].mxu0
    %3406 = vdwg.mxu0
    %v3407 = vand.u32 2147483647, %v2868
    %v3408 = vand.u32 2147483647, %v2870
    %v3409 = vand.u32 2147483647, %v3398
    %v3410 = vand.u32 2147483647, %v2875
    %v3411 = vand.u32 2147483647, %v2877
    %v3412 = vand.u32 2147483647, %v3404
    %v3413 = vmul.f32 %v3407, 0.70710677
    %v3414 = vmul.f32 %v3408, 0.70710677
    %v3415 = vmul.f32 %v3409, 0.70710677
    %v3416 = vmul.f32 %v3410, 0.70710677
    %v3417 = vmul.f32 %v3411, 0.70710677
    %v3418 = vmul.f32 %v3412, 0.70710677
    %v3419 = vmul.f32 %v3413, 0.3275911
    %v3420 = vmul.f32 %v3414, 0.3275911
    %v3421 = vmul.f32 %v3415, 0.3275911
    %v3422 = vmul.f32 %v3416, 0.3275911
    %v3423 = vmul.f32 %v3417, 0.3275911
    %v3424 = vmul.f32 %v3418, 0.3275911
    %v3425 = vadd.f32 %v3419, 1.0
    %v3426 = vadd.f32 %v3420, 1.0
    %v3427 = vadd.f32 %v3421, 1.0
    %v3428 = vadd.f32 %v3422, 1.0
    %v3429 = vadd.f32 %v3423, 1.0
    %v3430 = vadd.f32 %v3424, 1.0
    %v3431 = vrcp.pop %v3425
    %v3432 = vmul.f32 1.0, %v3431
    %v3433 = vrcp.pop %v3426
    %v3434 = vmul.f32 1.0, %v3433
    %v3435 = vrcp.pop %v3427
    %v3436 = vmul.f32 1.0, %v3435
    %v3437 = vrcp.pop %v3428
    %v3438 = vmul.f32 1.0, %v3437
    %v3439 = vrcp.pop %v3429
    %v3440 = vmul.f32 1.0, %v3439
    %v3441 = vrcp.pop %v3430
    %v3442 = vmul.f32 1.0, %v3441
    %v3443 = vmul.f32 %v3432, 1.0614054
    %v3444 = vmul.f32 %v3434, 1.0614054
    %v3445 = vmul.f32 %v3436, 1.0614054
    %v3446 = vmul.f32 %v3438, 1.0614054
    %v3447 = vmul.f32 %v3440, 1.0614054
    %v3448 = vmul.f32 %v3442, 1.0614054
    %v3449 = vadd.f32 %v3443, -1.4531521
    %v3450 = vadd.f32 %v3444, -1.4531521
    %v3451 = vadd.f32 %v3445, -1.4531521
    %v3452 = vadd.f32 %v3446, -1.4531521
    %v3453 = vadd.f32 %v3447, -1.4531521
    %v3454 = vadd.f32 %v3448, -1.4531521
    %v3455 = vmul.f32 %v3432, %v3449
    %v3456 = vmul.f32 %v3434, %v3450
    %v3457 = vmul.f32 %v3436, %v3451
    %v3458 = vmul.f32 %v3438, %v3452
    %v3459 = vmul.f32 %v3440, %v3453
    %v3460 = vmul.f32 %v3442, %v3454
    %v3461 = vadd.f32 %v3455, 1.4214138
    %v3462 = vadd.f32 %v3456, 1.4214138
    %v3463 = vadd.f32 %v3457, 1.4214138
    %v3464 = vadd.f32 %v3458, 1.4214138
    %v3465 = vadd.f32 %v3459, 1.4214138
    %v3466 = vadd.f32 %v3460, 1.4214138
    %v3467 = vmul.f32 %v3432, %v3461
    %v3468 = vmul.f32 %v3434, %v3462
    %v3469 = vmul.f32 %v3436, %v3463
    %v3470 = vmul.f32 %v3438, %v3464
    %v3471 = vmul.f32 %v3440, %v3465
    %v3472 = vmul.f32 %v3442, %v3466
    %v3473 = vadd.f32 %v3467, -0.28449672
    %v3474 = vadd.f32 %v3468, -0.28449672
    %v3475 = vadd.f32 %v3469, -0.28449672
    %v3476 = vadd.f32 %v3470, -0.28449672
    %v3477 = vadd.f32 %v3471, -0.28449672
    %v3478 = vadd.f32 %v3472, -0.28449672
    %v3479 = vmul.f32 %v3432, %v3473
    %v3480 = vmul.f32 %v3434, %v3474
    %v3481 = vmul.f32 %v3436, %v3475
    %v3482 = vmul.f32 %v3438, %v3476
    %v3483 = vmul.f32 %v3440, %v3477
    %v3484 = vmul.f32 %v3442, %v3478
    %v3485 = vadd.f32 %v3479, 0.2548296
    %v3486 = vadd.f32 %v3480, 0.2548296
    %v3487 = vadd.f32 %v3481, 0.2548296
    %v3488 = vadd.f32 %v3482, 0.2548296
    %v3489 = vadd.f32 %v3483, 0.2548296
    %v3490 = vadd.f32 %v3484, 0.2548296
    %v3491 = vmul.f32 %v3432, %v3485
    %v3492 = vmul.f32 %v3434, %v3486
    %v3493 = vmul.f32 %v3436, %v3487
    %v3494 = vmul.f32 %v3438, %v3488
    %v3495 = vmul.f32 %v3440, %v3489
    %v3496 = vmul.f32 %v3442, %v3490
    %v3497 = vmul.f32 %v3413, %v3413
    %v3498 = vmul.f32 %v3414, %v3414
    %v3499 = vmul.f32 %v3415, %v3415
    %v3500 = vmul.f32 %v3416, %v3416
    %v3501 = vmul.f32 %v3417, %v3417
    %v3502 = vmul.f32 %v3418, %v3418
    %v3503 = vsub.f32 0.0, %v3497
    %v3504 = vsub.f32 0.0, %v3498
    %v3505 = vsub.f32 0.0, %v3499
    %v3506 = vsub.f32 0.0, %v3500
    %v3507 = vsub.f32 0.0, %v3501
    %v3508 = vsub.f32 0.0, %v3502
    %v3509 = vmul.f32 %v3503, 1.442695
    %v3510 = vpow.pop %v3509
    %v3511 = vmul.f32 %v3504, 1.442695
    %v3512 = vpow.pop %v3511
    %v3513 = vmul.f32 %v3505, 1.442695
    %v3514 = vpow.pop %v3513
    %v3515 = vmul.f32 %v3506, 1.442695
    %v3516 = vpow.pop %v3515
    %v3517 = vmul.f32 %v3507, 1.442695
    %v3518 = vpow.pop %v3517
    %v3519 = vmul.f32 %v3508, 1.442695
    %v3520 = vpow.pop %v3519
    %v3521 = vmul.f32 %v3491, %v3510
    %v3522 = vmul.f32 %v3492, %v3512
    %v3523 = vmul.f32 %v3493, %v3514
    %v3524 = vmul.f32 %v3494, %v3516
    %v3525 = vmul.f32 %v3495, %v3518
    %v3526 = vmul.f32 %v3496, %v3520
    %v3527 = vsub.f32 1.0, %v3521
    %v3528 = vsub.f32 1.0, %v3522
    %v3529 = vsub.f32 1.0, %v3523
    %v3530 = vsub.f32 1.0, %v3524
    %v3531 = vsub.f32 1.0, %v3525
    %v3532 = vsub.f32 1.0, %v3526
    %vm3533 = vcmp.ge.f32.partialorder %v2868, 0.0
    %vm3534 = vcmp.ge.f32.partialorder %v2870, 0.0
    %vm3535 = vcmp.ge.f32.partialorder %v3398, 0.0
    %vm3536 = vcmp.ge.f32.partialorder %v2875, 0.0
    %vm3537 = vcmp.ge.f32.partialorder %v2877, 0.0
    %vm3538 = vcmp.ge.f32.partialorder %v3404, 0.0
    %v3539 = vsub.f32 0.0, %v3527
    %v3540 = vsub.f32 0.0, %v3528
    %v3541 = vsub.f32 0.0, %v3529
    %v3542 = vsub.f32 0.0, %v3530
    %v3543 = vsub.f32 0.0, %v3531
    %v3544 = vsub.f32 0.0, %v3532
    %v3545 = vsel %vm3533, %v3527, %v3539
    %v3546 = vsel %vm3534, %v3528, %v3540
    %v3547 = vsel %vm3535, %v3529, %v3541
    %v3548 = vsel %vm3536, %v3530, %v3542
    %v3549 = vsel %vm3537, %v3531, %v3543
    %v3550 = vsel %vm3538, %v3532, %v3544
    %v3551 = vmul.f32 %v2868, 0.5
    %v3552 = vmul.f32 %v2870, 0.5
    %v3553 = vmul.f32 %v3398, 0.5
    %v3554 = vmul.f32 %v2875, 0.5
    %v3555 = vmul.f32 %v2877, 0.5
    %v3556 = vmul.f32 %v3404, 0.5
    %v3557 = vadd.f32 %v3545, 1.0
    %v3558 = vadd.f32 %v3546, 1.0
    %v3559 = vadd.f32 %v3547, 1.0
    %v3560 = vadd.f32 %v3548, 1.0
    %v3561 = vadd.f32 %v3549, 1.0
    %v3562 = vadd.f32 %v3550, 1.0
    %v3563 = vmul.f32 %v3551, %v3557
    %v3564 = vmul.f32 %v3552, %v3558
    %v3565 = vmul.f32 %v3553, %v3559
    %v3566 = vmul.f32 %v3554, %v3560
    %v3567 = vmul.f32 %v3555, %v3561
    %v3568 = vmul.f32 %v3556, %v3562
    %v3569 = vld [vmem:[#allocation5 + $0x20] sm:$0xff]
    %v3570 = vld [vmem:[#allocation5 + $0x28] sm:$0xff]
    %v3571 = vld [vmem:[#allocation5 + $0x30] sm:$0xff]
    %v3572 = vld [vmem:[#allocation5 + $0x58] sm:$0xff]
    %v3573 = vld [vmem:[#allocation5 + $0x60] sm:$0xff]
    %v3574 = vld [vmem:[#allocation5 + $0x68] sm:$0xff]
    %v3575 = vld [vmem:[#allocation5 + $0x90] sm:$0xff]
    %v3576 = vld [vmem:[#allocation5 + $0x98] sm:$0xff]
    %v3577 = vld [vmem:[#allocation5 + $0xa0] sm:$0xff]
    %v3578 = vld [vmem:[#allocation5 + $0xc8] sm:$0xff]
    %v3579 = vld [vmem:[#allocation5 + $0xd0] sm:$0xff]
    %v3580 = vld [vmem:[#allocation5 + $0xd8] sm:$0xff]
    %3581 = vrot.lane.b32.xlu0 %v1666, 96
    %v3582 = vpop.permute.xlu0 %3581
    %v3584 = vand.u32 %v3570, 4294901760
    %3585 = vmatprep.subr.mxu0 %v3584
    %v3586 = vand.u32 %v3569, 4294901760
    %3587 = vmatpush1.xpose.msra.mxu0 %v3586
    %v3588 = vand.u32 %v3573, 4294901760
    %3589 = vmatprep.subr.mxu0 %v3588
    %v3590 = vand.u32 %v3572, 4294901760
    %3591 = vmatpush1.xpose.msra.mxu0 %v3590
    %v3592 = vand.u32 %v3576, 4294901760
    %3593 = vmatprep.subr.mxu0 %v3592
    %v3594 = vand.u32 %v3575, 4294901760
    %3595 = vmatpush1.xpose.msra.mxu0 %v3594
    %v3596 = vand.u32 %v3579, 4294901760
    %3597 = vmatprep.subr.mxu0 %v3596
    %v3598 = vand.u32 %v3578, 4294901760
    %3599 = vmatpush1.xpose.msra.mxu0 %v3598
    %3600 = vmatprep.subr.mxu0 0.0
    %3601 = vmatpush1.xpose.msra.mxu0 0.0
    %3602 = vmatprep.subr.mxu0 0.0
    %3603 = vmatpush1.xpose.msra.mxu0 0.0
    %3604 = vmatprep.subr.mxu0 0.0
    %3605 = vmatpush1.xpose.msra.mxu0 0.0
    %3606 = vmatprep.subr.mxu0 0.0
    %3607 = vmatpush1.xpose.msra.mxu0 0.0
    %3608 = vmatprep.subr.mxu0 0.0
    %3609 = vmatpush1.xpose.msra.mxu0 0.0
    %3610 = vmatprep.subr.mxu0 0.0
    %3611 = vmatpush1.xpose.msra.mxu0 0.0
    %3612 = vmatprep.subr.mxu0 0.0
    %3613 = vmatpush1.xpose.msra.mxu0 0.0
    %3614 = vmatprep.subr.mxu0 0.0
    %3615 = vmatpush1.xpose.msra.mxu0 0.0
    %3616 = vmatprep.subr.mxu0 0.0
    %3617 = vmatpush1.xpose.msra.mxu0 0.0
    %3618 = vmatprep.subr.mxu0 0.0
    %3619 = vmatpush1.xpose.msra.mxu0 0.0
    %3620 = vmatprep.subr.mxu0 0.0
    %3621 = vmatpush1.xpose.msra.mxu0 0.0
    %3622 = vmatprep.subr.mxu0 0.0
    %3623 = vmatpush1.xpose.msra.mxu0 0.0
    %3624 = vmatprep.subr.mxu0 0.0
    %3625 = vmatpush1.xpose.msra.mxu0 0.0
    %3626 = vmatprep.subr.mxu0 0.0
    %3627 = vmatpush1.xpose.msra.mxu0 0.0
    %3628 = vmatprep.subr.mxu0 0.0
    %3629 = vmatpush1.xpose.msra.mxu0 0.0
    %3630 = vmatprep.subr.mxu0 0.0
    %3631 = vmatpush1.xpose.msra.mxu0 0.0
    %3632 = vmatprep.subr.mxu0 0.0
    %3633 = vmatpush1.xpose.msra.mxu0 0.0
    %3634 = vmatprep.subr.mxu0 0.0
    %3635 = vmatpush1.xpose.msra.mxu0 0.0
    %3636 = vmatprep.subr.mxu0 0.0
    %3637 = vmatpush1.xpose.msra.mxu0 0.0
    %3638 = vmatprep.subr.mxu0 0.0
    %3639 = vmatpush1.xpose.msra.mxu0 0.0
    %3640 = vmatprep.subr.mxu0 0.0
    %3641 = vmatpush1.xpose.msra.mxu0 0.0
    %3642 = vmatprep.subr.mxu0 0.0
    %3643 = vmatpush1.xpose.msra.mxu0 0.0
    %3644 = vmatprep.subr.mxu0 0.0
    %3645 = vmatpush1.xpose.msra.mxu0 0.0
    %3646 = vmatprep.subr.mxu0 0.0
    %3647 = vmatpush1.xpose.msra.mxu0 0.0
    %3648 = vmatprep.subr.mxu0 0.0
    %3649 = vmatpush1.xpose.msra.mxu0 0.0
    %3650 = vmatprep.subr.mxu0 0.0
    %3651 = vmatpush1.xpose.msra.mxu0 0.0
    %3652 = vmatprep.subr.mxu0 0.0
    %3653 = vmatpush1.xpose.msra.mxu0 0.0
    %3654 = vmatprep.subr.mxu0 0.0
    %3655 = vmatpush1.xpose.msra.mxu0 0.0
    %v3656 = vand.u32 %v3564, 4294901760
    %v3657 = vsub.f32 %v3564, %v3656
    %v3658 = vand.u32 %v3657, 4294901760
    %v3659 = vsub.f32 %v3657, %v3658
    %v3660 = vand.u32 %v3659, 4294901760
    %3661 = vmatprep.mubr.f32.mxu0 %v3660
    %v3662 = vand.u32 %v3563, 4294901760
    %v3663 = vsub.f32 %v3563, %v3662
    %v3664 = vand.u32 %v3663, 4294901760
    %v3665 = vsub.f32 %v3663, %v3664
    %v3666 = vand.u32 %v3665, 4294901760
    %3667 = vmatmul.mubr.f32.gmra.mrb[0].mxu0 %v3666
    %v3668 = vpop.f32.mrb[0].mxu0
    %v3669 = vadd.f32 %v3582, %v3668
    %v3670 = vpop.f32.mrb[0].mxu0
    %v3671 = vand.u32 %v3567, 4294901760
    %v3672 = vsub.f32 %v3567, %v3671
    %v3673 = vand.u32 %v3672, 4294901760
    %v3674 = vsub.f32 %v3672, %v3673
    %v3675 = vand.u32 %v3674, 4294901760
    %3676 = vmatprep.mubr.f32.mxu0 %v3675
    %v3677 = vand.u32 %v3566, 4294901760
    %v3678 = vsub.f32 %v3566, %v3677
    %v3679 = vand.u32 %v3678, 4294901760
    %v3680 = vsub.f32 %v3678, %v3679
    %v3681 = vand.u32 %v3680, 4294901760
    %3682 = vmatmul.mubr.f32.gmra.mrb[0].mxu0 %v3681
    %v3683 = vpop.f32.mrb[0].mxu0
    %v3684 = vadd.f32 %v3582, %v3683
    %v3685 = vpop.f32.mrb[0].mxu0
    %3686 = vdwg.mxu0
    %v3687 = vand.u32 %v3570, 4294901760
    %v3688 = vsub.f32 %v3570, %v3687
    %v3689 = vand.u32 %v3688, 4294901760
    %v3690 = vsub.f32 %v3688, %v3689
    %v3691 = vand.u32 %v3690, 4294901760
    %3692 = vmatprep.subr.mxu0 %v3691
    %v3693 = vand.u32 %v3569, 4294901760
    %v3694 = vsub.f32 %v3569, %v3693
    %v3695 = vand.u32 %v3694, 4294901760
    %v3696 = vsub.f32 %v3694, %v3695
    %v3697 = vand.u32 %v3696, 4294901760
    %3698 = vmatpush1.xpose.msra.mxu0 %v3697
    %v3699 = vand.u32 %v3573, 4294901760
    %v3700 = vsub.f32 %v3573, %v3699
    %v3701 = vand.u32 %v3700, 4294901760
    %v3702 = vsub.f32 %v3700, %v3701
    %v3703 = vand.u32 %v3702, 4294901760
    %3704 = vmatprep.subr.mxu0 %v3703
    %v3705 = vand.u32 %v3572, 4294901760
    %v3706 = vsub.f32 %v3572, %v3705
    %v3707 = vand.u32 %v3706, 4294901760
    %v3708 = vsub.f32 %v3706, %v3707
    %v3709 = vand.u32 %v3708, 4294901760
    %3710 = vmatpush1.xpose.msra.mxu0 %v3709
    %v3711 = vand.u32 %v3576, 4294901760
    %v3712 = vsub.f32 %v3576, %v3711
    %v3713 = vand.u32 %v3712, 4294901760
    %v3714 = vsub.f32 %v3712, %v3713
    %v3715 = vand.u32 %v3714, 4294901760
    %3716 = vmatprep.subr.mxu0 %v3715
    %v3717 = vand.u32 %v3575, 4294901760
    %v3718 = vsub.f32 %v3575, %v3717
    %v3719 = vand.u32 %v3718, 4294901760
    %v3720 = vsub.f32 %v3718, %v3719
    %v3721 = vand.u32 %v3720, 4294901760
    %3722 = vmatpush1.xpose.msra.mxu0 %v3721
    %v3723 = vand.u32 %v3579, 4294901760
    %v3724 = vsub.f32 %v3579, %v3723
    %v3725 = vand.u32 %v3724, 4294901760
    %v3726 = vsub.f32 %v3724, %v3725
    %v3727 = vand.u32 %v3726, 4294901760
    %3728 = vmatprep.subr.mxu0 %v3727
    %v3729 = vand.u32 %v3578, 4294901760
    %v3730 = vsub.f32 %v3578, %v3729
    %v3731 = vand.u32 %v3730, 4294901760
    %v3732 = vsub.f32 %v3730, %v3731
    %v3733 = vand.u32 %v3732, 4294901760
    %3734 = vmatpush1.xpose.msra.mxu0 %v3733
    %3735 = vmatprep.subr.mxu0 0.0
    %3736 = vmatpush1.xpose.msra.mxu0 0.0
    %3737 = vmatprep.subr.mxu0 0.0
    %3738 = vmatpush1.xpose.msra.mxu0 0.0
    %3739 = vmatprep.subr.mxu0 0.0
    %3740 = vmatpush1.xpose.msra.mxu0 0.0
    %3741 = vmatprep.subr.mxu0 0.0
    %3742 = vmatpush1.xpose.msra.mxu0 0.0
    %3743 = vmatprep.subr.mxu0 0.0
    %3744 = vmatpush1.xpose.msra.mxu0 0.0
    %3745 = vmatprep.subr.mxu0 0.0
    %3746 = vmatpush1.xpose.msra.mxu0 0.0
    %3747 = vmatprep.subr.mxu0 0.0
    %3748 = vmatpush1.xpose.msra.mxu0 0.0
    %3749 = vmatprep.subr.mxu0 0.0
    %3750 = vmatpush1.xpose.msra.mxu0 0.0
    %3751 = vmatprep.subr.mxu0 0.0
    %3752 = vmatpush1.xpose.msra.mxu0 0.0
    %3753 = vmatprep.subr.mxu0 0.0
    %3754 = vmatpush1.xpose.msra.mxu0 0.0
    %3755 = vmatprep.subr.mxu0 0.0
    %3756 = vmatpush1.xpose.msra.mxu0 0.0
    %3757 = vmatprep.subr.mxu0 0.0
    %3758 = vmatpush1.xpose.msra.mxu0 0.0
    %3759 = vmatprep.subr.mxu0 0.0
    %3760 = vmatpush1.xpose.msra.mxu0 0.0
    %3761 = vmatprep.subr.mxu0 0.0
    %3762 = vmatpush1.xpose.msra.mxu0 0.0
    %3763 = vmatprep.subr.mxu0 0.0
    %3764 = vmatpush1.xpose.msra.mxu0 0.0
    %3765 = vmatprep.subr.mxu0 0.0
    %3766 = vmatpush1.xpose.msra.mxu0 0.0
    %3767 = vmatprep.subr.mxu0 0.0
    %3768 = vmatpush1.xpose.msra.mxu0 0.0
    %3769 = vmatprep.subr.mxu0 0.0
    %3770 = vmatpush1.xpose.msra.mxu0 0.0
    %3771 = vmatprep.subr.mxu0 0.0
    %3772 = vmatpush1.xpose.msra.mxu0 0.0
    %3773 = vmatprep.subr.mxu0 0.0
    %3774 = vmatpush1.xpose.msra.mxu0 0.0
    %3775 = vmatprep.subr.mxu0 0.0
    %3776 = vmatpush1.xpose.msra.mxu0 0.0
    %3777 = vmatprep.subr.mxu0 0.0
    %3778 = vmatpush1.xpose.msra.mxu0 0.0
    %3779 = vmatprep.subr.mxu0 0.0
    %3780 = vmatpush1.xpose.msra.mxu0 0.0
    %3781 = vmatprep.subr.mxu0 0.0
    %3782 = vmatpush1.xpose.msra.mxu0 0.0
    %3783 = vmatprep.subr.mxu0 0.0
    %3784 = vmatpush1.xpose.msra.mxu0 0.0
    %3785 = vmatprep.subr.mxu0 0.0
    %3786 = vmatpush1.xpose.msra.mxu0 0.0
    %3787 = vmatprep.subr.mxu0 0.0
    %3788 = vmatpush1.xpose.msra.mxu0 0.0
    %3789 = vmatprep.subr.mxu0 0.0
    %3790 = vmatpush1.xpose.msra.mxu0 0.0
    %v3791 = vand.u32 %v3564, 4294901760
    %3792 = vmatprep.mubr.f32.mxu0 %v3791
    %v3793 = vand.u32 %v3563, 4294901760
    %3794 = vmatmul.mubr.f32.gmra.mrb[0].mxu0 %v3793
    %v3795 = vpop.f32.mrb[0].mxu0
    %v3796 = vadd.f32 %v3669, %v3795
    %v3797 = vpop.f32.mrb[0].mxu0
    %v3798 = vand.u32 %v3567, 4294901760
    %3799 = vmatprep.mubr.f32.mxu0 %v3798
    %v3800 = vand.u32 %v3566, 4294901760
    %3801 = vmatmul.mubr.f32.gmra.mrb[0].mxu0 %v3800
    %v3802 = vpop.f32.mrb[0].mxu0
    %v3803 = vadd.f32 %v3684, %v3802
    %v3804 = vpop.f32.mrb[0].mxu0
    %3805 = vdwg.mxu0
    %v3806 = vand.u32 %v3570, 4294901760
    %v3807 = vsub.f32 %v3570, %v3806
    %3808 = vmatprep.subr.mxu0 %v3807
    %v3809 = vand.u32 %v3569, 4294901760
    %v3810 = vsub.f32 %v3569, %v3809
    %3811 = vmatpush1.xpose.msra.mxu0 %v3810
    %v3812 = vand.u32 %v3573, 4294901760
    %v3813 = vsub.f32 %v3573, %v3812
    %3814 = vmatprep.subr.mxu0 %v3813
    %v3815 = vand.u32 %v3572, 4294901760
    %v3816 = vsub.f32 %v3572, %v3815
    %3817 = vmatpush1.xpose.msra.mxu0 %v3816
    %v3818 = vand.u32 %v3576, 4294901760
    %v3819 = vsub.f32 %v3576, %v3818
    %3820 = vmatprep.subr.mxu0 %v3819
    %v3821 = vand.u32 %v3575, 4294901760
    %v3822 = vsub.f32 %v3575, %v3821
    %3823 = vmatpush1.xpose.msra.mxu0 %v3822
    %v3824 = vand.u32 %v3579, 4294901760
    %v3825 = vsub.f32 %v3579, %v3824
    %3826 = vmatprep.subr.mxu0 %v3825
    %v3827 = vand.u32 %v3578, 4294901760
    %v3828 = vsub.f32 %v3578, %v3827
    %3829 = vmatpush1.xpose.msra.mxu0 %v3828
    %3830 = vmatprep.subr.mxu0 0.0
    %3831 = vmatpush1.xpose.msra.mxu0 0.0
    %3832 = vmatprep.subr.mxu0 0.0
    %3833 = vmatpush1.xpose.msra.mxu0 0.0
    %3834 = vmatprep.subr.mxu0 0.0
    %3835 = vmatpush1.xpose.msra.mxu0 0.0
    %3836 = vmatprep.subr.mxu0 0.0
    %3837 = vmatpush1.xpose.msra.mxu0 0.0
    %3838 = vmatprep.subr.mxu0 0.0
    %3839 = vmatpush1.xpose.msra.mxu0 0.0
    %3840 = vmatprep.subr.mxu0 0.0
    %3841 = vmatpush1.xpose.msra.mxu0 0.0
    %3842 = vmatprep.subr.mxu0 0.0
    %3843 = vmatpush1.xpose.msra.mxu0 0.0
    %3844 = vmatprep.subr.mxu0 0.0
    %3845 = vmatpush1.xpose.msra.mxu0 0.0
    %3846 = vmatprep.subr.mxu0 0.0
    %3847 = vmatpush1.xpose.msra.mxu0 0.0
    %3848 = vmatprep.subr.mxu0 0.0
    %3849 = vmatpush1.xpose.msra.mxu0 0.0
    %3850 = vmatprep.subr.mxu0 0.0
    %3851 = vmatpush1.xpose.msra.mxu0 0.0
    %3852 = vmatprep.subr.mxu0 0.0
    %3853 = vmatpush1.xpose.msra.mxu0 0.0
    %3854 = vmatprep.subr.mxu0 0.0
    %3855 = vmatpush1.xpose.msra.mxu0 0.0
    %3856 = vmatprep.subr.mxu0 0.0
    %3857 = vmatpush1.xpose.msra.mxu0 0.0
    %3858 = vmatprep.subr.mxu0 0.0
    %3859 = vmatpush1.xpose.msra.mxu0 0.0
    %3860 = vmatprep.subr.mxu0 0.0
    %3861 = vmatpush1.xpose.msra.mxu0 0.0
    %3862 = vmatprep.subr.mxu0 0.0
    %3863 = vmatpush1.xpose.msra.mxu0 0.0
    %3864 = vmatprep.subr.mxu0 0.0
    %3865 = vmatpush1.xpose.msra.mxu0 0.0
    %3866 = vmatprep.subr.mxu0 0.0
    %3867 = vmatpush1.xpose.msra.mxu0 0.0
    %3868 = vmatprep.subr.mxu0 0.0
    %3869 = vmatpush1.xpose.msra.mxu0 0.0
    %3870 = vmatprep.subr.mxu0 0.0
    %3871 = vmatpush1.xpose.msra.mxu0 0.0
    %3872 = vmatprep.subr.mxu0 0.0
    %3873 = vmatpush1.xpose.msra.mxu0 0.0
    %3874 = vmatprep.subr.mxu0 0.0
    %3875 = vmatpush1.xpose.msra.mxu0 0.0
    %3876 = vmatprep.subr.mxu0 0.0
    %3877 = vmatpush1.xpose.msra.mxu0 0.0
    %3878 = vmatprep.subr.mxu0 0.0
    %3879 = vmatpush1.xpose.msra.mxu0 0.0
    %3880 = vmatprep.subr.mxu0 0.0
    %3881 = vmatpush1.xpose.msra.mxu0 0.0
    %3882 = vmatprep.subr.mxu0 0.0
    %3883 = vmatpush1.xpose.msra.mxu0 0.0
    %3884 = vmatprep.subr.mxu0 0.0
    %3885 = vmatpush1.xpose.msra.mxu0 0.0
    %v3886 = vand.u32 %v3564, 4294901760
    %v3887 = vsub.f32 %v3564, %v3886
    %3888 = vmatprep.mubr.f32.mxu0 %v3887
    %v3889 = vand.u32 %v3563, 4294901760
    %v3890 = vsub.f32 %v3563, %v3889
    %3891 = vmatmul.mubr.f32.gmra.mrb[0].mxu0 %v3890
    %v3892 = vpop.f32.mrb[0].mxu0
    %v3893 = vadd.f32 %v3796, %v3892
    %v3894 = vpop.f32.mrb[0].mxu0
    %v3895 = vand.u32 %v3567, 4294901760
    %v3896 = vsub.f32 %v3567, %v3895
    %3897 = vmatprep.mubr.f32.mxu0 %v3896
    %v3898 = vand.u32 %v3566, 4294901760
    %v3899 = vsub.f32 %v3566, %v3898
    %3900 = vmatmul.mubr.f32.gmra.mrb[0].mxu0 %v3899
    %v3901 = vpop.f32.mrb[0].mxu0
    %v3902 = vadd.f32 %v3803, %v3901
    %v3903 = vpop.f32.mrb[0].mxu0
    %3904 = vdwg.mxu0
    %v3905 = vand.u32 %v3570, 4294901760
    %3906 = vmatprep.subr.mxu0 %v3905
    %v3907 = vand.u32 %v3569, 4294901760
    %3908 = vmatpush1.xpose.msra.mxu0 %v3907
    %v3909 = vand.u32 %v3573, 4294901760
    %3910 = vmatprep.subr.mxu0 %v3909
    %v3911 = vand.u32 %v3572, 4294901760
    %3912 = vmatpush1.xpose.msra.mxu0 %v3911
    %v3913 = vand.u32 %v3576, 4294901760
    %3914 = vmatprep.subr.mxu0 %v3913
    %v3915 = vand.u32 %v3575, 4294901760
    %3916 = vmatpush1.xpose.msra.mxu0 %v3915
    %v3917 = vand.u32 %v3579, 4294901760
    %3918 = vmatprep.subr.mxu0 %v3917
    %v3919 = vand.u32 %v3578, 4294901760
    %3920 = vmatpush1.xpose.msra.mxu0 %v3919
    %3921 = vmatprep.subr.mxu0 0.0
    %3922 = vmatpush1.xpose.msra.mxu0 0.0
    %3923 = vmatprep.subr.mxu0 0.0
    %3924 = vmatpush1.xpose.msra.mxu0 0.0
    %3925 = vmatprep.subr.mxu0 0.0
    %3926 = vmatpush1.xpose.msra.mxu0 0.0
    %3927 = vmatprep.subr.mxu0 0.0
    %3928 = vmatpush1.xpose.msra.mxu0 0.0
    %3929 = vmatprep.subr.mxu0 0.0
    %3930 = vmatpush1.xpose.msra.mxu0 0.0
    %3931 = vmatprep.subr.mxu0 0.0
    %3932 = vmatpush1.xpose.msra.mxu0 0.0
    %3933 = vmatprep.subr.mxu0 0.0
    %3934 = vmatpush1.xpose.msra.mxu0 0.0
    %3935 = vmatprep.subr.mxu0 0.0
    %3936 = vmatpush1.xpose.msra.mxu0 0.0
    %3937 = vmatprep.subr.mxu0 0.0
    %3938 = vmatpush1.xpose.msra.mxu0 0.0
    %3939 = vmatprep.subr.mxu0 0.0
    %3940 = vmatpush1.xpose.msra.mxu0 0.0
    %3941 = vmatprep.subr.mxu0 0.0
    %3942 = vmatpush1.xpose.msra.mxu0 0.0
    %3943 = vmatprep.subr.mxu0 0.0
    %3944 = vmatpush1.xpose.msra.mxu0 0.0
    %3945 = vmatprep.subr.mxu0 0.0
    %3946 = vmatpush1.xpose.msra.mxu0 0.0
    %3947 = vmatprep.subr.mxu0 0.0
    %3948 = vmatpush1.xpose.msra.mxu0 0.0
    %3949 = vmatprep.subr.mxu0 0.0
    %3950 = vmatpush1.xpose.msra.mxu0 0.0
    %3951 = vmatprep.subr.mxu0 0.0
    %3952 = vmatpush1.xpose.msra.mxu0 0.0
    %3953 = vmatprep.subr.mxu0 0.0
    %3954 = vmatpush1.xpose.msra.mxu0 0.0
    %3955 = vmatprep.subr.mxu0 0.0
    %3956 = vmatpush1.xpose.msra.mxu0 0.0
    %3957 = vmatprep.subr.mxu0 0.0
    %3958 = vmatpush1.xpose.msra.mxu0 0.0
    %3959 = vmatprep.subr.mxu0 0.0
    %3960 = vmatpush1.xpose.msra.mxu0 0.0
    %3961 = vmatprep.subr.mxu0 0.0
    %3962 = vmatpush1.xpose.msra.mxu0 0.0
    %3963 = vmatprep.subr.mxu0 0.0
    %3964 = vmatpush1.xpose.msra.mxu0 0.0
    %3965 = vmatprep.subr.mxu0 0.0
    %3966 = vmatpush1.xpose.msra.mxu0 0.0
    %3967 = vmatprep.subr.mxu0 0.0
    %3968 = vmatpush1.xpose.msra.mxu0 0.0
    %3969 = vmatprep.subr.mxu0 0.0
    %3970 = vmatpush1.xpose.msra.mxu0 0.0
    %3971 = vmatprep.subr.mxu0 0.0
    %3972 = vmatpush1.xpose.msra.mxu0 0.0
    %3973 = vmatprep.subr.mxu0 0.0
    %3974 = vmatpush1.xpose.msra.mxu0 0.0
    %3975 = vmatprep.subr.mxu0 0.0
    %3976 = vmatpush1.xpose.msra.mxu0 0.0
    %v3977 = vand.u32 %v3564, 4294901760
    %v3978 = vsub.f32 %v3564, %v3977
    %v3979 = vand.u32 %v3978, 4294901760
    %3980 = vmatprep.mubr.f32.mxu0 %v3979
    %v3981 = vand.u32 %v3563, 4294901760
    %v3982 = vsub.f32 %v3563, %v3981
    %v3983 = vand.u32 %v3982, 4294901760
    %3984 = vmatmul.mubr.f32.gmra.mrb[0].mxu0 %v3983
    %v3985 = vpop.f32.mrb[0].mxu0
    %v3986 = vadd.f32 %v3893, %v3985
    %v3987 = vpop.f32.mrb[0].mxu0
    %v3988 = vand.u32 %v3567, 4294901760
    %v3989 = vsub.f32 %v3567, %v3988
    %v3990 = vand.u32 %v3989, 4294901760
    %3991 = vmatprep.mubr.f32.mxu0 %v3990
    %v3992 = vand.u32 %v3566, 4294901760
    %v3993 = vsub.f32 %v3566, %v3992
    %v3994 = vand.u32 %v3993, 4294901760
    %3995 = vmatmul.mubr.f32.gmra.mrb[0].mxu0 %v3994
    %v3996 = vpop.f32.mrb[0].mxu0
    %v3997 = vadd.f32 %v3902, %v3996
    %v3998 = vpop.f32.mrb[0].mxu0
    %3999 = vdwg.mxu0
    %v4000 = vand.u32 %v3570, 4294901760
    %v4001 = vsub.f32 %v3570, %v4000
    %v4002 = vand.u32 %v4001, 4294901760
    %4003 = vmatprep.subr.mxu0 %v4002
    %v4004 = vand.u32 %v3569, 4294901760
    %v4005 = vsub.f32 %v3569, %v4004
    %v4006 = vand.u32 %v4005, 4294901760
    %4007 = vmatpush1.xpose.msra.mxu0 %v4006
    %v4008 = vand.u32 %v3573, 4294901760
    %v4009 = vsub.f32 %v3573, %v4008
    %v4010 = vand.u32 %v4009, 4294901760
    %4011 = vmatprep.subr.mxu0 %v4010
    %v4012 = vand.u32 %v3572, 4294901760
    %v4013 = vsub.f32 %v3572, %v4012
    %v4014 = vand.u32 %v4013, 4294901760
    %4015 = vmatpush1.xpose.msra.mxu0 %v4014
    %v4016 = vand.u32 %v3576, 4294901760
    %v4017 = vsub.f32 %v3576, %v4016
    %v4018 = vand.u32 %v4017, 4294901760
    %4019 = vmatprep.subr.mxu0 %v4018
    %v4020 = vand.u32 %v3575, 4294901760
    %v4021 = vsub.f32 %v3575, %v4020
    %v4022 = vand.u32 %v4021, 4294901760
    %4023 = vmatpush1.xpose.msra.mxu0 %v4022
    %v4024 = vand.u32 %v3579, 4294901760
    %v4025 = vsub.f32 %v3579, %v4024
    %v4026 = vand.u32 %v4025, 4294901760
    %4027 = vmatprep.subr.mxu0 %v4026
    %v4028 = vand.u32 %v3578, 4294901760
    %v4029 = vsub.f32 %v3578, %v4028
    %v4030 = vand.u32 %v4029, 4294901760
    %4031 = vmatpush1.xpose.msra.mxu0 %v4030
    %4032 = vmatprep.subr.mxu0 0.0
    %4033 = vmatpush1.xpose.msra.mxu0 0.0
    %4034 = vmatprep.subr.mxu0 0.0
    %4035 = vmatpush1.xpose.msra.mxu0 0.0
    %4036 = vmatprep.subr.mxu0 0.0
    %4037 = vmatpush1.xpose.msra.mxu0 0.0
    %4038 = vmatprep.subr.mxu0 0.0
    %4039 = vmatpush1.xpose.msra.mxu0 0.0
    %4040 = vmatprep.subr.mxu0 0.0
    %4041 = vmatpush1.xpose.msra.mxu0 0.0
    %4042 = vmatprep.subr.mxu0 0.0
    %4043 = vmatpush1.xpose.msra.mxu0 0.0
    %4044 = vmatprep.subr.mxu0 0.0
    %4045 = vmatpush1.xpose.msra.mxu0 0.0
    %4046 = vmatprep.subr.mxu0 0.0
    %4047 = vmatpush1.xpose.msra.mxu0 0.0
    %4048 = vmatprep.subr.mxu0 0.0
    %4049 = vmatpush1.xpose.msra.mxu0 0.0
    %4050 = vmatprep.subr.mxu0 0.0
    %4051 = vmatpush1.xpose.msra.mxu0 0.0
    %4052 = vmatprep.subr.mxu0 0.0
    %4053 = vmatpush1.xpose.msra.mxu0 0.0
    %4054 = vmatprep.subr.mxu0 0.0
    %4055 = vmatpush1.xpose.msra.mxu0 0.0
    %4056 = vmatprep.subr.mxu0 0.0
    %4057 = vmatpush1.xpose.msra.mxu0 0.0
    %4058 = vmatprep.subr.mxu0 0.0
    %4059 = vmatpush1.xpose.msra.mxu0 0.0
    %4060 = vmatprep.subr.mxu0 0.0
    %4061 = vmatpush1.xpose.msra.mxu0 0.0
    %4062 = vmatprep.subr.mxu0 0.0
    %4063 = vmatpush1.xpose.msra.mxu0 0.0
    %4064 = vmatprep.subr.mxu0 0.0
    %4065 = vmatpush1.xpose.msra.mxu0 0.0
    %4066 = vmatprep.subr.mxu0 0.0
    %4067 = vmatpush1.xpose.msra.mxu0 0.0
    %4068 = vmatprep.subr.mxu0 0.0
    %4069 = vmatpush1.xpose.msra.mxu0 0.0
    %4070 = vmatprep.subr.mxu0 0.0
    %4071 = vmatpush1.xpose.msra.mxu0 0.0
    %4072 = vmatprep.subr.mxu0 0.0
    %4073 = vmatpush1.xpose.msra.mxu0 0.0
    %4074 = vmatprep.subr.mxu0 0.0
    %4075 = vmatpush1.xpose.msra.mxu0 0.0
    %4076 = vmatprep.subr.mxu0 0.0
    %4077 = vmatpush1.xpose.msra.mxu0 0.0
    %4078 = vmatprep.subr.mxu0 0.0
    %4079 = vmatpush1.xpose.msra.mxu0 0.0
    %4080 = vmatprep.subr.mxu0 0.0
    %4081 = vmatpush1.xpose.msra.mxu0 0.0
    %4082 = vmatprep.subr.mxu0 0.0
    %4083 = vmatpush1.xpose.msra.mxu0 0.0
    %4084 = vmatprep.subr.mxu0 0.0
    %4085 = vmatpush1.xpose.msra.mxu0 0.0
    %4086 = vmatprep.subr.mxu0 0.0
    %4087 = vmatpush1.xpose.msra.mxu0 0.0
    %v4088 = vand.u32 %v3564, 4294901760
    %4089 = vmatprep.mubr.f32.mxu0 %v4088
    %v4090 = vand.u32 %v3563, 4294901760
    %4091 = vmatmul.mubr.f32.gmra.mrb[0].mxu0 %v4090
    %v4092 = vpop.f32.mrb[0].mxu0
    %v4093 = vadd.f32 %v3986, %v4092
    %v4094 = vpop.f32.mrb[0].mxu0
    %v4095 = vand.u32 %v3567, 4294901760
    %4096 = vmatprep.mubr.f32.mxu0 %v4095
    %v4097 = vand.u32 %v3566, 4294901760
    %4098 = vmatmul.mubr.f32.gmra.mrb[0].mxu0 %v4097
    %v4099 = vpop.f32.mrb[0].mxu0
    %v4100 = vadd.f32 %v3997, %v4099
    %v4101 = vpop.f32.mrb[0].mxu0
    %4102 = vdwg.mxu0
    %v4103 = vand.u32 %v3570, 4294901760
    %4104 = vmatprep.subr.mxu0 %v4103
    %v4105 = vand.u32 %v3569, 4294901760
    %4106 = vmatpush1.xpose.msra.mxu0 %v4105
    %v4107 = vand.u32 %v3573, 4294901760
    %4108 = vmatprep.subr.mxu0 %v4107
    %v4109 = vand.u32 %v3572, 4294901760
    %4110 = vmatpush1.xpose.msra.mxu0 %v4109
    %v4111 = vand.u32 %v3576, 4294901760
    %4112 = vmatprep.subr.mxu0 %v4111
    %v4113 = vand.u32 %v3575, 4294901760
    %4114 = vmatpush1.xpose.msra.mxu0 %v4113
    %v4115 = vand.u32 %v3579, 4294901760
    %4116 = vmatprep.subr.mxu0 %v4115
    %v4117 = vand.u32 %v3578, 4294901760
    %4118 = vmatpush1.xpose.msra.mxu0 %v4117
    %4119 = vmatprep.subr.mxu0 0.0
    %4120 = vmatpush1.xpose.msra.mxu0 0.0
    %4121 = vmatprep.subr.mxu0 0.0
    %4122 = vmatpush1.xpose.msra.mxu0 0.0
    %4123 = vmatprep.subr.mxu0 0.0
    %4124 = vmatpush1.xpose.msra.mxu0 0.0
    %4125 = vmatprep.subr.mxu0 0.0
    %4126 = vmatpush1.xpose.msra.mxu0 0.0
    %4127 = vmatprep.subr.mxu0 0.0
    %4128 = vmatpush1.xpose.msra.mxu0 0.0
    %4129 = vmatprep.subr.mxu0 0.0
    %4130 = vmatpush1.xpose.msra.mxu0 0.0
    %4131 = vmatprep.subr.mxu0 0.0
    %4132 = vmatpush1.xpose.msra.mxu0 0.0
    %4133 = vmatprep.subr.mxu0 0.0
    %4134 = vmatpush1.xpose.msra.mxu0 0.0
    %4135 = vmatprep.subr.mxu0 0.0
    %4136 = vmatpush1.xpose.msra.mxu0 0.0
    %4137 = vmatprep.subr.mxu0 0.0
    %4138 = vmatpush1.xpose.msra.mxu0 0.0
    %4139 = vmatprep.subr.mxu0 0.0
    %4140 = vmatpush1.xpose.msra.mxu0 0.0
    %4141 = vmatprep.subr.mxu0 0.0
    %4142 = vmatpush1.xpose.msra.mxu0 0.0
    %4143 = vmatprep.subr.mxu0 0.0
    %4144 = vmatpush1.xpose.msra.mxu0 0.0
    %4145 = vmatprep.subr.mxu0 0.0
    %4146 = vmatpush1.xpose.msra.mxu0 0.0
    %4147 = vmatprep.subr.mxu0 0.0
    %4148 = vmatpush1.xpose.msra.mxu0 0.0
    %4149 = vmatprep.subr.mxu0 0.0
    %4150 = vmatpush1.xpose.msra.mxu0 0.0
    %4151 = vmatprep.subr.mxu0 0.0
    %4152 = vmatpush1.xpose.msra.mxu0 0.0
    %4153 = vmatprep.subr.mxu0 0.0
    %4154 = vmatpush1.xpose.msra.mxu0 0.0
    %4155 = vmatprep.subr.mxu0 0.0
    %4156 = vmatpush1.xpose.msra.mxu0 0.0
    %4157 = vmatprep.subr.mxu0 0.0
    %4158 = vmatpush1.xpose.msra.mxu0 0.0
    %4159 = vmatprep.subr.mxu0 0.0
    %4160 = vmatpush1.xpose.msra.mxu0 0.0
    %4161 = vmatprep.subr.mxu0 0.0
    %4162 = vmatpush1.xpose.msra.mxu0 0.0
    %4163 = vmatprep.subr.mxu0 0.0
    %4164 = vmatpush1.xpose.msra.mxu0 0.0
    %4165 = vmatprep.subr.mxu0 0.0
    %4166 = vmatpush1.xpose.msra.mxu0 0.0
    %4167 = vmatprep.subr.mxu0 0.0
    %4168 = vmatpush1.xpose.msra.mxu0 0.0
    %4169 = vmatprep.subr.mxu0 0.0
    %4170 = vmatpush1.xpose.msra.mxu0 0.0
    %4171 = vmatprep.subr.mxu0 0.0
    %4172 = vmatpush1.xpose.msra.mxu0 0.0
    %4173 = vmatprep.subr.mxu0 0.0
    %4174 = vmatpush1.xpose.msra.mxu0 0.0
    %v4175 = vand.u32 %v3564, 4294901760
    %4176 = vmatprep.mubr.f32.mxu0 %v4175
    %v4177 = vand.u32 %v3563, 4294901760
    %4178 = vmatmul.mubr.f32.gmra.mrb[0].mxu0 %v4177
    %v4179 = vpop.f32.mrb[0].mxu0
    %v4180 = vadd.f32 %v4093, %v4179
    %v4181 = vpop.f32.mrb[0].mxu0
    %v4182 = vand.u32 %v3567, 4294901760
    %4183 = vmatprep.mubr.f32.mxu0 %v4182
    %v4184 = vand.u32 %v3566, 4294901760
    %4185 = vmatmul.mubr.f32.gmra.mrb[0].mxu0 %v4184
    %v4186 = vpop.f32.mrb[0].mxu0
    %v4187 = vadd.f32 %v4100, %v4186
    %v4188 = vpop.f32.mrb[0].mxu0
    %4189 = vdwg.mxu0
    %4190 = vmatprep.subr.mxu0 0.0
    %v4191 = vand.u32 %v3571, 4294901760
    %4192 = vmatpush1.xpose.msra.mxu0 %v4191
    %4193 = vmatprep.subr.mxu0 0.0
    %v4194 = vand.u32 %v3574, 4294901760
    %4195 = vmatpush1.xpose.msra.mxu0 %v4194
    %4196 = vmatprep.subr.mxu0 0.0
    %v4197 = vand.u32 %v3577, 4294901760
    %4198 = vmatpush1.xpose.msra.mxu0 %v4197
    %4199 = vmatprep.subr.mxu0 0.0
    %v4200 = vand.u32 %v3580, 4294901760
    %4201 = vmatpush1.xpose.msra.mxu0 %v4200
    %4202 = vmatprep.subr.mxu0 0.0
    %4203 = vmatpush1.xpose.msra.mxu0 0.0
    %4204 = vmatprep.subr.mxu0 0.0
    %4205 = vmatpush1.xpose.msra.mxu0 0.0
    %4206 = vmatprep.subr.mxu0 0.0
    %4207 = vmatpush1.xpose.msra.mxu0 0.0
    %4208 = vmatprep.subr.mxu0 0.0
    %4209 = vmatpush1.xpose.msra.mxu0 0.0
    %4210 = vmatprep.subr.mxu0 0.0
    %4211 = vmatpush1.xpose.msra.mxu0 0.0
    %4212 = vmatprep.subr.mxu0 0.0
    %4213 = vmatpush1.xpose.msra.mxu0 0.0
    %4214 = vmatprep.subr.mxu0 0.0
    %4215 = vmatpush1.xpose.msra.mxu0 0.0
    %4216 = vmatprep.subr.mxu0 0.0
    %4217 = vmatpush1.xpose.msra.mxu0 0.0
    %4218 = vmatprep.subr.mxu0 0.0
    %4219 = vmatpush1.xpose.msra.mxu0 0.0
    %4220 = vmatprep.subr.mxu0 0.0
    %4221 = vmatpush1.xpose.msra.mxu0 0.0
    %4222 = vmatprep.subr.mxu0 0.0
    %4223 = vmatpush1.xpose.msra.mxu0 0.0
    %4224 = vmatprep.subr.mxu0 0.0
    %4225 = vmatpush1.xpose.msra.mxu0 0.0
    %4226 = vmatprep.subr.mxu0 0.0
    %4227 = vmatpush1.xpose.msra.mxu0 0.0
    %4228 = vmatprep.subr.mxu0 0.0
    %4229 = vmatpush1.xpose.msra.mxu0 0.0
    %4230 = vmatprep.subr.mxu0 0.0
    %4231 = vmatpush1.xpose.msra.mxu0 0.0
    %4232 = vmatprep.subr.mxu0 0.0
    %4233 = vmatpush1.xpose.msra.mxu0 0.0
    %4234 = vmatprep.subr.mxu0 0.0
    %4235 = vmatpush1.xpose.msra.mxu0 0.0
    %4236 = vmatprep.subr.mxu0 0.0
    %4237 = vmatpush1.xpose.msra.mxu0 0.0
    %4238 = vmatprep.subr.mxu0 0.0
    %4239 = vmatpush1.xpose.msra.mxu0 0.0
    %4240 = vmatprep.subr.mxu0 0.0
    %4241 = vmatpush1.xpose.msra.mxu0 0.0
    %4242 = vmatprep.subr.mxu0 0.0
    %4243 = vmatpush1.xpose.msra.mxu0 0.0
    %4244 = vmatprep.subr.mxu0 0.0
    %4245 = vmatpush1.xpose.msra.mxu0 0.0
    %4246 = vmatprep.subr.mxu0 0.0
    %4247 = vmatpush1.xpose.msra.mxu0 0.0
    %4248 = vmatprep.subr.mxu0 0.0
    %4249 = vmatpush1.xpose.msra.mxu0 0.0
    %4250 = vmatprep.subr.mxu0 0.0
    %4251 = vmatpush1.xpose.msra.mxu0 0.0
    %4252 = vmatprep.subr.mxu0 0.0
    %4253 = vmatpush1.xpose.msra.mxu0 0.0
    %4254 = vmatprep.subr.mxu0 0.0
    %4255 = vmatpush1.xpose.msra.mxu0 0.0
    %4256 = vmatprep.subr.mxu0 0.0
    %4257 = vmatpush1.xpose.msra.mxu0 0.0
    %4258 = vmatprep.mubr.f32.mxu0 0.0
    %v4259 = vand.u32 %v3565, 4294901760
    %v4260 = vsub.f32 %v3565, %v4259
    %v4261 = vand.u32 %v4260, 4294901760
    %v4262 = vsub.f32 %v4260, %v4261
    %v4263 = vand.u32 %v4262, 4294901760
    %4264 = vmatmul.mubr.f32.gmra.mrb[0].mxu0 %v4263
    %v4265 = vpop.f32.mrb[0].mxu0
    %v4266 = vadd.f32 %v4180, %v4265
    %v4267 = vpop.f32.mrb[0].mxu0
    %4268 = vmatprep.mubr.f32.mxu0 0.0
    %v4269 = vand.u32 %v3568, 4294901760
    %v4270 = vsub.f32 %v3568, %v4269
    %v4271 = vand.u32 %v4270, 4294901760
    %v4272 = vsub.f32 %v4270, %v4271
    %v4273 = vand.u32 %v4272, 4294901760
    %4274 = vmatmul.mubr.f32.gmra.mrb[0].mxu0 %v4273
    %v4275 = vpop.f32.mrb[0].mxu0
    %v4276 = vadd.f32 %v4187, %v4275
    %v4277 = vpop.f32.mrb[0].mxu0
    %4278 = vdwg.mxu0
    %4279 = vmatprep.subr.mxu0 0.0
    %v4280 = vand.u32 %v3571, 4294901760
    %v4281 = vsub.f32 %v3571, %v4280
    %v4282 = vand.u32 %v4281, 4294901760
    %v4283 = vsub.f32 %v4281, %v4282
    %v4284 = vand.u32 %v4283, 4294901760
    %4285 = vmatpush1.xpose.msra.mxu0 %v4284
    %4286 = vmatprep.subr.mxu0 0.0
    %v4287 = vand.u32 %v3574, 4294901760
    %v4288 = vsub.f32 %v3574, %v4287
    %v4289 = vand.u32 %v4288, 4294901760
    %v4290 = vsub.f32 %v4288, %v4289
    %v4291 = vand.u32 %v4290, 4294901760
    %4292 = vmatpush1.xpose.msra.mxu0 %v4291
    %4293 = vmatprep.subr.mxu0 0.0
    %v4294 = vand.u32 %v3577, 4294901760
    %v4295 = vsub.f32 %v3577, %v4294
    %v4296 = vand.u32 %v4295, 4294901760
    %v4297 = vsub.f32 %v4295, %v4296
    %v4298 = vand.u32 %v4297, 4294901760
    %4299 = vmatpush1.xpose.msra.mxu0 %v4298
    %4300 = vmatprep.subr.mxu0 0.0
    %v4301 = vand.u32 %v3580, 4294901760
    %v4302 = vsub.f32 %v3580, %v4301
    %v4303 = vand.u32 %v4302, 4294901760
    %v4304 = vsub.f32 %v4302, %v4303
    %v4305 = vand.u32 %v4304, 4294901760
    %4306 = vmatpush1.xpose.msra.mxu0 %v4305
    %4307 = vmatprep.subr.mxu0 0.0
    %4308 = vmatpush1.xpose.msra.mxu0 0.0
    %4309 = vmatprep.subr.mxu0 0.0
    %4310 = vmatpush1.xpose.msra.mxu0 0.0
    %4311 = vmatprep.subr.mxu0 0.0
    %4312 = vmatpush1.xpose.msra.mxu0 0.0
    %4313 = vmatprep.subr.mxu0 0.0
    %4314 = vmatpush1.xpose.msra.mxu0 0.0
    %4315 = vmatprep.subr.mxu0 0.0
    %4316 = vmatpush1.xpose.msra.mxu0 0.0
    %4317 = vmatprep.subr.mxu0 0.0
    %4318 = vmatpush1.xpose.msra.mxu0 0.0
    %4319 = vmatprep.subr.mxu0 0.0
    %4320 = vmatpush1.xpose.msra.mxu0 0.0
    %4321 = vmatprep.subr.mxu0 0.0
    %4322 = vmatpush1.xpose.msra.mxu0 0.0
    %4323 = vmatprep.subr.mxu0 0.0
    %4324 = vmatpush1.xpose.msra.mxu0 0.0
    %4325 = vmatprep.subr.mxu0 0.0
    %4326 = vmatpush1.xpose.msra.mxu0 0.0
    %4327 = vmatprep.subr.mxu0 0.0
    %4328 = vmatpush1.xpose.msra.mxu0 0.0
    %4329 = vmatprep.subr.mxu0 0.0
    %4330 = vmatpush1.xpose.msra.mxu0 0.0
    %4331 = vmatprep.subr.mxu0 0.0
    %4332 = vmatpush1.xpose.msra.mxu0 0.0
    %4333 = vmatprep.subr.mxu0 0.0
    %4334 = vmatpush1.xpose.msra.mxu0 0.0
    %4335 = vmatprep.subr.mxu0 0.0
    %4336 = vmatpush1.xpose.msra.mxu0 0.0
    %4337 = vmatprep.subr.mxu0 0.0
    %4338 = vmatpush1.xpose.msra.mxu0 0.0
    %4339 = vmatprep.subr.mxu0 0.0
    %4340 = vmatpush1.xpose.msra.mxu0 0.0
    %4341 = vmatprep.subr.mxu0 0.0
    %4342 = vmatpush1.xpose.msra.mxu0 0.0
    %4343 = vmatprep.subr.mxu0 0.0
    %4344 = vmatpush1.xpose.msra.mxu0 0.0
    %4345 = vmatprep.subr.mxu0 0.0
    %4346 = vmatpush1.xpose.msra.mxu0 0.0
    %4347 = vmatprep.subr.mxu0 0.0
    %4348 = vmatpush1.xpose.msra.mxu0 0.0
    %4349 = vmatprep.subr.mxu0 0.0
    %4350 = vmatpush1.xpose.msra.mxu0 0.0
    %4351 = vmatprep.subr.mxu0 0.0
    %4352 = vmatpush1.xpose.msra.mxu0 0.0
    %4353 = vmatprep.subr.mxu0 0.0
    %4354 = vmatpush1.xpose.msra.mxu0 0.0
    %4355 = vmatprep.subr.mxu0 0.0
    %4356 = vmatpush1.xpose.msra.mxu0 0.0
    %4357 = vmatprep.subr.mxu0 0.0
    %4358 = vmatpush1.xpose.msra.mxu0 0.0
    %4359 = vmatprep.subr.mxu0 0.0
    %4360 = vmatpush1.xpose.msra.mxu0 0.0
    %4361 = vmatprep.subr.mxu0 0.0
    %4362 = vmatpush1.xpose.msra.mxu0 0.0
    %4363 = vmatprep.mubr.f32.mxu0 0.0
    %v4364 = vand.u32 %v3565, 4294901760
    %4365 = vmatmul.mubr.f32.gmra.mrb[0].mxu0 %v4364
    %v4366 = vpop.f32.mrb[0].mxu0
    %v4367 = vadd.f32 %v4266, %v4366
    %v4368 = vpop.f32.mrb[0].mxu0
    %4369 = vmatprep.mubr.f32.mxu0 0.0
    %v4370 = vand.u32 %v3568, 4294901760
    %4371 = vmatmul.mubr.f32.gmra.mrb[0].mxu0 %v4370
    %v4372 = vpop.f32.mrb[0].mxu0
    %v4373 = vadd.f32 %v4276, %v4372
    %v4374 = vpop.f32.mrb[0].mxu0
    %4375 = vdwg.mxu0
    %4376 = vmatprep.subr.mxu0 0.0
    %v4377 = vand.u32 %v3571, 4294901760
    %v4378 = vsub.f32 %v3571, %v4377
    %4379 = vmatpush1.xpose.msra.mxu0 %v4378
    %4380 = vmatprep.subr.mxu0 0.0
    %v4381 = vand.u32 %v3574, 4294901760
    %v4382 = vsub.f32 %v3574, %v4381
    %4383 = vmatpush1.xpose.msra.mxu0 %v4382
    %4384 = vmatprep.subr.mxu0 0.0
    %v4385 = vand.u32 %v3577, 4294901760
    %v4386 = vsub.f32 %v3577, %v4385
    %4387 = vmatpush1.xpose.msra.mxu0 %v4386
    %4388 = vmatprep.subr.mxu0 0.0
    %v4389 = vand.u32 %v3580, 4294901760
    %v4390 = vsub.f32 %v3580, %v4389
    %4391 = vmatpush1.xpose.msra.mxu0 %v4390
    %4392 = vmatprep.subr.mxu0 0.0
    %4393 = vmatpush1.xpose.msra.mxu0 0.0
    %4394 = vmatprep.subr.mxu0 0.0
    %4395 = vmatpush1.xpose.msra.mxu0 0.0
    %4396 = vmatprep.subr.mxu0 0.0
    %4397 = vmatpush1.xpose.msra.mxu0 0.0
    %4398 = vmatprep.subr.mxu0 0.0
    %4399 = vmatpush1.xpose.msra.mxu0 0.0
    %4400 = vmatprep.subr.mxu0 0.0
    %4401 = vmatpush1.xpose.msra.mxu0 0.0
    %4402 = vmatprep.subr.mxu0 0.0
    %4403 = vmatpush1.xpose.msra.mxu0 0.0
    %4404 = vmatprep.subr.mxu0 0.0
    %4405 = vmatpush1.xpose.msra.mxu0 0.0
    %4406 = vmatprep.subr.mxu0 0.0
    %4407 = vmatpush1.xpose.msra.mxu0 0.0
    %4408 = vmatprep.subr.mxu0 0.0
    %4409 = vmatpush1.xpose.msra.mxu0 0.0
    %4410 = vmatprep.subr.mxu0 0.0
    %4411 = vmatpush1.xpose.msra.mxu0 0.0
    %4412 = vmatprep.subr.mxu0 0.0
    %4413 = vmatpush1.xpose.msra.mxu0 0.0
    %4414 = vmatprep.subr.mxu0 0.0
    %4415 = vmatpush1.xpose.msra.mxu0 0.0
    %4416 = vmatprep.subr.mxu0 0.0
    %4417 = vmatpush1.xpose.msra.mxu0 0.0
    %4418 = vmatprep.subr.mxu0 0.0
    %4419 = vmatpush1.xpose.msra.mxu0 0.0
    %4420 = vmatprep.subr.mxu0 0.0
    %4421 = vmatpush1.xpose.msra.mxu0 0.0
    %4422 = vmatprep.subr.mxu0 0.0
    %4423 = vmatpush1.xpose.msra.mxu0 0.0
    %4424 = vmatprep.subr.mxu0 0.0
    %4425 = vmatpush1.xpose.msra.mxu0 0.0
    %4426 = vmatprep.subr.mxu0 0.0
    %4427 = vmatpush1.xpose.msra.mxu0 0.0
    %4428 = vmatprep.subr.mxu0 0.0
    %4429 = vmatpush1.xpose.msra.mxu0 0.0
    %4430 = vmatprep.subr.mxu0 0.0
    %4431 = vmatpush1.xpose.msra.mxu0 0.0
    %4432 = vmatprep.subr.mxu0 0.0
    %4433 = vmatpush1.xpose.msra.mxu0 0.0
    %4434 = vmatprep.subr.mxu0 0.0
    %4435 = vmatpush1.xpose.msra.mxu0 0.0
    %4436 = vmatprep.subr.mxu0 0.0
    %4437 = vmatpush1.xpose.msra.mxu0 0.0
    %4438 = vmatprep.subr.mxu0 0.0
    %4439 = vmatpush1.xpose.msra.mxu0 0.0
    %4440 = vmatprep.subr.mxu0 0.0
    %4441 = vmatpush1.xpose.msra.mxu0 0.0
    %4442 = vmatprep.subr.mxu0 0.0
    %4443 = vmatpush1.xpose.msra.mxu0 0.0
    %4444 = vmatprep.subr.mxu0 0.0
    %4445 = vmatpush1.xpose.msra.mxu0 0.0
    %4446 = vmatprep.subr.mxu0 0.0
    %4447 = vmatpush1.xpose.msra.mxu0 0.0
    %4448 = vmatprep.mubr.f32.mxu0 0.0
    %v4449 = vand.u32 %v3565, 4294901760
    %v4450 = vsub.f32 %v3565, %v4449
    %4451 = vmatmul.mubr.f32.gmra.mrb[0].mxu0 %v4450
    %v4452 = vpop.f32.mrb[0].mxu0
    %v4453 = vadd.f32 %v4367, %v4452
    %v4454 = vpop.f32.mrb[0].mxu0
    %4455 = vmatprep.mubr.f32.mxu0 0.0
    %v4456 = vand.u32 %v3568, 4294901760
    %v4457 = vsub.f32 %v3568, %v4456
    %4458 = vmatmul.mubr.f32.gmra.mrb[0].mxu0 %v4457
    %v4459 = vpop.f32.mrb[0].mxu0
    %v4460 = vadd.f32 %v4373, %v4459
    %v4461 = vpop.f32.mrb[0].mxu0
    %4462 = vdwg.mxu0
    %4463 = vmatprep.subr.mxu0 0.0
    %v4464 = vand.u32 %v3571, 4294901760
    %4465 = vmatpush1.xpose.msra.mxu0 %v4464
    %4466 = vmatprep.subr.mxu0 0.0
    %v4467 = vand.u32 %v3574, 4294901760
    %4468 = vmatpush1.xpose.msra.mxu0 %v4467
    %4469 = vmatprep.subr.mxu0 0.0
    %v4470 = vand.u32 %v3577, 4294901760
    %4471 = vmatpush1.xpose.msra.mxu0 %v4470
    %4472 = vmatprep.subr.mxu0 0.0
    %v4473 = vand.u32 %v3580, 4294901760
    %4474 = vmatpush1.xpose.msra.mxu0 %v4473
    %4475 = vmatprep.subr.mxu0 0.0
    %4476 = vmatpush1.xpose.msra.mxu0 0.0
    %4477 = vmatprep.subr.mxu0 0.0
    %4478 = vmatpush1.xpose.msra.mxu0 0.0
    %4479 = vmatprep.subr.mxu0 0.0
    %4480 = vmatpush1.xpose.msra.mxu0 0.0
    %4481 = vmatprep.subr.mxu0 0.0
    %4482 = vmatpush1.xpose.msra.mxu0 0.0
    %4483 = vmatprep.subr.mxu0 0.0
    %4484 = vmatpush1.xpose.msra.mxu0 0.0
    %4485 = vmatprep.subr.mxu0 0.0
    %4486 = vmatpush1.xpose.msra.mxu0 0.0
    %4487 = vmatprep.subr.mxu0 0.0
    %4488 = vmatpush1.xpose.msra.mxu0 0.0
    %4489 = vmatprep.subr.mxu0 0.0
    %4490 = vmatpush1.xpose.msra.mxu0 0.0
    %4491 = vmatprep.subr.mxu0 0.0
    %4492 = vmatpush1.xpose.msra.mxu0 0.0
    %4493 = vmatprep.subr.mxu0 0.0
    %4494 = vmatpush1.xpose.msra.mxu0 0.0
    %4495 = vmatprep.subr.mxu0 0.0
    %4496 = vmatpush1.xpose.msra.mxu0 0.0
    %4497 = vmatprep.subr.mxu0 0.0
    %4498 = vmatpush1.xpose.msra.mxu0 0.0
    %4499 = vmatprep.subr.mxu0 0.0
    %4500 = vmatpush1.xpose.msra.mxu0 0.0
    %4501 = vmatprep.subr.mxu0 0.0
    %4502 = vmatpush1.xpose.msra.mxu0 0.0
    %4503 = vmatprep.subr.mxu0 0.0
    %4504 = vmatpush1.xpose.msra.mxu0 0.0
    %4505 = vmatprep.subr.mxu0 0.0
    %4506 = vmatpush1.xpose.msra.mxu0 0.0
    %4507 = vmatprep.subr.mxu0 0.0
    %4508 = vmatpush1.xpose.msra.mxu0 0.0
    %4509 = vmatprep.subr.mxu0 0.0
    %4510 = vmatpush1.xpose.msra.mxu0 0.0
    %4511 = vmatprep.subr.mxu0 0.0
    %4512 = vmatpush1.xpose.msra.mxu0 0.0
    %4513 = vmatprep.subr.mxu0 0.0
    %4514 = vmatpush1.xpose.msra.mxu0 0.0
    %4515 = vmatprep.subr.mxu0 0.0
    %4516 = vmatpush1.xpose.msra.mxu0 0.0
    %4517 = vmatprep.subr.mxu0 0.0
    %4518 = vmatpush1.xpose.msra.mxu0 0.0
    %4519 = vmatprep.subr.mxu0 0.0
    %4520 = vmatpush1.xpose.msra.mxu0 0.0
    %4521 = vmatprep.subr.mxu0 0.0
    %4522 = vmatpush1.xpose.msra.mxu0 0.0
    %4523 = vmatprep.subr.mxu0 0.0
    %4524 = vmatpush1.xpose.msra.mxu0 0.0
    %4525 = vmatprep.subr.mxu0 0.0
    %4526 = vmatpush1.xpose.msra.mxu0 0.0
    %4527 = vmatprep.subr.mxu0 0.0
    %4528 = vmatpush1.xpose.msra.mxu0 0.0
    %4529 = vmatprep.subr.mxu0 0.0
    %4530 = vmatpush1.xpose.msra.mxu0 0.0
    %4531 = vmatprep.mubr.f32.mxu0 0.0
    %v4532 = vand.u32 %v3565, 4294901760
    %v4533 = vsub.f32 %v3565, %v4532
    %v4534 = vand.u32 %v4533, 4294901760
    %4535 = vmatmul.mubr.f32.gmra.mrb[0].mxu0 %v4534
    %v4536 = vpop.f32.mrb[0].mxu0
    %v4537 = vadd.f32 %v4453, %v4536
    %v4538 = vpop.f32.mrb[0].mxu0
    %4539 = vmatprep.mubr.f32.mxu0 0.0
    %v4540 = vand.u32 %v3568, 4294901760
    %v4541 = vsub.f32 %v3568, %v4540
    %v4542 = vand.u32 %v4541, 4294901760
    %4543 = vmatmul.mubr.f32.gmra.mrb[0].mxu0 %v4542
    %v4544 = vpop.f32.mrb[0].mxu0
    %v4545 = vadd.f32 %v4460, %v4544
    %v4546 = vpop.f32.mrb[0].mxu0
    %4547 = vdwg.mxu0
    %4548 = vmatprep.subr.mxu0 0.0
    %v4549 = vand.u32 %v3571, 4294901760
    %v4550 = vsub.f32 %v3571, %v4549
    %v4551 = vand.u32 %v4550, 4294901760
    %4552 = vmatpush1.xpose.msra.mxu0 %v4551
    %4553 = vmatprep.subr.mxu0 0.0
    %v4554 = vand.u32 %v3574, 4294901760
    %v4555 = vsub.f32 %v3574, %v4554
    %v4556 = vand.u32 %v4555, 4294901760
    %4557 = vmatpush1.xpose.msra.mxu0 %v4556
    %4558 = vmatprep.subr.mxu0 0.0
    %v4559 = vand.u32 %v3577, 4294901760
    %v4560 = vsub.f32 %v3577, %v4559
    %v4561 = vand.u32 %v4560, 4294901760
    %4562 = vmatpush1.xpose.msra.mxu0 %v4561
    %4563 = vmatprep.subr.mxu0 0.0
    %v4564 = vand.u32 %v3580, 4294901760
    %v4565 = vsub.f32 %v3580, %v4564
    %v4566 = vand.u32 %v4565, 4294901760
    %4567 = vmatpush1.xpose.msra.mxu0 %v4566
    %4568 = vmatprep.subr.mxu0 0.0
    %4569 = vmatpush1.xpose.msra.mxu0 0.0
    %4570 = vmatprep.subr.mxu0 0.0
    %4571 = vmatpush1.xpose.msra.mxu0 0.0
    %4572 = vmatprep.subr.mxu0 0.0
    %4573 = vmatpush1.xpose.msra.mxu0 0.0
    %4574 = vmatprep.subr.mxu0 0.0
    %4575 = vmatpush1.xpose.msra.mxu0 0.0
    %4576 = vmatprep.subr.mxu0 0.0
    %4577 = vmatpush1.xpose.msra.mxu0 0.0
    %4578 = vmatprep.subr.mxu0 0.0
    %4579 = vmatpush1.xpose.msra.mxu0 0.0
    %4580 = vmatprep.subr.mxu0 0.0
    %4581 = vmatpush1.xpose.msra.mxu0 0.0
    %4582 = vmatprep.subr.mxu0 0.0
    %4583 = vmatpush1.xpose.msra.mxu0 0.0
    %4584 = vmatprep.subr.mxu0 0.0
    %4585 = vmatpush1.xpose.msra.mxu0 0.0
    %4586 = vmatprep.subr.mxu0 0.0
    %4587 = vmatpush1.xpose.msra.mxu0 0.0
    %4588 = vmatprep.subr.mxu0 0.0
    %4589 = vmatpush1.xpose.msra.mxu0 0.0
    %4590 = vmatprep.subr.mxu0 0.0
    %4591 = vmatpush1.xpose.msra.mxu0 0.0
    %4592 = vmatprep.subr.mxu0 0.0
    %4593 = vmatpush1.xpose.msra.mxu0 0.0
    %4594 = vmatprep.subr.mxu0 0.0
    %4595 = vmatpush1.xpose.msra.mxu0 0.0
    %4596 = vmatprep.subr.mxu0 0.0
    %4597 = vmatpush1.xpose.msra.mxu0 0.0
    %4598 = vmatprep.subr.mxu0 0.0
    %4599 = vmatpush1.xpose.msra.mxu0 0.0
    %4600 = vmatprep.subr.mxu0 0.0
    %4601 = vmatpush1.xpose.msra.mxu0 0.0
    %4602 = vmatprep.subr.mxu0 0.0
    %4603 = vmatpush1.xpose.msra.mxu0 0.0
    %4604 = vmatprep.subr.mxu0 0.0
    %4605 = vmatpush1.xpose.msra.mxu0 0.0
    %4606 = vmatprep.subr.mxu0 0.0
    %4607 = vmatpush1.xpose.msra.mxu0 0.0
    %4608 = vmatprep.subr.mxu0 0.0
    %4609 = vmatpush1.xpose.msra.mxu0 0.0
    %4610 = vmatprep.subr.mxu0 0.0
    %4611 = vmatpush1.xpose.msra.mxu0 0.0
    %4612 = vmatprep.subr.mxu0 0.0
    %4613 = vmatpush1.xpose.msra.mxu0 0.0
    %4614 = vmatprep.subr.mxu0 0.0
    %4615 = vmatpush1.xpose.msra.mxu0 0.0
    %4616 = vmatprep.subr.mxu0 0.0
    %4617 = vmatpush1.xpose.msra.mxu0 0.0
    %4618 = vmatprep.subr.mxu0 0.0
    %4619 = vmatpush1.xpose.msra.mxu0 0.0
    %4620 = vmatprep.subr.mxu0 0.0
    %4621 = vmatpush1.xpose.msra.mxu0 0.0
    %4622 = vmatprep.subr.mxu0 0.0
    %4623 = vmatpush1.xpose.msra.mxu0 0.0
    %4624 = vmatprep.mubr.f32.mxu0 0.0
    %v4625 = vand.u32 %v3565, 4294901760
    %4626 = vmatmul.mubr.f32.gmra.mrb[0].mxu0 %v4625
    %v4627 = vpop.f32.mrb[0].mxu0
    %v4628 = vadd.f32 %v4537, %v4627
    %v4629 = vpop.f32.mrb[0].mxu0
    %4630 = vmatprep.mubr.f32.mxu0 0.0
    %v4631 = vand.u32 %v3568, 4294901760
    %4632 = vmatmul.mubr.f32.gmra.mrb[0].mxu0 %v4631
    %v4633 = vpop.f32.mrb[0].mxu0
    %v4634 = vadd.f32 %v4545, %v4633
    %v4635 = vpop.f32.mrb[0].mxu0
    %4636 = vdwg.mxu0
    %4637 = vmatprep.subr.mxu0 0.0
    %v4638 = vand.u32 %v3571, 4294901760
    %4639 = vmatpush1.xpose.msra.mxu0 %v4638
    %4640 = vmatprep.subr.mxu0 0.0
    %v4641 = vand.u32 %v3574, 4294901760
    %4642 = vmatpush1.xpose.msra.mxu0 %v4641
    %4643 = vmatprep.subr.mxu0 0.0
    %v4644 = vand.u32 %v3577, 4294901760
    %4645 = vmatpush1.xpose.msra.mxu0 %v4644
    %4646 = vmatprep.subr.mxu0 0.0
    %v4647 = vand.u32 %v3580, 4294901760
    %4648 = vmatpush1.xpose.msra.mxu0 %v4647
    %4649 = vmatprep.subr.mxu0 0.0
    %4650 = vmatpush1.xpose.msra.mxu0 0.0
    %4651 = vmatprep.subr.mxu0 0.0
    %4652 = vmatpush1.xpose.msra.mxu0 0.0
    %4653 = vmatprep.subr.mxu0 0.0
    %4654 = vmatpush1.xpose.msra.mxu0 0.0
    %4655 = vmatprep.subr.mxu0 0.0
    %4656 = vmatpush1.xpose.msra.mxu0 0.0
    %4657 = vmatprep.subr.mxu0 0.0
    %4658 = vmatpush1.xpose.msra.mxu0 0.0
    %4659 = vmatprep.subr.mxu0 0.0
    %4660 = vmatpush1.xpose.msra.mxu0 0.0
    %4661 = vmatprep.subr.mxu0 0.0
    %4662 = vmatpush1.xpose.msra.mxu0 0.0
    %4663 = vmatprep.subr.mxu0 0.0
    %4664 = vmatpush1.xpose.msra.mxu0 0.0
    %4665 = vmatprep.subr.mxu0 0.0
    %4666 = vmatpush1.xpose.msra.mxu0 0.0
    %4667 = vmatprep.subr.mxu0 0.0
    %4668 = vmatpush1.xpose.msra.mxu0 0.0
    %4669 = vmatprep.subr.mxu0 0.0
    %4670 = vmatpush1.xpose.msra.mxu0 0.0
    %4671 = vmatprep.subr.mxu0 0.0
    %4672 = vmatpush1.xpose.msra.mxu0 0.0
    %4673 = vmatprep.subr.mxu0 0.0
    %4674 = vmatpush1.xpose.msra.mxu0 0.0
    %4675 = vmatprep.subr.mxu0 0.0
    %4676 = vmatpush1.xpose.msra.mxu0 0.0
    %4677 = vmatprep.subr.mxu0 0.0
    %4678 = vmatpush1.xpose.msra.mxu0 0.0
    %4679 = vmatprep.subr.mxu0 0.0
    %4680 = vmatpush1.xpose.msra.mxu0 0.0
    %4681 = vmatprep.subr.mxu0 0.0
    %4682 = vmatpush1.xpose.msra.mxu0 0.0
    %4683 = vmatprep.subr.mxu0 0.0
    %4684 = vmatpush1.xpose.msra.mxu0 0.0
    %4685 = vmatprep.subr.mxu0 0.0
    %4686 = vmatpush1.xpose.msra.mxu0 0.0
    %4687 = vmatprep.subr.mxu0 0.0
    %4688 = vmatpush1.xpose.msra.mxu0 0.0
    %4689 = vmatprep.subr.mxu0 0.0
    %4690 = vmatpush1.xpose.msra.mxu0 0.0
    %4691 = vmatprep.subr.mxu0 0.0
    %4692 = vmatpush1.xpose.msra.mxu0 0.0
    %4693 = vmatprep.subr.mxu0 0.0
    %4694 = vmatpush1.xpose.msra.mxu0 0.0
    %4695 = vmatprep.subr.mxu0 0.0
    %4696 = vmatpush1.xpose.msra.mxu0 0.0
    %4697 = vmatprep.subr.mxu0 0.0
    %4698 = vmatpush1.xpose.msra.mxu0 0.0
    %4699 = vmatprep.subr.mxu0 0.0
    %4700 = vmatpush1.xpose.msra.mxu0 0.0
    %4701 = vmatprep.subr.mxu0 0.0
    %4702 = vmatpush1.xpose.msra.mxu0 0.0
    %4703 = vmatprep.subr.mxu0 0.0
    %4704 = vmatpush1.xpose.msra.mxu0 0.0
    %4705 = vmatprep.mubr.f32.mxu0 0.0
    %v4706 = vand.u32 %v3565, 4294901760
    %4707 = vmatmul.mubr.f32.gmra.mrb[0].mxu0 %v4706
    %v4708 = vpop.f32.mrb[0].mxu0
    %v4709 = vadd.f32 %v4628, %v4708
    %v4710 = vpop.f32.mrb[0].mxu0
    %4711 = vmatprep.mubr.f32.mxu0 0.0
    %v4712 = vand.u32 %v3568, 4294901760
    %4713 = vmatmul.mubr.f32.gmra.mrb[0].mxu0 %v4712
    %v4714 = vpop.f32.mrb[0].mxu0
    %v4715 = vadd.f32 %v4634, %v4714
    %v4716 = vpop.f32.mrb[0].mxu0
    %4717 = vdwg.mxu0
    %v4718 = vadd.f32 %v4709, %v2255
    %v4719 = vadd.f32 %v4715, %v2256
    %v4720 = vsel %vm71, %v4718, 0.0
    %4721 = vadd.xlane.f32.xlu0 %v4720
    %v4722 = vpop.xlane.xlu0 %4721
    %v4723 = vsel %vm71, %v4719, 0.0
    %4724 = vadd.xlane.f32.xlu0 %v4723
    %v4725 = vpop.xlane.xlu0 %4724
    %v4726 = vmul.f32 %v4722, %v2225
    %v4727 = vmul.f32 %v4725, %v2225
    %v4728 = vsub.f32 %v4718, %v4726
    %v4729 = vsub.f32 %v4719, %v4727
    %v4730 = vmul.f32 %v4728, %v4728
    %v4731 = vmul.f32 %v4729, %v4729
    %v4732 = vsel %vm71, %v4730, 0.0
    %4733 = vadd.xlane.f32.xlu0 %v4732
    %v4734 = vpop.xlane.xlu0 %4733
    %v4735 = vsel %vm71, %v4731, 0.0
    %4736 = vadd.xlane.f32.xlu0 %v4735
    %v4737 = vpop.xlane.xlu0 %4736
    %v4738 = vmul.f32 %v4734, %v2225
    %v4739 = vmul.f32 %v4737, %v2225
    %v4740 = vadd.f32 %v4738, 1e-05
    %v4741 = vadd.f32 %v4739, 1e-05
    %v4742 = vrsqrt.pop %v4740
    %v4743 = vrsqrt.pop %v4741
    %v4744 = vmul.f32 %v4728, %v4742
    %v4745 = vmul.f32 %v4729, %v4743
    %v4746 = vlaneseq
    %v4747 = vshrl.u32 %v4746, 7
    %v4748 = vsub.s32 1, %v4747
    %v4749 = vrot.slane %v59, %v4748
    %v4750 = vmul.f32 %v4744, %v4749
    %v4751 = vmul.f32 %v4745, %v4749
    %4753 = vrot.lane.b32.xlu0 %v4749, 96
    %v4754 = vpop.permute.xlu0 %4753
    %v4756 = vadd.f32 %v4750, %v4754
    %v4757 = vadd.f32 %v4751, %v4754
    %4758 = vst.msk [vmem:[#allocation8] sm:$0xff] %vm71, %v4756
    %4759 = vst.msk [vmem:[#allocation8 + $0x8] sm:$0xff] %vm71, %v4757
    // Predicated region
    $region26: #{block_forward.1} parent=1 // pred_check
      _
    $region27: #{block_forward.1} parent=1 // pred_check_branch
      %4761 = sbr.rel (0) target = $region29
    $region28: #{block_forward.1} parent=1 // pred_region
      %s4763 = ssub.s32 256, 256
      %4764 = vsyncadd [#allocation4], %s4763
      %s4765 = sshll.u32 [#allocation8], 4
      %s4766 = int_to_ptr.vmem [resolvable:$true] %s4765
      %4771 = dma.vmem_to_hbm [thread:$0]  %s4766, 256, %s3, [#allocation4], 128, 128, 8
    $region29: #{block_forward.1} parent=1 // pred_fallthru
      _
    // Predicated region
    $region30: #{block_forward.1} parent=1 // pred_check
      _
    $region31: #{block_forward.1} parent=1 // pred_check_branch
      %4773 = sbr.rel (0) target = $region33
    $region32: #{block_forward.1} parent=1 // pred_region
      %4774 = dma.done [#allocation4], 256
    $region33: #{block_forward.1} parent=1 // pred_fallthru
      _
    %4775 = vsyncpa [#allocation3], 1
    %4776 = vsyncpa [#allocation6], 1
    %4777 = vsyncpa [#allocation4], 1

</llo_original>
